<compile_context>
chip_gen: v6e
topology: v6e:2x2x1
jax: 0.10.0
libtpu: 0.0.40
codegen_flags: <defaults>
</compile_context>

<pallas_src>
import functools
import math

import numpy as np
import jax
import jax.numpy as jnp
from jax.experimental import pallas as pl
from jax.experimental.pallas import tpu as pltpu

MXU_DTYPE = jnp.bfloat16   # matmul operand dtype (full-rate on the MXU)
ACC_DTYPE = jnp.float32    # accumulation + elementwise epilogue dtype


def _round_up(x, m):
    return (x + m - 1) // m * m


def _make_pool_selector(l_in, tb):
    """0/1 matrix (l_in*tb, 2*(l_in//2)*tb) for MaxPool1d(2,2) over the
    position-major column order (l*tb + b).  Columns = [even picks | odd picks];
    built on the host so the kernel never re-materialises iota constants."""
    n_out = (l_in // 2) * tb
    n = np.arange(l_in * tb)[:, None]
    m = np.arange(n_out)[None, :]
    even = (n == (2 * (m // tb)) * tb + (m % tb))
    odd = (n == (2 * (m // tb) + 1) * tb + (m % tb))
    sel = np.concatenate([even, odd], axis=1).astype(np.float32)
    return jnp.asarray(sel, dtype=MXU_DTYPE)


# ---------------------------------------------------------------------------
# Single fused kernel: conv stack + (absorbed) flatten + residual MLP
# ---------------------------------------------------------------------------
def convnet_fused_kernel(*refs, tb, ksize, conv_cfg, dense_cfg, bias_offs,
                         c_last, l_last):
    """Whole ConvNet forward for one tile of `tb` samples.

    Activations are kept "transposed" and position-major,
        a[c, l*tb + b]  ==  activation[b, c, l]
    so that
      * each im2col tap is ONE rectangular copy covering all tb samples,
      * Conv1d 'same' zero padding is just two small zero strips per layer,
      * MaxPool1d(2,2) is one MXU matmul against a constant selector + VPU max,
      * PyTorch's x.view(-1, flatsize) never has to be materialised: the first
        dense weight was re-ordered host-side so the flatten is absorbed into
        l_last partial contractions directly on the conv activation.
    The dense stack is computed transposed (h[j, b]); the wrapper restores the
    batch-major view (pure layout plumbing on a tiny array).
    """
    n_conv = len(conv_cfg)
    n_dense = len(dense_cfg)
    n_pool = sum(1 for c in conv_cfg if c[3])
    pad = ksize // 2

    pos = 0
    x_ref = refs[pos]; pos += 1
    wt_refs = refs[pos:pos + n_conv]; pos += n_conv
    wd_refs = refs[pos:pos + n_dense]; pos += n_dense
    bias_ref = refs[pos]; pos += 1
    sel_refs = refs[pos:pos + n_pool]; pos += n_pool
    out_ref = refs[pos]; pos += 1
    cols_refs = refs[pos:pos + n_conv]; pos += n_conv
    assert pos == len(refs)

    # ----- Conv1d + folded-BatchNorm + ReLU (+ MaxPool1d) stack --------------
    sel_i = 0
    a = x_ref[...]                                        # (cin0, l0*tb) bf16
    for i, (cin, cout, l_in, do_pool) in enumerate(conv_cfg):
        cols = cols_refs[i]
        # im2col: one rectangular copy per tap k (all tb samples at once).
        for k in range(ksize):
            off = k - pad
            n = l_in - abs(off)
            src_lo = max(0, off)
            dst_lo = max(0, -off)
            cols[k * cin:(k + 1) * cin,
                 dst_lo * tb:(dst_lo + n) * tb] = a[:, src_lo * tb:
                                                    (src_lo + n) * tb]
            # 'same' zero padding: only the unwritten boundary strips.
            if dst_lo > 0:
                cols[k * cin:(k + 1) * cin, :dst_lo * tb] = (
                    jnp.zeros((cin, dst_lo * tb), MXU_DTYPE))
            if dst_lo + n < l_in:
                cols[k * cin:(k + 1) * cin, (dst_lo + n) * tb:] = (
                    jnp.zeros((cin, (l_in - dst_lo - n) * tb), MXU_DTYPE))

        # One MXU contraction per layer (BN scale already folded into wt).
        b = bias_ref[bias_offs[i]:bias_offs[i] + cout, :]          # (cout, 1)
        yt = jnp.dot(wt_refs[i][...], cols[...],
                     preferred_element_type=ACC_DTYPE)             # (cout, L*tb)
        yt = jnp.maximum(yt + b, 0.0)                              # bias + ReLU (f32)

        if do_pool:                                                # MaxPool1d(2,2)
            n_out = (l_in // 2) * tb
            z = jnp.dot(yt.astype(MXU_DTYPE), sel_refs[sel_i][...],
                        preferred_element_type=ACC_DTYPE)          # (cout, 2*n_out)
            yt = jnp.maximum(z[:, :n_out], z[:, n_out:])
            sel_i += 1
        # nn.Dropout: identity in eval mode.
        a = yt.astype(MXU_DTYPE)

    # ----- Residual dense stack (transposed: h[j, b]) -------------------------
    # First layer absorbs the flatten: its weight has one (dout, c_last) column
    # block per position l, contracted against the matching lane block of `a`.
    dout0 = dense_cfg[0][1]
    w1 = wd_refs[0]
    acc = jnp.zeros((dout0, tb), ACC_DTYPE)
    for l in range(l_last):
        acc = acc + jnp.dot(w1[:, l * c_last:(l + 1) * c_last],
                            a[:, l * tb:(l + 1) * tb],
                            preferred_element_type=ACC_DTYPE)
    b = bias_ref[bias_offs[n_conv]:bias_offs[n_conv] + dout0, :]
    h = jnp.maximum(acc + b, 0.0)

    # TODO(synk): FeedForwardNetwork / torchActivation source was not provided;
    # modelled as Linear -> ReLU with identity residual when dims match,
    # dropout treated as identity (eval mode).
    for j in range(1, n_dense):
        _din, dout, residual = dense_cfg[j]
        off = bias_offs[n_conv + j]
        b = bias_ref[off:off + dout, :]
        y = jnp.dot(wd_refs[j][...], h.astype(MXU_DTYPE),
                    preferred_element_type=ACC_DTYPE)
        y = jnp.maximum(y + b, 0.0)
        if residual:
            y = y + h
        h = y

    # (dense_dim, tb) store; the wrapper restores the (batch, dense_dim) view.
    out_ref[...] = h


# ---------------------------------------------------------------------------
# Wrapper: one pallas_call, batch tiled on a "parallel" grid axis
# ---------------------------------------------------------------------------
def convnet_forward(x_ncl, params, *, cfg, kernel_size, tile_b,
                    vmem_limit_bytes=32 * 1024 * 1024):
    conv_cfg = cfg["conv_cfg"]
    dense_cfg = cfg["dense_cfg"]
    bias_offs = cfg["bias_offs"]
    c_last, l_last = cfg["c_last"], cfg["l_last"]

    wt_list = list(params["wt"])
    wd_list = list(params["wd"])
    bias_cat = params["bias"]

    bsz, cin0, l0 = x_ncl.shape
    cin0_pad = conv_cfg[0][0]
    assert bsz % tile_b == 0, "batch must be a multiple of the tile size"
    g = bsz // tile_b

    # Host-side layout plumbing (tiny): NCL -> per-tile (cin_pad, L*tile_b),
    # channels zero-padded to a multiple of 8 so im2col row slices are aligned.
    x_p = jnp.pad(x_ncl, ((0, 0), (0, cin0_pad - cin0), (0, 0)))
    x_t = (x_p.reshape(g, tile_b, cin0_pad, l0)
              .transpose(0, 2, 3, 1)                     # (g, cin_pad, L, tb)
              .reshape(g, cin0_pad, l0 * tile_b)
              .astype(MXU_DTYPE))

    # Static MaxPool selection matrices (host-precomputed constants).
    sel_mats = [_make_pool_selector(l_in, tile_b)
                for (_cin, _cout, l_in, do_pool) in conv_cfg if do_pool]

    out_dim = dense_cfg[-1][1]

    kernel = functools.partial(
        convnet_fused_kernel, tb=tile_b, ksize=kernel_size,
        conv_cfg=tuple(conv_cfg), dense_cfg=tuple(dense_cfg),
        bias_offs=tuple(bias_offs), c_last=c_last, l_last=l_last)

    def const_spec(shape):
        rank = len(shape)
        return pl.BlockSpec(shape, lambda gi: (0,) * rank)

    inputs = [x_t] + wt_list + wd_list + [bias_cat] + sel_mats
    in_specs = (
        [pl.BlockSpec((None, cin0_pad, l0 * tile_b), lambda gi: (gi, 0, 0))]
        + [const_spec(w.shape) for w in wt_list]
        + [const_spec(w.shape) for w in wd_list]
        + [const_spec(bias_cat.shape)]
        + [const_spec(s.shape) for s in sel_mats])

    # One im2col slab per conv layer (bf16 - halves the resident footprint).
    scratch_shapes = [pltpu.VMEM((kernel_size * cin, l_in * tile_b), MXU_DTYPE)
                      for (cin, _cout, l_in, _p) in conv_cfg]

    out_t = pl.pallas_call(
        kernel,
        out_shape=jax.ShapeDtypeStruct((g, out_dim, tile_b), jnp.float32),
        grid=(g,),
        in_specs=in_specs,
        out_specs=pl.BlockSpec((None, out_dim, tile_b), lambda gi: (gi, 0, 0)),
        scratch_shapes=scratch_shapes,
        compiler_params=pltpu.CompilerParams(
            dimension_semantics=("parallel",),       # both TensorCores on v7x
            vmem_limit_bytes=vmem_limit_bytes),      # ~3 MiB used; fits v7x 64 MiB
    )(*inputs)

    # Restore the PyTorch (batch, dense_dim) view (tiny wrapper-side plumbing).
    return out_t.transpose(0, 2, 1).reshape(bsz, out_dim)


# ---------------------------------------------------------------------------
# Deterministic synthetic parameters, pre-packed for the kernel
# ---------------------------------------------------------------------------
def build_params(key, *, input_channel, input_length, start_conv_channel,
                 kernel_size, num_conv_layers, dense_dim, num_dense_layers):
    bn_eps = 1e-5
    bn_scale = 1.0 / math.sqrt(1.0 + bn_eps)   # gamma=1, beta=0, mean=0, var=1
    # TODO(synk): for a trained model, fold the real running_mean/var and the
    # affine BN parameters into wt / bias here instead of the defaults above.

    conv_cfg, wt_list, biases, bias_offs = [], [], [], []
    off = 0
    cin, l = input_channel, input_length
    for i in range(num_conv_layers):
        cout = start_conv_channel * (2 ** i)
        cin_pad = _round_up(cin, 8)
        key, kw, kb = jax.random.split(key, 3)
        fan_in = cin * kernel_size
        w = jax.random.normal(kw, (kernel_size, cin, cout),
                              jnp.float32) / math.sqrt(fan_in)
        b = jax.random.normal(kb, (cout,), jnp.float32) * 0.01
        w_pad = jnp.pad(w, ((0, 0), (0, cin_pad - cin), (0, 0)))
        # (cout, K*cin_pad), BN scale folded in.
        wt = jnp.transpose(w_pad, (2, 0, 1)).reshape(
            cout, kernel_size * cin_pad) * bn_scale
        wt_list.append(wt.astype(MXU_DTYPE))
        biases.append((b * bn_scale).reshape(cout, 1))
        bias_offs.append(off); off += cout

        do_pool = i > 0                       # pooltype='max' and i > 0
        conv_cfg.append((cin_pad, cout, l, do_pool))
        if do_pool:
            assert l % 2 == 0, "MaxPool1d(2,2) needs an even length"
            l //= 2
        cin = cout
    c_last, l_last = cin, l
    flatsize = c_last * l_last                # == start_conv_channel * input_length

    dense_cfg, wd_list = [], []
    din = flatsize
    for j in range(num_dense_layers):
        dout = dense_dim
        key, kw, kb = jax.random.split(key, 3)
        wd = jax.random.normal(kw, (din, dout), jnp.float32) / math.sqrt(din)
        bd = jax.random.normal(kb, (dout,), jnp.float32) * 0.01
        if j == 0:
            # Rows c*l_last + l  ->  transposed, column blocks per position l:
            # the kernel contracts the (c, l*tb+b) conv activation directly,
            # so the batch-major flat buffer is never materialised.
            wdt = (wd.reshape(c_last, l_last, dout)
                     .transpose(2, 1, 0)
                     .reshape(dout, l_last * c_last))
        else:
            wdt = wd.T
        wd_list.append(wdt.astype(MXU_DTYPE))
        biases.append(bd.reshape(dout, 1))
        bias_offs.append(off); off += dout
        residual = (din == dout) and (j > 0)  # identity residual when dims match
        dense_cfg.append((din, dout, residual))
        din = dout

    params = dict(wt=tuple(wt_list), wd=tuple(wd_list),
                  bias=jnp.concatenate(biases, axis=0))
    cfg = dict(conv_cfg=tuple(conv_cfg), dense_cfg=tuple(dense_cfg),
               bias_offs=tuple(bias_offs), c_last=c_last, l_last=l_last,
               flatsize=flatsize)
    return params, cfg


# ---------------------------------------------------------------------------
# Pure-JAX reference (f32) for a correctness check
# ---------------------------------------------------------------------------
def reference_forward(x, params, cfg, ksize):
    conv_cfg, dense_cfg = cfg["conv_cfg"], cfg["dense_cfg"]
    bias_offs, c_last, l_last = cfg["bias_offs"], cfg["c_last"], cfg["l_last"]
    pad = ksize // 2
    bsz, cin0, _ = x.shape
    bias = params["bias"][:, 0]

    a = jnp.pad(x, ((0, 0), (0, conv_cfg[0][0] - cin0), (0, 0)))
    for i, (cin, cout, l_in, do_pool) in enumerate(conv_cfg):
        w = params["wt"][i].astype(jnp.float32).reshape(cout, ksize, cin)
        b = bias[bias_offs[i]:bias_offs[i] + cout]
        xp = jnp.pad(a, ((0, 0), (0, 0), (pad, pad)))
        y = jnp.zeros((bsz, cout, l_in), jnp.float32)
        for k in range(ksize):
            y = y + jnp.einsum('oc,bcl->bol', w[:, k, :], xp[:, :, k:k + l_in])
        y = jnp.maximum(y + b[None, :, None], 0.0)
        if do_pool:
            y = jnp.max(y.reshape(bsz, cout, l_in // 2, 2), axis=-1)
        a = y

    flat = a.reshape(bsz, c_last * l_last)
    n_conv = len(conv_cfg)
    w1 = params["wd"][0].astype(jnp.float32).reshape(-1, l_last, c_last)
    w1_std = jnp.transpose(w1, (2, 1, 0)).reshape(c_last * l_last, -1)
    d0 = dense_cfg[0][1]
    h = jnp.maximum(flat @ w1_std
                    + bias[bias_offs[n_conv]:bias_offs[n_conv] + d0][None], 0.0)
    for j in range(1, len(dense_cfg)):
        _din, dout, residual = dense_cfg[j]
        wj = params["wd"][j].astype(jnp.float32).T
        offj = bias_offs[n_conv + j]
        y = jnp.maximum(h @ wj + bias[offj:offj + dout][None], 0.0)
        if residual:
            y = y + h
        h = y
    return h


if __name__ == "__main__":
    # Small shapes consistent with the module:
    #   conv channels 4 -> 8 -> 16 -> 32 ; length 32 -> 32 -> 16 -> 8
    #   flatsize = start_conv_channel * input_length = 8 * 32 = 256
    #   batch 32 split into 2 tiles of 16  ->  a real "parallel" grid axis and
    #   >= 128 lanes in every conv matmul.
    batch = 32
    tile_b = 16
    input_channel = 4
    input_length = 32
    start_conv_channel = 8
    kernel_size = 3
    num_conv_layers = 3
    dense_dim = 128
    num_dense_layers = 2

    key = jax.random.PRNGKey(0)
    key, kx, kp = jax.random.split(key, 3)
    x = jax.random.normal(kx, (batch, input_channel, input_length), jnp.float32)
    params, cfg = build_params(
        kp,
        input_channel=input_channel,
        input_length=input_length,
        start_conv_channel=start_conv_channel,
        kernel_size=kernel_size,
        num_conv_layers=num_conv_layers,
        dense_dim=dense_dim,
        num_dense_layers=num_dense_layers,
    )
    assert cfg["flatsize"] == start_conv_channel * input_length

    fwd = jax.jit(functools.partial(convnet_forward, cfg=cfg,
                                    kernel_size=kernel_size, tile_b=tile_b))
    y = fwd(x, params)
    y = jax.block_until_ready(y)

    assert y.shape == (batch, dense_dim), y.shape
    assert bool(jnp.all(jnp.isfinite(y)))

    # Correctness vs. a pure-JAX f32 reference (loose tol: bf16 MXU operands).
    y_ref = reference_forward(x, params, cfg, kernel_size)
    max_err = float(jnp.max(jnp.abs(y - y_ref)))
    assert max_err < 0.15, f"max abs error {max_err}"

    print("KERNEL_OK")
</pallas_src>

<mosaic_0001>
module attributes {stable_mosaic.version = 11 : i64} {
  func.func @convnet_fused_kernel(%arg0: i32, %arg1: memref<1x8x512xbf16, #tpu.memory_space<vmem>>, %arg2: memref<8x24xbf16, #tpu.memory_space<vmem>>, %arg3: memref<16x24xbf16, #tpu.memory_space<vmem>>, %arg4: memref<32x48xbf16, #tpu.memory_space<vmem>>, %arg5: memref<128x256xbf16, #tpu.memory_space<vmem>>, %arg6: memref<128x128xbf16, #tpu.memory_space<vmem>>, %arg7: memref<312x1xf32, #tpu.memory_space<vmem>>, %arg8: memref<512x512xbf16, #tpu.memory_space<vmem>>, %arg9: memref<256x256xbf16, #tpu.memory_space<vmem>>, %arg10: memref<1x128x16xf32, #tpu.memory_space<vmem>>, %arg11: memref<24x512xbf16, #tpu.memory_space<vmem>>, %arg12: memref<24x512xbf16, #tpu.memory_space<vmem>>, %arg13: memref<48x256xbf16, #tpu.memory_space<vmem>>) attributes {dimension_semantics = [#tpu.dimension_semantics<parallel>], iteration_bounds = array<i64: 2>, scalar_prefetch = 0 : i64, scratch_operands = 3 : i64, tpu.core_type = #tpu.core_type<tc>, window_params = [{transform_indices = @transform_0, window_bounds = array<i64: 1, 8, 512>}, {pipeline_mode = #tpu.pipeline_mode<synchronous>, transform_indices = @transform_1, window_bounds = array<i64: 8, 24>}, {pipeline_mode = #tpu.pipeline_mode<synchronous>, transform_indices = @transform_2, window_bounds = array<i64: 16, 24>}, {pipeline_mode = #tpu.pipeline_mode<synchronous>, transform_indices = @transform_3, window_bounds = array<i64: 32, 48>}, {pipeline_mode = #tpu.pipeline_mode<synchronous>, transform_indices = @transform_4, window_bounds = array<i64: 128, 256>}, {pipeline_mode = #tpu.pipeline_mode<synchronous>, transform_indices = @transform_5, window_bounds = array<i64: 128, 128>}, {pipeline_mode = #tpu.pipeline_mode<synchronous>, transform_indices = @transform_6, window_bounds = array<i64: 312, 1>}, {pipeline_mode = #tpu.pipeline_mode<synchronous>, transform_indices = @transform_7, window_bounds = array<i64: 512, 512>}, {pipeline_mode = #tpu.pipeline_mode<synchronous>, transform_indices = @transform_8, window_bounds = array<i64: 256, 256>}, {transform_indices = @transform_9, window_bounds = array<i64: 1, 128, 16>}]} {
    %c0 = arith.constant 0 : index
    %c0_0 = arith.constant 0 : index
    %c0_1 = arith.constant 0 : index
    %0 = vector.load %arg1[%c0, %c0_0, %c0_1] : memref<1x8x512xbf16, #tpu.memory_space<vmem>>, vector<1x8x512xbf16>
    %1 = vector.shape_cast %0 : vector<1x8x512xbf16> to vector<8x512xbf16>
    %2 = vector.extract_strided_slice %1 {offsets = [0, 0], sizes = [8, 496], strides = [1, 1]} : vector<8x512xbf16> to vector<8x496xbf16>
    %c0_2 = arith.constant 0 : index
    %c16 = arith.constant 16 : index
    %3 = vector.load %arg11[%c0_2, %c16] : memref<24x512xbf16, #tpu.memory_space<vmem>>, vector<8x496xbf16>
    tpu.vector_store %arg11[%c0_2, %c16], %2 {strides = array<i32>} : memref<24x512xbf16, #tpu.memory_space<vmem>>, vector<8x496xbf16>,
    %cst = arith.constant 0.000000e+00 : bf16
    %4 = vector.broadcast %cst : bf16 to vector<8x16xbf16>
    %c0_3 = arith.constant 0 : index
    %c0_4 = arith.constant 0 : index
    %5 = vector.load %arg11[%c0_3, %c0_4] : memref<24x512xbf16, #tpu.memory_space<vmem>>, vector<8x16xbf16>
    tpu.vector_store %arg11[%c0_3, %c0_4], %4 {strides = array<i32>} : memref<24x512xbf16, #tpu.memory_space<vmem>>, vector<8x16xbf16>,
    %c8 = arith.constant 8 : index
    %c0_5 = arith.constant 0 : index
    %6 = vector.load %arg11[%c8, %c0_5] : memref<24x512xbf16, #tpu.memory_space<vmem>>, vector<8x512xbf16>
    tpu.vector_store %arg11[%c8, %c0_5], %1 {strides = array<i32>} : memref<24x512xbf16, #tpu.memory_space<vmem>>, vector<8x512xbf16>,
    %7 = vector.extract_strided_slice %1 {offsets = [0, 16], sizes = [8, 496], strides = [1, 1]} : vector<8x512xbf16> to vector<8x496xbf16>
    %c16_6 = arith.constant 16 : index
    %c0_7 = arith.constant 0 : index
    %8 = vector.load %arg11[%c16_6, %c0_7] : memref<24x512xbf16, #tpu.memory_space<vmem>>, vector<8x496xbf16>
    tpu.vector_store %arg11[%c16_6, %c0_7], %7 {strides = array<i32>} : memref<24x512xbf16, #tpu.memory_space<vmem>>, vector<8x496xbf16>,
    %cst_8 = arith.constant 0.000000e+00 : bf16
    %9 = vector.broadcast %cst_8 : bf16 to vector<8x16xbf16>
    %c16_9 = arith.constant 16 : index
    %c496 = arith.constant 496 : index
    %10 = vector.load %arg11[%c16_9, %c496] : memref<24x512xbf16, #tpu.memory_space<vmem>>, vector<8x16xbf16>
    tpu.vector_store %arg11[%c16_9, %c496], %9 {strides = array<i32>} : memref<24x512xbf16, #tpu.memory_space<vmem>>, vector<8x16xbf16>,
    %c0_10 = arith.constant 0 : index
    %c0_11 = arith.constant 0 : index
    %11 = vector.load %arg7[%c0_10, %c0_11] : memref<312x1xf32, #tpu.memory_space<vmem>>, vector<8x1xf32>
    %c0_12 = arith.constant 0 : index
    %c0_13 = arith.constant 0 : index
    %12 = vector.load %arg2[%c0_12, %c0_13] : memref<8x24xbf16, #tpu.memory_space<vmem>>, vector<8x24xbf16>
    %c0_14 = arith.constant 0 : index
    %c0_15 = arith.constant 0 : index
    %13 = vector.load %arg11[%c0_14, %c0_15] : memref<24x512xbf16, #tpu.memory_space<vmem>>, vector<24x512xbf16>
    %cst_16 = arith.constant dense<0.000000e+00> : vector<8x512xf32>
    %14 = tpu.matmul %12, %13, %cst_16 {dimension_numbers = #tpu.dot_dimension_numbers<[1], [0], [0], [1], [0, 0, 1, 1], [], []>} : vector<8x24xbf16>, vector<24x512xbf16>, vector<8x512xf32> -> vector<8x512xf32>
    %15 = vector.broadcast %11 : vector<8x1xf32> to vector<8x512xf32>
    %16 = arith.addf %14, %15 : vector<8x512xf32>
    %cst_17 = arith.constant 0.000000e+00 : f32
    %17 = vector.broadcast %cst_17 : f32 to vector<8x512xf32>
    %18 = arith.maximumf %16, %17 : vector<8x512xf32>
    %19 = arith.truncf %18 : vector<8x512xf32> to vector<8x512xbf16>
    %20 = vector.extract_strided_slice %19 {offsets = [0, 0], sizes = [8, 496], strides = [1, 1]} : vector<8x512xbf16> to vector<8x496xbf16>
    %c0_18 = arith.constant 0 : index
    %c16_19 = arith.constant 16 : index
    %21 = vector.load %arg12[%c0_18, %c16_19] : memref<24x512xbf16, #tpu.memory_space<vmem>>, vector<8x496xbf16>
    tpu.vector_store %arg12[%c0_18, %c16_19], %20 {strides = array<i32>} : memref<24x512xbf16, #tpu.memory_space<vmem>>, vector<8x496xbf16>,
    %cst_20 = arith.constant 0.000000e+00 : bf16
    %22 = vector.broadcast %cst_20 : bf16 to vector<8x16xbf16>
    %c0_21 = arith.constant 0 : index
    %c0_22 = arith.constant 0 : index
    %23 = vector.load %arg12[%c0_21, %c0_22] : memref<24x512xbf16, #tpu.memory_space<vmem>>, vector<8x16xbf16>
    tpu.vector_store %arg12[%c0_21, %c0_22], %22 {strides = array<i32>} : memref<24x512xbf16, #tpu.memory_space<vmem>>, vector<8x16xbf16>,
    %c8_23 = arith.constant 8 : index
    %c0_24 = arith.constant 0 : index
    %24 = vector.load %arg12[%c8_23, %c0_24] : memref<24x512xbf16, #tpu.memory_space<vmem>>, vector<8x512xbf16>
    tpu.vector_store %arg12[%c8_23, %c0_24], %19 {strides = array<i32>} : memref<24x512xbf16, #tpu.memory_space<vmem>>, vector<8x512xbf16>,
    %25 = vector.extract_strided_slice %19 {offsets = [0, 16], sizes = [8, 496], strides = [1, 1]} : vector<8x512xbf16> to vector<8x496xbf16>
    %c16_25 = arith.constant 16 : index
    %c0_26 = arith.constant 0 : index
    %26 = vector.load %arg12[%c16_25, %c0_26] : memref<24x512xbf16, #tpu.memory_space<vmem>>, vector<8x496xbf16>
    tpu.vector_store %arg12[%c16_25, %c0_26], %25 {strides = array<i32>} : memref<24x512xbf16, #tpu.memory_space<vmem>>, vector<8x496xbf16>,
    %cst_27 = arith.constant 0.000000e+00 : bf16
    %27 = vector.broadcast %cst_27 : bf16 to vector<8x16xbf16>
    %c16_28 = arith.constant 16 : index
    %c496_29 = arith.constant 496 : index
    %28 = vector.load %arg12[%c16_28, %c496_29] : memref<24x512xbf16, #tpu.memory_space<vmem>>, vector<8x16xbf16>
    tpu.vector_store %arg12[%c16_28, %c496_29], %27 {strides = array<i32>} : memref<24x512xbf16, #tpu.memory_space<vmem>>, vector<8x16xbf16>,
    %c8_30 = arith.constant 8 : index
    %c0_31 = arith.constant 0 : index
    %29 = vector.load %arg7[%c8_30, %c0_31] : memref<312x1xf32, #tpu.memory_space<vmem>>, vector<16x1xf32>
    %c0_32 = arith.constant 0 : index
    %c0_33 = arith.constant 0 : index
    %30 = vector.load %arg3[%c0_32, %c0_33] : memref<16x24xbf16, #tpu.memory_space<vmem>>, vector<16x24xbf16>
    %c0_34 = arith.constant 0 : index
    %c0_35 = arith.constant 0 : index
    %31 = vector.load %arg12[%c0_34, %c0_35] : memref<24x512xbf16, #tpu.memory_space<vmem>>, vector<24x512xbf16>
    %cst_36 = arith.constant dense<0.000000e+00> : vector<16x512xf32>
    %32 = tpu.matmul %30, %31, %cst_36 {dimension_numbers = #tpu.dot_dimension_numbers<[1], [0], [0], [1], [0, 0, 1, 1], [], []>} : vector<16x24xbf16>, vector<24x512xbf16>, vector<16x512xf32> -> vector<16x512xf32>
    %33 = vector.broadcast %29 : vector<16x1xf32> to vector<16x512xf32>
    %34 = arith.addf %32, %33 : vector<16x512xf32>
    %cst_37 = arith.constant 0.000000e+00 : f32
    %35 = vector.broadcast %cst_37 : f32 to vector<16x512xf32>
    %36 = arith.maximumf %34, %35 : vector<16x512xf32>
    %37 = arith.truncf %36 : vector<16x512xf32> to vector<16x512xbf16>
    %c0_38 = arith.constant 0 : index
    %c0_39 = arith.constant 0 : index
    %38 = vector.load %arg8[%c0_38, %c0_39] : memref<512x512xbf16, #tpu.memory_space<vmem>>, vector<512x512xbf16>
    %cst_40 = arith.constant dense<0.000000e+00> : vector<16x512xf32>
    %39 = tpu.matmul %37, %38, %cst_40 {dimension_numbers = #tpu.dot_dimension_numbers<[1], [0], [0], [1], [0, 0, 1, 1], [], []>} : vector<16x512xbf16>, vector<512x512xbf16>, vector<16x512xf32> -> vector<16x512xf32>
    %40 = vector.extract_strided_slice %39 {offsets = [0, 0], sizes = [16, 256], strides = [1, 1]} : vector<16x512xf32> to vector<16x256xf32>
    %41 = vector.extract_strided_slice %39 {offsets = [0, 256], sizes = [16, 256], strides = [1, 1]} : vector<16x512xf32> to vector<16x256xf32>
    %42 = arith.maximumf %40, %41 : vector<16x256xf32>
    %43 = arith.truncf %42 : vector<16x256xf32> to vector<16x256xbf16>
    %44 = vector.extract_strided_slice %43 {offsets = [0, 0], sizes = [16, 240], strides = [1, 1]} : vector<16x256xbf16> to vector<16x240xbf16>
    %c0_41 = arith.constant 0 : index
    %c16_42 = arith.constant 16 : index
    %45 = vector.load %arg13[%c0_41, %c16_42] : memref<48x256xbf16, #tpu.memory_space<vmem>>, vector<16x240xbf16>
    tpu.vector_store %arg13[%c0_41, %c16_42], %44 {strides = array<i32>} : memref<48x256xbf16, #tpu.memory_space<vmem>>, vector<16x240xbf16>,
    %cst_43 = arith.constant 0.000000e+00 : bf16
    %46 = vector.broadcast %cst_43 : bf16 to vector<16x16xbf16>
    %c0_44 = arith.constant 0 : index
    %c0_45 = arith.constant 0 : index
    %47 = vector.load %arg13[%c0_44, %c0_45] : memref<48x256xbf16, #tpu.memory_space<vmem>>, vector<16x16xbf16>
    tpu.vector_store %arg13[%c0_44, %c0_45], %46 {strides = array<i32>} : memref<48x256xbf16, #tpu.memory_space<vmem>>, vector<16x16xbf16>,
    %c16_46 = arith.constant 16 : index
    %c0_47 = arith.constant 0 : index
    %48 = vector.load %arg13[%c16_46, %c0_47] : memref<48x256xbf16, #tpu.memory_space<vmem>>, vector<16x256xbf16>
    tpu.vector_store %arg13[%c16_46, %c0_47], %43 {strides = array<i32>} : memref<48x256xbf16, #tpu.memory_space<vmem>>, vector<16x256xbf16>,
    %49 = vector.extract_strided_slice %43 {offsets = [0, 16], sizes = [16, 240], strides = [1, 1]} : vector<16x256xbf16> to vector<16x240xbf16>
    %c32 = arith.constant 32 : index
    %c0_48 = arith.constant 0 : index
    %50 = vector.load %arg13[%c32, %c0_48] : memref<48x256xbf16, #tpu.memory_space<vmem>>, vector<16x240xbf16>
    tpu.vector_store %arg13[%c32, %c0_48], %49 {strides = array<i32>} : memref<48x256xbf16, #tpu.memory_space<vmem>>, vector<16x240xbf16>,
    %cst_49 = arith.constant 0.000000e+00 : bf16
    %51 = vector.broadcast %cst_49 : bf16 to vector<16x16xbf16>
    %c32_50 = arith.constant 32 : index
    %c240 = arith.constant 240 : index
    %52 = vector.load %arg13[%c32_50, %c240] : memref<48x256xbf16, #tpu.memory_space<vmem>>, vector<16x16xbf16>
    tpu.vector_store %arg13[%c32_50, %c240], %51 {strides = array<i32>} : memref<48x256xbf16, #tpu.memory_space<vmem>>, vector<16x16xbf16>,
    %c24 = arith.constant 24 : index
    %c0_51 = arith.constant 0 : index
    %53 = vector.load %arg7[%c24, %c0_51] : memref<312x1xf32, #tpu.memory_space<vmem>>, vector<32x1xf32>
    %c0_52 = arith.constant 0 : index
    %c0_53 = arith.constant 0 : index
    %54 = vector.load %arg4[%c0_52, %c0_53] : memref<32x48xbf16, #tpu.memory_space<vmem>>, vector<32x48xbf16>
    %c0_54 = arith.constant 0 : index
    %c0_55 = arith.constant 0 : index
    %55 = vector.load %arg13[%c0_54, %c0_55] : memref<48x256xbf16, #tpu.memory_space<vmem>>, vector<48x256xbf16>
    %cst_56 = arith.constant dense<0.000000e+00> : vector<32x256xf32>
    %56 = tpu.matmul %54, %55, %cst_56 {dimension_numbers = #tpu.dot_dimension_numbers<[1], [0], [0], [1], [0, 0, 1, 1], [], []>} : vector<32x48xbf16>, vector<48x256xbf16>, vector<32x256xf32> -> vector<32x256xf32>
    %57 = vector.broadcast %53 : vector<32x1xf32> to vector<32x256xf32>
    %58 = arith.addf %56, %57 : vector<32x256xf32>
    %cst_57 = arith.constant 0.000000e+00 : f32
    %59 = vector.broadcast %cst_57 : f32 to vector<32x256xf32>
    %60 = arith.maximumf %58, %59 : vector<32x256xf32>
    %61 = arith.truncf %60 : vector<32x256xf32> to vector<32x256xbf16>
    %c0_58 = arith.constant 0 : index
    %c0_59 = arith.constant 0 : index
    %62 = vector.load %arg9[%c0_58, %c0_59] : memref<256x256xbf16, #tpu.memory_space<vmem>>, vector<256x256xbf16>
    %cst_60 = arith.constant dense<0.000000e+00> : vector<32x256xf32>
    %63 = tpu.matmul %61, %62, %cst_60 {dimension_numbers = #tpu.dot_dimension_numbers<[1], [0], [0], [1], [0, 0, 1, 1], [], []>} : vector<32x256xbf16>, vector<256x256xbf16>, vector<32x256xf32> -> vector<32x256xf32>
    %64 = vector.extract_strided_slice %63 {offsets = [0, 0], sizes = [32, 128], strides = [1, 1]} : vector<32x256xf32> to vector<32x128xf32>
    %65 = vector.extract_strided_slice %63 {offsets = [0, 128], sizes = [32, 128], strides = [1, 1]} : vector<32x256xf32> to vector<32x128xf32>
    %66 = arith.maximumf %64, %65 : vector<32x128xf32>
    %67 = arith.truncf %66 : vector<32x128xf32> to vector<32x128xbf16>
    %cst_61 = arith.constant 0.000000e+00 : f32
    %68 = vector.broadcast %cst_61 : f32 to vector<128x16xf32>
    %c0_62 = arith.constant 0 : index
    %c0_63 = arith.constant 0 : index
    %69 = vector.load %arg5[%c0_62, %c0_63] : memref<128x256xbf16, #tpu.memory_space<vmem>>, vector<128x32xbf16>
    %70 = vector.extract_strided_slice %67 {offsets = [0, 0], sizes = [32, 16], strides = [1, 1]} : vector<32x128xbf16> to vector<32x16xbf16>
    %cst_64 = arith.constant dense<0.000000e+00> : vector<128x16xf32>
    %71 = tpu.matmul %69, %70, %cst_64 {dimension_numbers = #tpu.dot_dimension_numbers<[1], [0], [0], [1], [0, 0, 1, 1], [], []>} : vector<128x32xbf16>, vector<32x16xbf16>, vector<128x16xf32> -> vector<128x16xf32>
    %72 = arith.addf %68, %71 : vector<128x16xf32>
    %c0_65 = arith.constant 0 : index
    %c32_66 = arith.constant 32 : index
    %73 = vector.load %arg5[%c0_65, %c32_66] : memref<128x256xbf16, #tpu.memory_space<vmem>>, vector<128x32xbf16>
    %74 = vector.extract_strided_slice %67 {offsets = [0, 16], sizes = [32, 16], strides = [1, 1]} : vector<32x128xbf16> to vector<32x16xbf16>
    %cst_67 = arith.constant dense<0.000000e+00> : vector<128x16xf32>
    %75 = tpu.matmul %73, %74, %cst_67 {dimension_numbers = #tpu.dot_dimension_numbers<[1], [0], [0], [1], [0, 0, 1, 1], [], []>} : vector<128x32xbf16>, vector<32x16xbf16>, vector<128x16xf32> -> vector<128x16xf32>
    %76 = arith.addf %72, %75 : vector<128x16xf32>
    %c0_68 = arith.constant 0 : index
    %c64 = arith.constant 64 : index
    %77 = vector.load %arg5[%c0_68, %c64] : memref<128x256xbf16, #tpu.memory_space<vmem>>, vector<128x32xbf16>
    %78 = vector.extract_strided_slice %67 {offsets = [0, 32], sizes = [32, 16], strides = [1, 1]} : vector<32x128xbf16> to vector<32x16xbf16>
    %cst_69 = arith.constant dense<0.000000e+00> : vector<128x16xf32>
    %79 = tpu.matmul %77, %78, %cst_69 {dimension_numbers = #tpu.dot_dimension_numbers<[1], [0], [0], [1], [0, 0, 1, 1], [], []>} : vector<128x32xbf16>, vector<32x16xbf16>, vector<128x16xf32> -> vector<128x16xf32>
    %80 = arith.addf %76, %79 : vector<128x16xf32>
    %c0_70 = arith.constant 0 : index
    %c96 = arith.constant 96 : index
    %81 = vector.load %arg5[%c0_70, %c96] : memref<128x256xbf16, #tpu.memory_space<vmem>>, vector<128x32xbf16>
    %82 = vector.extract_strided_slice %67 {offsets = [0, 48], sizes = [32, 16], strides = [1, 1]} : vector<32x128xbf16> to vector<32x16xbf16>
    %cst_71 = arith.constant dense<0.000000e+00> : vector<128x16xf32>
    %83 = tpu.matmul %81, %82, %cst_71 {dimension_numbers = #tpu.dot_dimension_numbers<[1], [0], [0], [1], [0, 0, 1, 1], [], []>} : vector<128x32xbf16>, vector<32x16xbf16>, vector<128x16xf32> -> vector<128x16xf32>
    %84 = arith.addf %80, %83 : vector<128x16xf32>
    %c0_72 = arith.constant 0 : index
    %c128 = arith.constant 128 : index
    %85 = vector.load %arg5[%c0_72, %c128] : memref<128x256xbf16, #tpu.memory_space<vmem>>, vector<128x32xbf16>
    %86 = vector.extract_strided_slice %67 {offsets = [0, 64], sizes = [32, 16], strides = [1, 1]} : vector<32x128xbf16> to vector<32x16xbf16>
    %cst_73 = arith.constant dense<0.000000e+00> : vector<128x16xf32>
    %87 = tpu.matmul %85, %86, %cst_73 {dimension_numbers = #tpu.dot_dimension_numbers<[1], [0], [0], [1], [0, 0, 1, 1], [], []>} : vector<128x32xbf16>, vector<32x16xbf16>, vector<128x16xf32> -> vector<128x16xf32>
    %88 = arith.addf %84, %87 : vector<128x16xf32>
    %c0_74 = arith.constant 0 : index
    %c160 = arith.constant 160 : index
    %89 = vector.load %arg5[%c0_74, %c160] : memref<128x256xbf16, #tpu.memory_space<vmem>>, vector<128x32xbf16>
    %90 = vector.extract_strided_slice %67 {offsets = [0, 80], sizes = [32, 16], strides = [1, 1]} : vector<32x128xbf16> to vector<32x16xbf16>
    %cst_75 = arith.constant dense<0.000000e+00> : vector<128x16xf32>
    %91 = tpu.matmul %89, %90, %cst_75 {dimension_numbers = #tpu.dot_dimension_numbers<[1], [0], [0], [1], [0, 0, 1, 1], [], []>} : vector<128x32xbf16>, vector<32x16xbf16>, vector<128x16xf32> -> vector<128x16xf32>
    %92 = arith.addf %88, %91 : vector<128x16xf32>
    %c0_76 = arith.constant 0 : index
    %c192 = arith.constant 192 : index
    %93 = vector.load %arg5[%c0_76, %c192] : memref<128x256xbf16, #tpu.memory_space<vmem>>, vector<128x32xbf16>
    %94 = vector.extract_strided_slice %67 {offsets = [0, 96], sizes = [32, 16], strides = [1, 1]} : vector<32x128xbf16> to vector<32x16xbf16>
    %cst_77 = arith.constant dense<0.000000e+00> : vector<128x16xf32>
    %95 = tpu.matmul %93, %94, %cst_77 {dimension_numbers = #tpu.dot_dimension_numbers<[1], [0], [0], [1], [0, 0, 1, 1], [], []>} : vector<128x32xbf16>, vector<32x16xbf16>, vector<128x16xf32> -> vector<128x16xf32>
    %96 = arith.addf %92, %95 : vector<128x16xf32>
    %c0_78 = arith.constant 0 : index
    %c224 = arith.constant 224 : index
    %97 = vector.load %arg5[%c0_78, %c224] : memref<128x256xbf16, #tpu.memory_space<vmem>>, vector<128x32xbf16>
    %98 = vector.extract_strided_slice %67 {offsets = [0, 112], sizes = [32, 16], strides = [1, 1]} : vector<32x128xbf16> to vector<32x16xbf16>
    %cst_79 = arith.constant dense<0.000000e+00> : vector<128x16xf32>
    %99 = tpu.matmul %97, %98, %cst_79 {dimension_numbers = #tpu.dot_dimension_numbers<[1], [0], [0], [1], [0, 0, 1, 1], [], []>} : vector<128x32xbf16>, vector<32x16xbf16>, vector<128x16xf32> -> vector<128x16xf32>
    %100 = arith.addf %96, %99 : vector<128x16xf32>
    %c56 = arith.constant 56 : index
    %c0_80 = arith.constant 0 : index
    %101 = vector.load %arg7[%c56, %c0_80] : memref<312x1xf32, #tpu.memory_space<vmem>>, vector<128x1xf32>
    %102 = vector.broadcast %101 : vector<128x1xf32> to vector<128x16xf32>
    %103 = arith.addf %100, %102 : vector<128x16xf32>
    %cst_81 = arith.constant 0.000000e+00 : f32
    %104 = vector.broadcast %cst_81 : f32 to vector<128x16xf32>
    %105 = arith.maximumf %103, %104 : vector<128x16xf32>
    %c184 = arith.constant 184 : index
    %c0_82 = arith.constant 0 : index
    %106 = vector.load %arg7[%c184, %c0_82] : memref<312x1xf32, #tpu.memory_space<vmem>>, vector<128x1xf32>
    %c0_83 = arith.constant 0 : index
    %c0_84 = arith.constant 0 : index
    %107 = vector.load %arg6[%c0_83, %c0_84] : memref<128x128xbf16, #tpu.memory_space<vmem>>, vector<128x128xbf16>
    %108 = arith.truncf %105 : vector<128x16xf32> to vector<128x16xbf16>
    %cst_85 = arith.constant dense<0.000000e+00> : vector<128x16xf32>
    %109 = tpu.matmul %107, %108, %cst_85 {dimension_numbers = #tpu.dot_dimension_numbers<[1], [0], [0], [1], [0, 0, 1, 1], [], []>} : vector<128x128xbf16>, vector<128x16xbf16>, vector<128x16xf32> -> vector<128x16xf32>
    %110 = vector.broadcast %106 : vector<128x1xf32> to vector<128x16xf32>
    %111 = arith.addf %109, %110 : vector<128x16xf32>
    %cst_86 = arith.constant 0.000000e+00 : f32
    %112 = vector.broadcast %cst_86 : f32 to vector<128x16xf32>
    %113 = arith.maximumf %111, %112 : vector<128x16xf32>
    %114 = arith.addf %113, %105 : vector<128x16xf32>
    %c0_87 = arith.constant 0 : index
    %c0_88 = arith.constant 0 : index
    %c0_89 = arith.constant 0 : index
    %115 = vector.load %arg10[%c0_87, %c0_88, %c0_89] : memref<1x128x16xf32, #tpu.memory_space<vmem>>, vector<1x128x16xf32>
    %116 = vector.shape_cast %115 : vector<1x128x16xf32> to vector<128x16xf32>
    %117 = vector.shape_cast %114 : vector<128x16xf32> to vector<1x128x16xf32>
    tpu.vector_store %arg10[%c0_87, %c0_88, %c0_89], %117 {strides = array<i32>} : memref<1x128x16xf32, #tpu.memory_space<vmem>>, vector<1x128x16xf32>,
    return
  }
  func.func @transform_0(%arg0: i32) -> (i32, i32, i32) {
    %c0_i32 = arith.constant 0 : i32
    %c0_i32_0 = arith.constant 0 : i32
    %c0_i32_1 = arith.constant 0 : i32
    return %arg0, %c0_i32, %c0_i32_0 : i32, i32, i32
  }
  func.func @transform_1(%arg0: i32) -> (i32, i32) {
    %c0_i32 = arith.constant 0 : i32
    %c0_i32_0 = arith.constant 0 : i32
    %c0_i32_1 = arith.constant 0 : i32
    return %c0_i32, %c0_i32_0 : i32, i32
  }
  func.func @transform_2(%arg0: i32) -> (i32, i32) {
    %c0_i32 = arith.constant 0 : i32
    %c0_i32_0 = arith.constant 0 : i32
    %c0_i32_1 = arith.constant 0 : i32
    return %c0_i32, %c0_i32_0 : i32, i32
  }
  func.func @transform_3(%arg0: i32) -> (i32, i32) {
    %c0_i32 = arith.constant 0 : i32
    %c0_i32_0 = arith.constant 0 : i32
    %c0_i32_1 = arith.constant 0 : i32
    return %c0_i32, %c0_i32_0 : i32, i32
  }
  func.func @transform_4(%arg0: i32) -> (i32, i32) {
    %c0_i32 = arith.constant 0 : i32
    %c0_i32_0 = arith.constant 0 : i32
    %c0_i32_1 = arith.constant 0 : i32
    return %c0_i32, %c0_i32_0 : i32, i32
  }
  func.func @transform_5(%arg0: i32) -> (i32, i32) {
    %c0_i32 = arith.constant 0 : i32
    %c0_i32_0 = arith.constant 0 : i32
    %c0_i32_1 = arith.constant 0 : i32
    return %c0_i32, %c0_i32_0 : i32, i32
  }
  func.func @transform_6(%arg0: i32) -> (i32, i32) {
    %c0_i32 = arith.constant 0 : i32
    %c0_i32_0 = arith.constant 0 : i32
    %c0_i32_1 = arith.constant 0 : i32
    return %c0_i32, %c0_i32_0 : i32, i32
  }
  func.func @transform_7(%arg0: i32) -> (i32, i32) {
    %c0_i32 = arith.constant 0 : i32
    %c0_i32_0 = arith.constant 0 : i32
    %c0_i32_1 = arith.constant 0 : i32
    return %c0_i32, %c0_i32_0 : i32, i32
  }
  func.func @transform_8(%arg0: i32) -> (i32, i32) {
    %c0_i32 = arith.constant 0 : i32
    %c0_i32_0 = arith.constant 0 : i32
    %c0_i32_1 = arith.constant 0 : i32
    return %c0_i32, %c0_i32_0 : i32, i32
  }
  func.func @transform_9(%arg0: i32) -> (i32, i32, i32) {
    %c0_i32 = arith.constant 0 : i32
    %c0_i32_0 = arith.constant 0 : i32
    %c0_i32_1 = arith.constant 0 : i32
    return %arg0, %c0_i32, %c0_i32_0 : i32, i32, i32
  }
}

</mosaic_0001>

<llo_original>
// kernel: convnet_forward.1
$region0: #{convnet_forward.1}
  #allocation0 [shape = 'u32[]', space=smem, size = 0x4, offset = 0x4, fixed_abs, tag = 'smem constant byte address 0x4 - core index']
  #allocation1 [shape = 'u32[144,128]{1,0:T(1,128)}', space=vmem, size = 0x12000, scoped, tag = 'internal scratch']
  #allocation2 [shape = 'bf16[24,512]{1,0:T(8,128)(2,1)}', space=vmem, size = 0x6000, scoped, tag = 'scratch operand']
  #allocation3 [shape = 'bf16[24,512]{1,0:T(8,128)(2,1)}', space=vmem, size = 0x6000, scoped, tag = 'scratch operand']
  #allocation4 [shape = 'bf16[48,256]{1,0:T(8,128)(2,1)}', space=vmem, size = 0x6000, scoped, tag = 'scratch operand']
  %s0 = inlined_call_operand.vmem [shape: bf16[2,8,512], index: 0, kind: input, shape index: {}]
  %s1 = inlined_call_operand.vmem [shape: bf16[8,24], index: 1, kind: input, shape index: {}]
  %s2 = inlined_call_operand.vmem [shape: bf16[16,24], index: 2, kind: input, shape index: {}]
  %s3 = inlined_call_operand.vmem [shape: bf16[32,48], index: 3, kind: input, shape index: {}]
  %s4 = inlined_call_operand.hbm [shape: bf16[128,256], index: 4, kind: input, shape index: {}]
  %s5 = inlined_call_operand.vmem [shape: bf16[128,128], index: 5, kind: input, shape index: {}]
  %s6 = inlined_call_operand.vmem [shape: f32[312,1], index: 6, kind: input, shape index: {}]
  %s7 = inlined_call_operand.vmem [shape: bf16[512,512], index: 7, kind: input, shape index: {}]
  %s8 = inlined_call_operand.vmem [shape: bf16[256,256], index: 8, kind: input, shape index: {}]
  %s9 = inlined_call_operand.vmem [shape: f32[2,128,16], index: 9, kind: output, shape index: {}]
  %s10 = sld [smem:[#allocation0]]
  $region73: #{convnet_forward.1} parent=0
    _
  %s12 = ssub.s32 1, %s10
  %s13 = scalar_select 0, %s12, %s10
  $region1: #{convnet_forward.1} parent=0
    #allocation5 [shape = 'u8[65536]{0}', space=vmem, size = 0x10000, scoped, tag = 'input window, operand 4, single buffered']
    #allocation6 [shape = 's32[2]{0}', space=sflag, size = 0x8, scoped, tag = 'scoped memory for convnet_forward.1']
    %14 = vsyncpa [#allocation6], 0
    loop: start=0, step=1, limit=4
    $region2: #{convnet_forward.1} parent=1 // loop_pre_header
      _
    $region3: #{convnet_forward.1} parent=1 // loop_header
      %s16 = sphi 0, %s20
      %p17 = scmp.ge.s32.totalorder %s16, 4
      %s26 = sphi 0, %s28
      %s29 = sphi 0, %s26
      %s30 = sphi 0, %s29
      %s46 = sphi 0, %s30
      %s50 = sphi 0, %s50
      %s52 = sphi 0, %s50
      %s53 = sphi 0, %s52
      %s67 = sphi 0, %s53
      %s71 = sphi 0, %s71
      %s73 = sphi 0, %s71
      %s74 = sphi 0, %s73
      %s88 = sphi 0, %s74
      %s92 = sphi 0, %s92
      %s94 = sphi 0, %s92
      %s95 = sphi 0, %s94
      %s109 = sphi 0, %s95
      %s113 = sphi 0, %s113
      %s115 = sphi 0, %s113
      %s116 = sphi 0, %s115
      %s130 = sphi 0, %s116
      %s134 = sphi 0, %s134
      %s136 = sphi 0, %s134
      %s137 = sphi 0, %s136
      %s151 = sphi 0, %s137
      %s155 = sphi 0, %s155
      %s157 = sphi 0, %s155
      %s158 = sphi 0, %s157
      %s172 = sphi 0, %s158
      %s176 = sphi 0, %s176
      %s178 = sphi 0, %s176
      %s179 = sphi 0, %s178
      %s193 = sphi 0, %s179
      %s197 = sphi 0, %s197
      %s199 = sphi 0, %s197
      %s200 = sphi 0, %s199
      %s214 = sphi 0, %s200
      %s220 = sphi 0, %s222
      %s223 = sphi 0, %s220
      %s224 = sphi 0, %s223
      %s240 = sphi 0, %s224
    $region4: #{convnet_forward.1} parent=1 // loop_header_branch
      %19 = sbr.rel (%p17) target = $region8
    $region5: #{convnet_forward.1} parent=1 // loop_body
      %s21 = ssub.s32 %s16, 1
      %s22 = ssub.s32 %s16, 2
      %s23 = sadd.s32 %s16, 1
      %s24 = ssub.s32 %s16, %s23
      %p25 = scmp.eq.s32.totalorder %s24, 0
      %s27 = sadd.s32 %s26, 1
      %s28 = scalar_select %p25, %s26, %s27
      %p31 = pneg %p25
      %p32 = scmp.eq.s32.totalorder %s16, 1
      %p33 = por %p31, %p32
      %p34 = scmp.ne.s32.totalorder %s26, %s29
      %p35 = scmp.eq.s32.totalorder %s16, 0
      %p36 = por %p34, %p35
      %p37 = scmp.ne.s32.totalorder %s26, %s29
      %p38 = scmp.eq.s32.totalorder %s21, 1
      %p39 = por %p37, %p38
      %p40 = scmp.ne.s32.totalorder %s29, %s30
      %p41 = scmp.eq.s32.totalorder %s21, 0
      %p42 = por %p40, %p41
      %p43 = scmp.ne.s32.totalorder %s29, %s30
      %p44 = scmp.eq.s32.totalorder %s22, 1
      %p45 = por %p43, %p44
      %p47 = scmp.ne.s32.totalorder %s30, %s46
      %p48 = scmp.eq.s32.totalorder %s22, 0
      %p49 = por %p47, %p48
      %s51 = sadd.s32 %s50, 1
      %p54 = scmp.eq.s32.totalorder %s16, 1
      %p55 = scmp.ne.s32.totalorder %s50, %s52
      %p56 = scmp.eq.s32.totalorder %s16, 0
      %p57 = por %p55, %p56
      %p58 = scmp.ne.s32.totalorder %s50, %s52
      %p59 = scmp.eq.s32.totalorder %s21, 1
      %p60 = por %p58, %p59
      %p61 = scmp.ne.s32.totalorder %s52, %s53
      %p62 = scmp.eq.s32.totalorder %s21, 0
      %p63 = por %p61, %p62
      %p64 = scmp.ne.s32.totalorder %s52, %s53
      %p65 = scmp.eq.s32.totalorder %s22, 1
      %p66 = por %p64, %p65
      %p68 = scmp.ne.s32.totalorder %s53, %s67
      %p69 = scmp.eq.s32.totalorder %s22, 0
      %p70 = por %p68, %p69
      %s72 = sadd.s32 %s71, 1
      %p75 = scmp.eq.s32.totalorder %s16, 1
      %p76 = scmp.ne.s32.totalorder %s71, %s73
      %p77 = scmp.eq.s32.totalorder %s16, 0
      %p78 = por %p76, %p77
      %p79 = scmp.ne.s32.totalorder %s71, %s73
      %p80 = scmp.eq.s32.totalorder %s21, 1
      %p81 = por %p79, %p80
      %p82 = scmp.ne.s32.totalorder %s73, %s74
      %p83 = scmp.eq.s32.totalorder %s21, 0
      %p84 = por %p82, %p83
      %p85 = scmp.ne.s32.totalorder %s73, %s74
      %p86 = scmp.eq.s32.totalorder %s22, 1
      %p87 = por %p85, %p86
      %p89 = scmp.ne.s32.totalorder %s74, %s88
      %p90 = scmp.eq.s32.totalorder %s22, 0
      %p91 = por %p89, %p90
      %s93 = sadd.s32 %s92, 1
      %p96 = scmp.eq.s32.totalorder %s16, 1
      %p97 = scmp.ne.s32.totalorder %s92, %s94
      %p98 = scmp.eq.s32.totalorder %s16, 0
      %p99 = por %p97, %p98
      %p100 = scmp.ne.s32.totalorder %s92, %s94
      %p101 = scmp.eq.s32.totalorder %s21, 1
      %p102 = por %p100, %p101
      %p103 = scmp.ne.s32.totalorder %s94, %s95
      %p104 = scmp.eq.s32.totalorder %s21, 0
      %p105 = por %p103, %p104
      %p106 = scmp.ne.s32.totalorder %s94, %s95
      %p107 = scmp.eq.s32.totalorder %s22, 1
      %p108 = por %p106, %p107
      %p110 = scmp.ne.s32.totalorder %s95, %s109
      %p111 = scmp.eq.s32.totalorder %s22, 0
      %p112 = por %p110, %p111
      %s114 = sadd.s32 %s113, 1
      %p117 = scmp.eq.s32.totalorder %s16, 1
      %p118 = scmp.ne.s32.totalorder %s113, %s115
      %p119 = scmp.eq.s32.totalorder %s16, 0
      %p120 = por %p118, %p119
      %p121 = scmp.ne.s32.totalorder %s113, %s115
      %p122 = scmp.eq.s32.totalorder %s21, 1
      %p123 = por %p121, %p122
      %p124 = scmp.ne.s32.totalorder %s115, %s116
      %p125 = scmp.eq.s32.totalorder %s21, 0
      %p126 = por %p124, %p125
      %p127 = scmp.ne.s32.totalorder %s115, %s116
      %p128 = scmp.eq.s32.totalorder %s22, 1
      %p129 = por %p127, %p128
      %p131 = scmp.ne.s32.totalorder %s116, %s130
      %p132 = scmp.eq.s32.totalorder %s22, 0
      %p133 = por %p131, %p132
      %s135 = sadd.s32 %s134, 1
      %p138 = scmp.eq.s32.totalorder %s16, 1
      %p139 = scmp.ne.s32.totalorder %s134, %s136
      %p140 = scmp.eq.s32.totalorder %s16, 0
      %p141 = por %p139, %p140
      %p142 = scmp.ne.s32.totalorder %s134, %s136
      %p143 = scmp.eq.s32.totalorder %s21, 1
      %p144 = por %p142, %p143
      %p145 = scmp.ne.s32.totalorder %s136, %s137
      %p146 = scmp.eq.s32.totalorder %s21, 0
      %p147 = por %p145, %p146
      %p148 = scmp.ne.s32.totalorder %s136, %s137
      %p149 = scmp.eq.s32.totalorder %s22, 1
      %p150 = por %p148, %p149
      %p152 = scmp.ne.s32.totalorder %s137, %s151
      %p153 = scmp.eq.s32.totalorder %s22, 0
      %p154 = por %p152, %p153
      %s156 = sadd.s32 %s155, 1
      %p159 = scmp.eq.s32.totalorder %s16, 1
      %p160 = scmp.ne.s32.totalorder %s155, %s157
      %p161 = scmp.eq.s32.totalorder %s16, 0
      %p162 = por %p160, %p161
      %p163 = scmp.ne.s32.totalorder %s155, %s157
      %p164 = scmp.eq.s32.totalorder %s21, 1
      %p165 = por %p163, %p164
      %p166 = scmp.ne.s32.totalorder %s157, %s158
      %p167 = scmp.eq.s32.totalorder %s21, 0
      %p168 = por %p166, %p167
      %p169 = scmp.ne.s32.totalorder %s157, %s158
      %p170 = scmp.eq.s32.totalorder %s22, 1
      %p171 = por %p169, %p170
      %p173 = scmp.ne.s32.totalorder %s158, %s172
      %p174 = scmp.eq.s32.totalorder %s22, 0
      %p175 = por %p173, %p174
      %s177 = sadd.s32 %s176, 1
      %p180 = scmp.eq.s32.totalorder %s16, 1
      %p181 = scmp.ne.s32.totalorder %s176, %s178
      %p182 = scmp.eq.s32.totalorder %s16, 0
      %p183 = por %p181, %p182
      %p184 = scmp.ne.s32.totalorder %s176, %s178
      %p185 = scmp.eq.s32.totalorder %s21, 1
      %p186 = por %p184, %p185
      %p187 = scmp.ne.s32.totalorder %s178, %s179
      %p188 = scmp.eq.s32.totalorder %s21, 0
      %p189 = por %p187, %p188
      %p190 = scmp.ne.s32.totalorder %s178, %s179
      %p191 = scmp.eq.s32.totalorder %s22, 1
      %p192 = por %p190, %p191
      %p194 = scmp.ne.s32.totalorder %s179, %s193
      %p195 = scmp.eq.s32.totalorder %s22, 0
      %p196 = por %p194, %p195
      %s198 = sadd.s32 %s197, 1
      %p201 = scmp.eq.s32.totalorder %s16, 1
      %p202 = scmp.ne.s32.totalorder %s197, %s199
      %p203 = scmp.eq.s32.totalorder %s16, 0
      %p204 = por %p202, %p203
      %p205 = scmp.ne.s32.totalorder %s197, %s199
      %p206 = scmp.eq.s32.totalorder %s21, 1
      %p207 = por %p205, %p206
      %p208 = scmp.ne.s32.totalorder %s199, %s200
      %p209 = scmp.eq.s32.totalorder %s21, 0
      %p210 = por %p208, %p209
      %p211 = scmp.ne.s32.totalorder %s199, %s200
      %p212 = scmp.eq.s32.totalorder %s22, 1
      %p213 = por %p211, %p212
      %p215 = scmp.ne.s32.totalorder %s200, %s214
      %p216 = scmp.eq.s32.totalorder %s22, 0
      %p217 = por %p215, %p216
      %s218 = ssub.s32 %s16, %s23
      %p219 = scmp.eq.s32.totalorder %s218, 0
      %s221 = sadd.s32 %s220, 1
      %s222 = scalar_select %p219, %s220, %s221
      %p225 = pneg %p219
      %p226 = scmp.eq.s32.totalorder %s16, 1
      %p227 = por %p225, %p226
      %p228 = scmp.ne.s32.totalorder %s220, %s223
      %p229 = scmp.eq.s32.totalorder %s16, 0
      %p230 = por %p228, %p229
      %p231 = scmp.ne.s32.totalorder %s220, %s223
      %p232 = scmp.eq.s32.totalorder %s21, 1
      %p233 = por %p231, %p232
      %p234 = scmp.ne.s32.totalorder %s223, %s224
      %p235 = scmp.eq.s32.totalorder %s21, 0
      %p236 = por %p234, %p235
      %p237 = scmp.ne.s32.totalorder %s223, %s224
      %p238 = scmp.eq.s32.totalorder %s22, 1
      %p239 = por %p237, %p238
      %p241 = scmp.ne.s32.totalorder %s224, %s240
      %p242 = scmp.eq.s32.totalorder %s22, 0
      %p243 = por %p241, %p242
      %p244 = scmp.le.s32.totalorder 1, %s16
      %p245 = scmp.lt.s32.totalorder %s16, 3
      %p246 = pnand %p244, %p245
      %p247 = pneg %p246
      // Predicated region
      $region9: #{convnet_forward.1} parent=5 // pred_check
        _
      $region10: #{convnet_forward.1} parent=5 // pred_check_branch
        %249 = sbr.rel (%p246) target = $region12
      $region11: #{convnet_forward.1} parent=5 // pred_region
        %s250 = ssub.s32 %s16, 1
        // Predicated region
        $region13: #{convnet_forward.1} parent=11 // pred_check
          %p251 = pneg %p63
        $region14: #{convnet_forward.1} parent=11 // pred_check_branch
          %253 = sbr.rel (%p251) target = $region16
        $region15: #{convnet_forward.1} parent=11 // pred_region
          _
        $region16: #{convnet_forward.1} parent=11 // pred_fallthru
          _
        // Predicated region
        $region17: #{convnet_forward.1} parent=11 // pred_check
          %p254 = pneg %p84
        $region18: #{convnet_forward.1} parent=11 // pred_check_branch
          %256 = sbr.rel (%p254) target = $region20
        $region19: #{convnet_forward.1} parent=11 // pred_region
          _
        $region20: #{convnet_forward.1} parent=11 // pred_fallthru
          _
        // Predicated region
        $region21: #{convnet_forward.1} parent=11 // pred_check
          %p257 = pneg %p105
        $region22: #{convnet_forward.1} parent=11 // pred_check_branch
          %259 = sbr.rel (%p257) target = $region24
        $region23: #{convnet_forward.1} parent=11 // pred_region
          _
        $region24: #{convnet_forward.1} parent=11 // pred_fallthru
          _
        // Predicated region
        $region25: #{convnet_forward.1} parent=11 // pred_check
          %p260 = pneg %p126
        $region26: #{convnet_forward.1} parent=11 // pred_check_branch
          %262 = sbr.rel (%p260) target = $region28
        $region27: #{convnet_forward.1} parent=11 // pred_region
          %s264 = ssub.s32 2048, 2048
          %265 = vsyncadd [#allocation6], %s264
          %s266 = sshll.u32 [#allocation5], 4
          %s267 = int_to_ptr.vmem [resolvable:$true] %s266
          %272 = dma.hbm_to_vmem [thread:$0]  %s4, 2048, %s267, [#allocation6], 128, 128, 8
        $region28: #{convnet_forward.1} parent=11 // pred_fallthru
          _
        // Predicated region
        $region29: #{convnet_forward.1} parent=11 // pred_check
          %p273 = pneg %p147
        $region30: #{convnet_forward.1} parent=11 // pred_check_branch
          %275 = sbr.rel (%p273) target = $region32
        $region31: #{convnet_forward.1} parent=11 // pred_region
          _
        $region32: #{convnet_forward.1} parent=11 // pred_fallthru
          _
        // Predicated region
        $region33: #{convnet_forward.1} parent=11 // pred_check
          %p276 = pneg %p168
        $region34: #{convnet_forward.1} parent=11 // pred_check_branch
          %278 = sbr.rel (%p276) target = $region36
        $region35: #{convnet_forward.1} parent=11 // pred_region
          _
        $region36: #{convnet_forward.1} parent=11 // pred_fallthru
          _
        // Predicated region
        $region37: #{convnet_forward.1} parent=11 // pred_check
          %p279 = pneg %p189
        $region38: #{convnet_forward.1} parent=11 // pred_check_branch
          %281 = sbr.rel (%p279) target = $region40
        $region39: #{convnet_forward.1} parent=11 // pred_region
          _
        $region40: #{convnet_forward.1} parent=11 // pred_fallthru
          _
        // Predicated region
        $region41: #{convnet_forward.1} parent=11 // pred_check
          %p282 = pneg %p210
        $region42: #{convnet_forward.1} parent=11 // pred_check_branch
          %284 = sbr.rel (%p282) target = $region44
        $region43: #{convnet_forward.1} parent=11 // pred_region
          _
        $region44: #{convnet_forward.1} parent=11 // pred_fallthru
          _
      $region12: #{convnet_forward.1} parent=5 // pred_fallthru
        _
      %p285 = scmp.lt.s32.totalorder %s16, 2
      // Predicated region
      $region45: #{convnet_forward.1} parent=5 // pred_check
        %p286 = pneg %p285
      $region46: #{convnet_forward.1} parent=5 // pred_check_branch
        %288 = sbr.rel (%p286) target = $region48
      $region47: #{convnet_forward.1} parent=5 // pred_region
        // Predicated region
        $region49: #{convnet_forward.1} parent=47 // pred_check
          %p289 = pneg %p36
        $region50: #{convnet_forward.1} parent=47 // pred_check_branch
          %291 = sbr.rel (%p289) target = $region52
        $region51: #{convnet_forward.1} parent=47 // pred_region
          %p292 = scmp.lt.s32.totalorder %s16, 1
          %s293 = scalar_select %p292, %s16, 1
          %s294 = smul.addr %s293, 4
          %s295 = smul.addr %s294, 4
          %s296 = scalar_lea.vmem %s0, %s295
        $region52: #{convnet_forward.1} parent=47 // pred_fallthru
          _
      $region48: #{convnet_forward.1} parent=5 // pred_fallthru
        _
      %p297 = scmp.le.s32.totalorder 1, %s16
      %p298 = scmp.lt.s32.totalorder %s16, 3
      %p299 = pnand %p297, %p298
      %p300 = pneg %p299
      // Predicated region
      $region53: #{convnet_forward.1} parent=5 // pred_check
        _
      $region54: #{convnet_forward.1} parent=5 // pred_check_branch
        %302 = sbr.rel (%p299) target = $region56
      $region55: #{convnet_forward.1} parent=5 // pred_region
        %s303 = ssub.s32 %s16, 1
        // Predicated region
        $region57: #{convnet_forward.1} parent=55 // pred_check
          %p304 = pneg %p126
        $region58: #{convnet_forward.1} parent=55 // pred_check_branch
          %306 = sbr.rel (%p304) target = $region60
        $region59: #{convnet_forward.1} parent=55 // pred_region
          %307 = dma.done [#allocation6], 2048
        $region60: #{convnet_forward.1} parent=55 // pred_fallthru
          _
        %p308 = scmp.lt.s32.totalorder %s21, 1
        %s309 = scalar_select %p308, %s21, 1
        %s310 = smul.addr %s309, 4
        %s311 = smul.addr %s310, 4
        %s312 = scalar_lea.vmem %s0, %s311
        %p313 = pneg %p42
        %p314 = pneg %p39
        %p315 = pneg %p63
        %p316 = pneg %p60
        %p317 = pneg %p84
        %p318 = pneg %p81
        %p319 = pneg %p105
        %p320 = pneg %p102
        %p321 = pneg %p126
        %p322 = pneg %p123
        %p323 = pneg %p147
        %p324 = pneg %p144
        %p325 = pneg %p168
        %p326 = pneg %p165
        %p327 = pneg %p189
        %p328 = pneg %p186
        %p329 = pneg %p210
        %p330 = pneg %p207
        %p331 = pneg %p236
        %p332 = pneg %p233
        %p333 = scmp.lt.s32.totalorder %s21, 1
        %s334 = scalar_select %p333, %s21, 1
        %s335 = smul.addr %s334, 16
        %s336 = smul.addr %s335, 8
        %s337 = scalar_lea.vmem %s9, %s336
        %p338 = scmp.lt.s32.totalorder %s21, 1
        %s339 = scalar_select %p338, %s21, 1
        %s340 = smul.addr %s339, 4
        %s341 = smul.addr %s340, 4
        %s342 = scalar_lea.vmem %s0, %s341
        %p343 = scmp.lt.s32.totalorder %s21, 1
        %s344 = scalar_select %p343, %s21, 1
        %s345 = smul.addr %s344, 16
        %s346 = smul.addr %s345, 8
        %s347 = scalar_lea.vmem %s9, %s346
        %v349 = vld [vmem:[%s342] sm:$0xff]
        %v350 = vld [vmem:[%s342 + $0x8] sm:$0xff]
        %353 = vrot.lane.b32.xlu0 %v349, 16
        %v354 = vpop.permute.xlu0 %353
        %355 = vrot.lane.b32.xlu0 %v350, 16
        %v356 = vpop.permute.xlu0 %355
        %v357 = vrot.slane %v354, 4
        %v358 = vrot.slane %v356, 4
        %vm359 = vcmask 130048
        %v360 = vsel %vm359, %v357, %v354
        %vm361 = vcmask 1043456
        %v362 = vsel %vm361, %v357, %v358
        %v363 = vsel %vm359, %v362, %v356
        %vm366 = vcmask 1043584
        %vm367 = vcmask 1047556
        %vm368 = vmor %vm367, %vm366
        %369 = vst.msk [vmem:[#allocation2] sm:$0xff] %vm368, %v360
        %370 = vst [vmem:[#allocation2 + $0x8] sm:$0xff] %v363
        %vm371 = vcmask 125952
        %372 = vst.msk [vmem:[#allocation2] sm:$0xf] %vm371, 0
        %373 = vst [vmem:[#allocation2 + $0x10] sm:$0xff] %v349
        %374 = vst [vmem:[#allocation2 + $0x18] sm:$0xff] %v350
        %375 = vrot.lane.b32.xlu0 %v349, 112
        %v376 = vpop.permute.xlu0 %375
        %377 = vrot.lane.b32.xlu0 %v350, 112
        %v378 = vpop.permute.xlu0 %377
        %v379 = vrot.slane %v376, 4
        %v380 = vrot.slane %v378, 4
        %v381 = vsel %vm361, %v379, %v380
        %vm382 = vcmask 916480
        %v383 = vsel %vm382, %v376, %v381
        %v384 = vsel %vm382, %v378, %v380
        %387 = vst [vmem:[#allocation2 + $0x20] sm:$0xff] %v383
        %vm388 = vcmask 1043456
        %vm389 = vcmask 916484
        %vm390 = vmor %vm389, %vm388
        %391 = vst.msk [vmem:[#allocation2 + $0x28] sm:$0xff] %vm390, %v384
        %vm392 = vcmask 1044352
        %393 = vst.msk [vmem:[#allocation2 + $0x2c] sm:$0xf] %vm392, 0
        %v394 = vld [vmem:[%s6] sm:$0xff]
        %v395 = vld [vmem:[%s1] sm:$0xf]
        %v396 = vld [vmem:[#allocation2] sm:$0xff]
        %v397 = vld [vmem:[#allocation2 + $0x8] sm:$0xff]
        %v398 = vld [vmem:[#allocation2 + $0x10] sm:$0xff]
        %v399 = vld [vmem:[#allocation2 + $0x18] sm:$0xff]
        %v400 = vld [vmem:[#allocation2 + $0x20] sm:$0xff]
        %v401 = vld [vmem:[#allocation2 + $0x28] sm:$0xff]
        %403 = vset.pattern.permute.xlu0 0
        %404 = vperm.xlu0 %403, %v394
        %v405 = vpop.permute.xlu0 %404
        %v413 = vunpack.c.l.b16 %v396
        %v414 = vunpack.c.h.b16 %v396
        %v415 = vunpack.c.l.b16 %v397
        %v416 = vunpack.c.h.b16 %v397
        %v417 = vunpack.c.l.b16 %v398
        %v418 = vunpack.c.h.b16 %v398
        %v419 = vunpack.c.l.b16 %v399
        %v420 = vunpack.c.h.b16 %v399
        %v421 = vunpack.c.l.b16 %v400
        %v422 = vunpack.c.h.b16 %v400
        %v423 = vunpack.c.l.b16 %v401
        %v424 = vunpack.c.h.b16 %v401
        %v425 = vpack.c.b16 %v417, %v413
        %v426 = vpack.c.b16 %v418, %v414
        %v427 = vpack.c.b16 %v419, %v415
        %v428 = vpack.c.b16 %v420, %v416
        %v429 = vpack.c.b16 %v421, %v421
        %v430 = vpack.c.b16 %v422, %v422
        %v431 = vpack.c.b16 %v423, %v423
        %v432 = vpack.c.b16 %v424, %v424
        %vm437 = vcmask 195584
        %v439 = vsel %vm437, %v395, 0
        %v442 = vsel %vm388, %v429, 0
        %v445 = vsel %vm388, %v430, 0
        %v448 = vsel %vm388, %v431, 0
        %v451 = vsel %vm388, %v432, 0
        %453 = vmatprep.subr.bf16.mxu0 0
        %454 = vmatpush1.bf16.msra.mxu0 0
        %455 = vmatprep.subr.bf16.mxu0 0
        %456 = vmatpush1.bf16.msra.mxu0 0
        %457 = vmatprep.subr.bf16.mxu0 0
        %458 = vmatpush1.bf16.msra.mxu0 0
        %459 = vmatprep.subr.bf16.mxu0 0
        %460 = vmatpush1.bf16.msra.mxu0 0
        %461 = vmatprep.subr.bf16.mxu0 0
        %462 = vmatpush1.bf16.msra.mxu0 0
        %463 = vmatprep.subr.bf16.mxu0 0
        %464 = vmatpush1.bf16.msra.mxu0 0
        %465 = vmatprep.subr.bf16.mxu0 %v445
        %466 = vmatpush1.bf16.msra.mxu0 %v442
        %467 = vmatprep.subr.bf16.mxu0 %v426
        %468 = vmatpush1.bf16.msra.mxu0 %v425
        %469 = vmatprep.subr.bf16.mxu0 0
        %470 = vmatpush2.bf16.msra.mxu0 0
        %471 = vmatprep.subr.bf16.mxu0 0
        %472 = vmatpush2.bf16.msra.mxu0 0
        %473 = vmatprep.subr.bf16.mxu0 0
        %474 = vmatpush2.bf16.msra.mxu0 0
        %475 = vmatprep.subr.bf16.mxu0 0
        %476 = vmatpush2.bf16.msra.mxu0 0
        %477 = vmatprep.subr.bf16.mxu0 0
        %478 = vmatpush2.bf16.msra.mxu0 0
        %479 = vmatprep.subr.bf16.mxu0 0
        %480 = vmatpush2.bf16.msra.mxu0 0
        %481 = vmatprep.subr.bf16.mxu0 0
        %482 = vmatpush2.bf16.msra.mxu0 0
        %483 = vmatprep.subr.bf16.mxu0 0
        %484 = vmatpush2.bf16.msra.mxu0 0
        %485 = vmatprep.mubr.bf16.mxu0 0
        %486 = vmatmul.mubr.bf16.gmra.mxu0 %v439
        %v487 = vpop.f32.mrf.mxu0
        %v488 = vadd.f32 %v405, %v487
        %v489 = vpop.f32.mrf.mxu0
        %v490 = vadd.f32 %v405, %v489
        %v491 = vpop.f32.mrf.mxu0
        %v492 = vpop.f32.mrf.mxu0
        %493 = vdwg.mxu0
        %494 = vmatprep.subr.bf16.mxu0 0
        %495 = vmatpush1.bf16.msra.mxu0 0
        %496 = vmatprep.subr.bf16.mxu0 0
        %497 = vmatpush1.bf16.msra.mxu0 0
        %498 = vmatprep.subr.bf16.mxu0 0
        %499 = vmatpush1.bf16.msra.mxu0 0
        %500 = vmatprep.subr.bf16.mxu0 0
        %501 = vmatpush1.bf16.msra.mxu0 0
        %502 = vmatprep.subr.bf16.mxu0 0
        %503 = vmatpush1.bf16.msra.mxu0 0
        %504 = vmatprep.subr.bf16.mxu0 0
        %505 = vmatpush1.bf16.msra.mxu0 0
        %506 = vmatprep.subr.bf16.mxu0 %v451
        %507 = vmatpush1.bf16.msra.mxu0 %v448
        %508 = vmatprep.subr.bf16.mxu0 %v428
        %509 = vmatpush1.bf16.msra.mxu0 %v427
        %510 = vmatprep.subr.bf16.mxu0 0
        %511 = vmatpush2.bf16.msra.mxu0 0
        %512 = vmatprep.subr.bf16.mxu0 0
        %513 = vmatpush2.bf16.msra.mxu0 0
        %514 = vmatprep.subr.bf16.mxu0 0
        %515 = vmatpush2.bf16.msra.mxu0 0
        %516 = vmatprep.subr.bf16.mxu0 0
        %517 = vmatpush2.bf16.msra.mxu0 0
        %518 = vmatprep.subr.bf16.mxu0 0
        %519 = vmatpush2.bf16.msra.mxu0 0
        %520 = vmatprep.subr.bf16.mxu0 0
        %521 = vmatpush2.bf16.msra.mxu0 0
        %522 = vmatprep.subr.bf16.mxu0 0
        %523 = vmatpush2.bf16.msra.mxu0 0
        %524 = vmatprep.subr.bf16.mxu0 0
        %525 = vmatpush2.bf16.msra.mxu0 0
        %526 = vmatprep.mubr.bf16.mxu0 0
        %527 = vmatmul.mubr.bf16.gmra.mxu0 %v439
        %v528 = vpop.f32.mrf.mxu0
        %v529 = vadd.f32 %v405, %v528
        %v530 = vpop.f32.mrf.mxu0
        %v531 = vadd.f32 %v405, %v530
        %v532 = vpop.f32.mrf.mxu0
        %v533 = vpop.f32.mrf.mxu0
        %534 = vdwg.mxu0
        %v535 = vmax.f32 %v488, 0.0
        %v536 = vmax.f32 %v490, 0.0
        %v537 = vmax.f32 %v529, 0.0
        %v538 = vmax.f32 %v531, 0.0
        %v539 = vpack.c.bf16 %v535, %v535
        %v540 = vpack.c.bf16 %v536, %v536
        %v541 = vpack.c.bf16 %v537, %v537
        %v542 = vpack.c.bf16 %v538, %v538
        %v547 = vunpack.c.l.b16 %v539
        %v548 = vunpack.c.l.b16 %v540
        %v549 = vunpack.c.l.b16 %v541
        %v550 = vunpack.c.l.b16 %v542
        %v551 = vpack.c.b16 %v548, %v547
        %v552 = vpack.c.b16 %v550, %v549
        %553 = vrot.lane.b32.xlu0 %v551, 16
        %v554 = vpop.permute.xlu0 %553
        %555 = vrot.lane.b32.xlu0 %v552, 16
        %v556 = vpop.permute.xlu0 %555
        %v557 = vrot.slane %v554, 4
        %v558 = vrot.slane %v556, 4
        %v559 = vsel %vm359, %v557, %v554
        %v560 = vsel %vm361, %v557, %v558
        %v561 = vsel %vm359, %v560, %v556
        %564 = vst.msk [vmem:[#allocation3] sm:$0xff] %vm368, %v559
        %565 = vst [vmem:[#allocation3 + $0x8] sm:$0xff] %v561
        %566 = vst.msk [vmem:[#allocation3] sm:$0xf] %vm371, 0
        %569 = vst [vmem:[#allocation3 + $0x10] sm:$0xff] %v551
        %570 = vst [vmem:[#allocation3 + $0x18] sm:$0xff] %v552
        %571 = vrot.lane.b32.xlu0 %v551, 112
        %v572 = vpop.permute.xlu0 %571
        %573 = vrot.lane.b32.xlu0 %v552, 112
        %v574 = vpop.permute.xlu0 %573
        %v575 = vrot.slane %v572, 4
        %v576 = vrot.slane %v574, 4
        %v577 = vsel %vm361, %v575, %v576
        %v578 = vsel %vm382, %v572, %v577
        %v579 = vsel %vm382, %v574, %v576
        %582 = vst [vmem:[#allocation3 + $0x20] sm:$0xff] %v578
        %583 = vst.msk [vmem:[#allocation3 + $0x28] sm:$0xff] %vm390, %v579
        %584 = vst.msk [vmem:[#allocation3 + $0x2c] sm:$0xf] %vm392, 0
        %v585 = vld [vmem:[%s6 + $0x8] sm:$0xff]
        %v586 = vld [vmem:[%s6 + $0x10] sm:$0xff]
        %v587 = vld [vmem:[%s2] sm:$0xf]
        %v588 = vld [vmem:[%s2 + $0x4] sm:$0xf]
        %v589 = vld [vmem:[#allocation3] sm:$0xff]
        %v590 = vld [vmem:[#allocation3 + $0x8] sm:$0xff]
        %v591 = vld [vmem:[#allocation3 + $0x10] sm:$0xff]
        %v592 = vld [vmem:[#allocation3 + $0x18] sm:$0xff]
        %v593 = vld [vmem:[#allocation3 + $0x20] sm:$0xff]
        %v594 = vld [vmem:[#allocation3 + $0x28] sm:$0xff]
        %596 = vset.pattern.permute.xlu0 0
        %597 = vperm.xlu0 %596, %v585
        %v598 = vpop.permute.xlu0 %597
        %601 = vset.pattern.permute.xlu0 0
        %602 = vperm.xlu0 %601, %v586
        %v603 = vpop.permute.xlu0 %602
        %v607 = vunpack.c.l.b16 %v587
        %v608 = vunpack.c.l.b16 %v588
        %v609 = vpack.c.b16 %v608, %v607
        %v616 = vunpack.c.l.b16 %v589
        %v617 = vunpack.c.h.b16 %v589
        %v618 = vunpack.c.l.b16 %v590
        %v619 = vunpack.c.h.b16 %v590
        %v620 = vunpack.c.l.b16 %v591
        %v621 = vunpack.c.h.b16 %v591
        %v622 = vunpack.c.l.b16 %v592
        %v623 = vunpack.c.h.b16 %v592
        %v624 = vunpack.c.l.b16 %v593
        %v625 = vunpack.c.h.b16 %v593
        %v626 = vunpack.c.l.b16 %v594
        %v627 = vunpack.c.h.b16 %v594
        %v628 = vpack.c.b16 %v620, %v616
        %v629 = vpack.c.b16 %v621, %v617
        %v630 = vpack.c.b16 %v622, %v618
        %v631 = vpack.c.b16 %v623, %v619
        %v632 = vpack.c.b16 %v624, %v624
        %v633 = vpack.c.b16 %v625, %v625
        %v634 = vpack.c.b16 %v626, %v626
        %v635 = vpack.c.b16 %v627, %v627
        %v641 = vsel %vm437, %v609, 0
        %v644 = vsel %vm388, %v632, 0
        %v647 = vsel %vm388, %v633, 0
        %v650 = vsel %vm388, %v634, 0
        %v653 = vsel %vm388, %v635, 0
        %655 = vmatprep.subr.bf16.mxu0 0
        %656 = vmatpush1.bf16.msra.mxu0 0
        %657 = vmatprep.subr.bf16.mxu0 0
        %658 = vmatpush1.bf16.msra.mxu0 0
        %659 = vmatprep.subr.bf16.mxu0 0
        %660 = vmatpush1.bf16.msra.mxu0 0
        %661 = vmatprep.subr.bf16.mxu0 0
        %662 = vmatpush1.bf16.msra.mxu0 0
        %663 = vmatprep.subr.bf16.mxu0 0
        %664 = vmatpush1.bf16.msra.mxu0 0
        %665 = vmatprep.subr.bf16.mxu0 0
        %666 = vmatpush1.bf16.msra.mxu0 0
        %667 = vmatprep.subr.bf16.mxu0 %v647
        %668 = vmatpush1.bf16.msra.mxu0 %v644
        %669 = vmatprep.subr.bf16.mxu0 %v629
        %670 = vmatpush1.bf16.msra.mxu0 %v628
        %671 = vmatprep.subr.bf16.mxu0 0
        %672 = vmatpush2.bf16.msra.mxu0 0
        %673 = vmatprep.subr.bf16.mxu0 0
        %674 = vmatpush2.bf16.msra.mxu0 0
        %675 = vmatprep.subr.bf16.mxu0 0
        %676 = vmatpush2.bf16.msra.mxu0 0
        %677 = vmatprep.subr.bf16.mxu0 0
        %678 = vmatpush2.bf16.msra.mxu0 0
        %679 = vmatprep.subr.bf16.mxu0 0
        %680 = vmatpush2.bf16.msra.mxu0 0
        %681 = vmatprep.subr.bf16.mxu0 0
        %682 = vmatpush2.bf16.msra.mxu0 0
        %683 = vmatprep.subr.bf16.mxu0 0
        %684 = vmatpush2.bf16.msra.mxu0 0
        %685 = vmatprep.subr.bf16.mxu0 0
        %686 = vmatpush2.bf16.msra.mxu0 0
        %687 = vmatprep.mubr.bf16.mxu0 0
        %688 = vmatmul.mubr.bf16.gmra.mxu0 %v641
        %v689 = vpop.f32.mrf.mxu0
        %v690 = vadd.f32 %v598, %v689
        %v691 = vpop.f32.mrf.mxu0
        %v692 = vadd.f32 %v598, %v691
        %v693 = vpop.f32.mrf.mxu0
        %v694 = vadd.f32 %v603, %v693
        %v695 = vpop.f32.mrf.mxu0
        %v696 = vadd.f32 %v603, %v695
        %697 = vdwg.mxu0
        %698 = vmatprep.subr.bf16.mxu0 0
        %699 = vmatpush1.bf16.msra.mxu0 0
        %700 = vmatprep.subr.bf16.mxu0 0
        %701 = vmatpush1.bf16.msra.mxu0 0
        %702 = vmatprep.subr.bf16.mxu0 0
        %703 = vmatpush1.bf16.msra.mxu0 0
        %704 = vmatprep.subr.bf16.mxu0 0
        %705 = vmatpush1.bf16.msra.mxu0 0
        %706 = vmatprep.subr.bf16.mxu0 0
        %707 = vmatpush1.bf16.msra.mxu0 0
        %708 = vmatprep.subr.bf16.mxu0 0
        %709 = vmatpush1.bf16.msra.mxu0 0
        %710 = vmatprep.subr.bf16.mxu0 %v653
        %711 = vmatpush1.bf16.msra.mxu0 %v650
        %712 = vmatprep.subr.bf16.mxu0 %v631
        %713 = vmatpush1.bf16.msra.mxu0 %v630
        %714 = vmatprep.subr.bf16.mxu0 0
        %715 = vmatpush2.bf16.msra.mxu0 0
        %716 = vmatprep.subr.bf16.mxu0 0
        %717 = vmatpush2.bf16.msra.mxu0 0
        %718 = vmatprep.subr.bf16.mxu0 0
        %719 = vmatpush2.bf16.msra.mxu0 0
        %720 = vmatprep.subr.bf16.mxu0 0
        %721 = vmatpush2.bf16.msra.mxu0 0
        %722 = vmatprep.subr.bf16.mxu0 0
        %723 = vmatpush2.bf16.msra.mxu0 0
        %724 = vmatprep.subr.bf16.mxu0 0
        %725 = vmatpush2.bf16.msra.mxu0 0
        %726 = vmatprep.subr.bf16.mxu0 0
        %727 = vmatpush2.bf16.msra.mxu0 0
        %728 = vmatprep.subr.bf16.mxu0 0
        %729 = vmatpush2.bf16.msra.mxu0 0
        %730 = vmatprep.mubr.bf16.mxu0 0
        %731 = vmatmul.mubr.bf16.gmra.mxu0 %v641
        %v732 = vpop.f32.mrf.mxu0
        %v733 = vadd.f32 %v598, %v732
        %v734 = vpop.f32.mrf.mxu0
        %v735 = vadd.f32 %v598, %v734
        %v736 = vpop.f32.mrf.mxu0
        %v737 = vadd.f32 %v603, %v736
        %v738 = vpop.f32.mrf.mxu0
        %v739 = vadd.f32 %v603, %v738
        %740 = vdwg.mxu0
        %v741 = vmax.f32 %v690, 0.0
        %v742 = vmax.f32 %v692, 0.0
        %v743 = vmax.f32 %v733, 0.0
        %v744 = vmax.f32 %v735, 0.0
        %v745 = vmax.f32 %v694, 0.0
        %v746 = vmax.f32 %v696, 0.0
        %v747 = vmax.f32 %v737, 0.0
        %v748 = vmax.f32 %v739, 0.0
        %v749 = vpack.c.bf16 %v745, %v741
        %v750 = vpack.c.bf16 %v746, %v742
        %v751 = vpack.c.bf16 %v747, %v743
        %v752 = vpack.c.bf16 %v748, %v744
        %v753 = vld [vmem:[%s7] sm:$0xff]
        %v754 = vld [vmem:[%s7 + $0x8] sm:$0xff]
        %v755 = vld [vmem:[%s7 + $0x10] sm:$0xff]
        %v756 = vld [vmem:[%s7 + $0x18] sm:$0xff]
        %v757 = vld [vmem:[%s7 + $0x20] sm:$0xff]
        %v758 = vld [vmem:[%s7 + $0x28] sm:$0xff]
        %v759 = vld [vmem:[%s7 + $0x30] sm:$0xff]
        %v760 = vld [vmem:[%s7 + $0x38] sm:$0xff]
        %v761 = vld [vmem:[%s7 + $0x40] sm:$0xff]
        %v762 = vld [vmem:[%s7 + $0x48] sm:$0xff]
        %v763 = vld [vmem:[%s7 + $0x50] sm:$0xff]
        %v764 = vld [vmem:[%s7 + $0x58] sm:$0xff]
        %v765 = vld [vmem:[%s7 + $0x60] sm:$0xff]
        %v766 = vld [vmem:[%s7 + $0x68] sm:$0xff]
        %v767 = vld [vmem:[%s7 + $0x70] sm:$0xff]
        %v768 = vld [vmem:[%s7 + $0x78] sm:$0xff]
        %v769 = vld [vmem:[%s7 + $0x80] sm:$0xff]
        %v770 = vld [vmem:[%s7 + $0x88] sm:$0xff]
        %v771 = vld [vmem:[%s7 + $0x90] sm:$0xff]
        %v772 = vld [vmem:[%s7 + $0x98] sm:$0xff]
        %v773 = vld [vmem:[%s7 + $0xa0] sm:$0xff]
        %v774 = vld [vmem:[%s7 + $0xa8] sm:$0xff]
        %v775 = vld [vmem:[%s7 + $0xb0] sm:$0xff]
        %v776 = vld [vmem:[%s7 + $0xb8] sm:$0xff]
        %v777 = vld [vmem:[%s7 + $0xc0] sm:$0xff]
        %v778 = vld [vmem:[%s7 + $0xc8] sm:$0xff]
        %v779 = vld [vmem:[%s7 + $0xd0] sm:$0xff]
        %v780 = vld [vmem:[%s7 + $0xd8] sm:$0xff]
        %v781 = vld [vmem:[%s7 + $0xe0] sm:$0xff]
        %v782 = vld [vmem:[%s7 + $0xe8] sm:$0xff]
        %v783 = vld [vmem:[%s7 + $0xf0] sm:$0xff]
        %v784 = vld [vmem:[%s7 + $0xf8] sm:$0xff]
        %v785 = vld [vmem:[%s7 + $0x100] sm:$0xff]
        %v786 = vld [vmem:[%s7 + $0x108] sm:$0xff]
        %v787 = vld [vmem:[%s7 + $0x110] sm:$0xff]
        %v788 = vld [vmem:[%s7 + $0x118] sm:$0xff]
        %v789 = vld [vmem:[%s7 + $0x120] sm:$0xff]
        %v790 = vld [vmem:[%s7 + $0x128] sm:$0xff]
        %v791 = vld [vmem:[%s7 + $0x130] sm:$0xff]
        %v792 = vld [vmem:[%s7 + $0x138] sm:$0xff]
        %v793 = vld [vmem:[%s7 + $0x140] sm:$0xff]
        %v794 = vld [vmem:[%s7 + $0x148] sm:$0xff]
        %v795 = vld [vmem:[%s7 + $0x150] sm:$0xff]
        %v796 = vld [vmem:[%s7 + $0x158] sm:$0xff]
        %v797 = vld [vmem:[%s7 + $0x160] sm:$0xff]
        %v798 = vld [vmem:[%s7 + $0x168] sm:$0xff]
        %v799 = vld [vmem:[%s7 + $0x170] sm:$0xff]
        %v800 = vld [vmem:[%s7 + $0x178] sm:$0xff]
        %v801 = vld [vmem:[%s7 + $0x180] sm:$0xff]
        %v802 = vld [vmem:[%s7 + $0x188] sm:$0xff]
        %v803 = vld [vmem:[%s7 + $0x190] sm:$0xff]
        %v804 = vld [vmem:[%s7 + $0x198] sm:$0xff]
        %v805 = vld [vmem:[%s7 + $0x1a0] sm:$0xff]
        %v806 = vld [vmem:[%s7 + $0x1a8] sm:$0xff]
        %v807 = vld [vmem:[%s7 + $0x1b0] sm:$0xff]
        %v808 = vld [vmem:[%s7 + $0x1b8] sm:$0xff]
        %v809 = vld [vmem:[%s7 + $0x1c0] sm:$0xff]
        %v810 = vld [vmem:[%s7 + $0x1c8] sm:$0xff]
        %v811 = vld [vmem:[%s7 + $0x1d0] sm:$0xff]
        %v812 = vld [vmem:[%s7 + $0x1d8] sm:$0xff]
        %v813 = vld [vmem:[%s7 + $0x1e0] sm:$0xff]
        %v814 = vld [vmem:[%s7 + $0x1e8] sm:$0xff]
        %v815 = vld [vmem:[%s7 + $0x1f0] sm:$0xff]
        %v816 = vld [vmem:[%s7 + $0x1f8] sm:$0xff]
        %v817 = vld [vmem:[%s7 + $0x200] sm:$0xff]
        %v818 = vld [vmem:[%s7 + $0x208] sm:$0xff]
        %v819 = vld [vmem:[%s7 + $0x210] sm:$0xff]
        %v820 = vld [vmem:[%s7 + $0x218] sm:$0xff]
        %v821 = vld [vmem:[%s7 + $0x220] sm:$0xff]
        %v822 = vld [vmem:[%s7 + $0x228] sm:$0xff]
        %v823 = vld [vmem:[%s7 + $0x230] sm:$0xff]
        %v824 = vld [vmem:[%s7 + $0x238] sm:$0xff]
        %v825 = vld [vmem:[%s7 + $0x240] sm:$0xff]
        %v826 = vld [vmem:[%s7 + $0x248] sm:$0xff]
        %v827 = vld [vmem:[%s7 + $0x250] sm:$0xff]
        %v828 = vld [vmem:[%s7 + $0x258] sm:$0xff]
        %v829 = vld [vmem:[%s7 + $0x260] sm:$0xff]
        %v830 = vld [vmem:[%s7 + $0x268] sm:$0xff]
        %v831 = vld [vmem:[%s7 + $0x270] sm:$0xff]
        %v832 = vld [vmem:[%s7 + $0x278] sm:$0xff]
        %v833 = vld [vmem:[%s7 + $0x280] sm:$0xff]
        %v834 = vld [vmem:[%s7 + $0x288] sm:$0xff]
        %v835 = vld [vmem:[%s7 + $0x290] sm:$0xff]
        %v836 = vld [vmem:[%s7 + $0x298] sm:$0xff]
        %v837 = vld [vmem:[%s7 + $0x2a0] sm:$0xff]
        %v838 = vld [vmem:[%s7 + $0x2a8] sm:$0xff]
        %v839 = vld [vmem:[%s7 + $0x2b0] sm:$0xff]
        %v840 = vld [vmem:[%s7 + $0x2b8] sm:$0xff]
        %v841 = vld [vmem:[%s7 + $0x2c0] sm:$0xff]
        %v842 = vld [vmem:[%s7 + $0x2c8] sm:$0xff]
        %v843 = vld [vmem:[%s7 + $0x2d0] sm:$0xff]
        %v844 = vld [vmem:[%s7 + $0x2d8] sm:$0xff]
        %v845 = vld [vmem:[%s7 + $0x2e0] sm:$0xff]
        %v846 = vld [vmem:[%s7 + $0x2e8] sm:$0xff]
        %v847 = vld [vmem:[%s7 + $0x2f0] sm:$0xff]
        %v848 = vld [vmem:[%s7 + $0x2f8] sm:$0xff]
        %v849 = vld [vmem:[%s7 + $0x300] sm:$0xff]
        %v850 = vld [vmem:[%s7 + $0x308] sm:$0xff]
        %v851 = vld [vmem:[%s7 + $0x310] sm:$0xff]
        %v852 = vld [vmem:[%s7 + $0x318] sm:$0xff]
        %v853 = vld [vmem:[%s7 + $0x320] sm:$0xff]
        %v854 = vld [vmem:[%s7 + $0x328] sm:$0xff]
        %v855 = vld [vmem:[%s7 + $0x330] sm:$0xff]
        %v856 = vld [vmem:[%s7 + $0x338] sm:$0xff]
        %v857 = vld [vmem:[%s7 + $0x340] sm:$0xff]
        %v858 = vld [vmem:[%s7 + $0x348] sm:$0xff]
        %v859 = vld [vmem:[%s7 + $0x350] sm:$0xff]
        %v860 = vld [vmem:[%s7 + $0x358] sm:$0xff]
        %v861 = vld [vmem:[%s7 + $0x360] sm:$0xff]
        %v862 = vld [vmem:[%s7 + $0x368] sm:$0xff]
        %v863 = vld [vmem:[%s7 + $0x370] sm:$0xff]
        %v864 = vld [vmem:[%s7 + $0x378] sm:$0xff]
        %v865 = vld [vmem:[%s7 + $0x380] sm:$0xff]
        %v866 = vld [vmem:[%s7 + $0x388] sm:$0xff]
        %v867 = vld [vmem:[%s7 + $0x390] sm:$0xff]
        %v868 = vld [vmem:[%s7 + $0x398] sm:$0xff]
        %v869 = vld [vmem:[%s7 + $0x3a0] sm:$0xff]
        %v870 = vld [vmem:[%s7 + $0x3a8] sm:$0xff]
        %v871 = vld [vmem:[%s7 + $0x3b0] sm:$0xff]
        %v872 = vld [vmem:[%s7 + $0x3b8] sm:$0xff]
        %v873 = vld [vmem:[%s7 + $0x3c0] sm:$0xff]
        %v874 = vld [vmem:[%s7 + $0x3c8] sm:$0xff]
        %v875 = vld [vmem:[%s7 + $0x3d0] sm:$0xff]
        %v876 = vld [vmem:[%s7 + $0x3d8] sm:$0xff]
        %v877 = vld [vmem:[%s7 + $0x3e0] sm:$0xff]
        %v878 = vld [vmem:[%s7 + $0x3e8] sm:$0xff]
        %v879 = vld [vmem:[%s7 + $0x3f0] sm:$0xff]
        %v880 = vld [vmem:[%s7 + $0x3f8] sm:$0xff]
        %v1009 = vunpack.c.l.b16 %v753
        %v1010 = vunpack.c.h.b16 %v753
        %v1011 = vunpack.c.l.b16 %v754
        %v1012 = vunpack.c.h.b16 %v754
        %v1013 = vunpack.c.l.b16 %v755
        %v1014 = vunpack.c.h.b16 %v755
        %v1015 = vunpack.c.l.b16 %v756
        %v1016 = vunpack.c.h.b16 %v756
        %v1017 = vunpack.c.l.b16 %v757
        %v1018 = vunpack.c.h.b16 %v757
        %v1019 = vunpack.c.l.b16 %v758
        %v1020 = vunpack.c.h.b16 %v758
        %v1021 = vunpack.c.l.b16 %v759
        %v1022 = vunpack.c.h.b16 %v759
        %v1023 = vunpack.c.l.b16 %v760
        %v1024 = vunpack.c.h.b16 %v760
        %v1025 = vunpack.c.l.b16 %v761
        %v1026 = vunpack.c.h.b16 %v761
        %v1027 = vunpack.c.l.b16 %v762
        %v1028 = vunpack.c.h.b16 %v762
        %v1029 = vunpack.c.l.b16 %v763
        %v1030 = vunpack.c.h.b16 %v763
        %v1031 = vunpack.c.l.b16 %v764
        %v1032 = vunpack.c.h.b16 %v764
        %v1033 = vunpack.c.l.b16 %v765
        %v1034 = vunpack.c.h.b16 %v765
        %v1035 = vunpack.c.l.b16 %v766
        %v1036 = vunpack.c.h.b16 %v766
        %v1037 = vunpack.c.l.b16 %v767
        %v1038 = vunpack.c.h.b16 %v767
        %v1039 = vunpack.c.l.b16 %v768
        %v1040 = vunpack.c.h.b16 %v768
        %v1041 = vunpack.c.l.b16 %v769
        %v1042 = vunpack.c.h.b16 %v769
        %v1043 = vunpack.c.l.b16 %v770
        %v1044 = vunpack.c.h.b16 %v770
        %v1045 = vunpack.c.l.b16 %v771
        %v1046 = vunpack.c.h.b16 %v771
        %v1047 = vunpack.c.l.b16 %v772
        %v1048 = vunpack.c.h.b16 %v772
        %v1049 = vunpack.c.l.b16 %v773
        %v1050 = vunpack.c.h.b16 %v773
        %v1051 = vunpack.c.l.b16 %v774
        %v1052 = vunpack.c.h.b16 %v774
        %v1053 = vunpack.c.l.b16 %v775
        %v1054 = vunpack.c.h.b16 %v775
        %v1055 = vunpack.c.l.b16 %v776
        %v1056 = vunpack.c.h.b16 %v776
        %v1057 = vunpack.c.l.b16 %v777
        %v1058 = vunpack.c.h.b16 %v777
        %v1059 = vunpack.c.l.b16 %v778
        %v1060 = vunpack.c.h.b16 %v778
        %v1061 = vunpack.c.l.b16 %v779
        %v1062 = vunpack.c.h.b16 %v779
        %v1063 = vunpack.c.l.b16 %v780
        %v1064 = vunpack.c.h.b16 %v780
        %v1065 = vunpack.c.l.b16 %v781
        %v1066 = vunpack.c.h.b16 %v781
        %v1067 = vunpack.c.l.b16 %v782
        %v1068 = vunpack.c.h.b16 %v782
        %v1069 = vunpack.c.l.b16 %v783
        %v1070 = vunpack.c.h.b16 %v783
        %v1071 = vunpack.c.l.b16 %v784
        %v1072 = vunpack.c.h.b16 %v784
        %v1073 = vunpack.c.l.b16 %v785
        %v1074 = vunpack.c.h.b16 %v785
        %v1075 = vunpack.c.l.b16 %v786
        %v1076 = vunpack.c.h.b16 %v786
        %v1077 = vunpack.c.l.b16 %v787
        %v1078 = vunpack.c.h.b16 %v787
        %v1079 = vunpack.c.l.b16 %v788
        %v1080 = vunpack.c.h.b16 %v788
        %v1081 = vunpack.c.l.b16 %v789
        %v1082 = vunpack.c.h.b16 %v789
        %v1083 = vunpack.c.l.b16 %v790
        %v1084 = vunpack.c.h.b16 %v790
        %v1085 = vunpack.c.l.b16 %v791
        %v1086 = vunpack.c.h.b16 %v791
        %v1087 = vunpack.c.l.b16 %v792
        %v1088 = vunpack.c.h.b16 %v792
        %v1089 = vunpack.c.l.b16 %v793
        %v1090 = vunpack.c.h.b16 %v793
        %v1091 = vunpack.c.l.b16 %v794
        %v1092 = vunpack.c.h.b16 %v794
        %v1093 = vunpack.c.l.b16 %v795
        %v1094 = vunpack.c.h.b16 %v795
        %v1095 = vunpack.c.l.b16 %v796
        %v1096 = vunpack.c.h.b16 %v796
        %v1097 = vunpack.c.l.b16 %v797
        %v1098 = vunpack.c.h.b16 %v797
        %v1099 = vunpack.c.l.b16 %v798
        %v1100 = vunpack.c.h.b16 %v798
        %v1101 = vunpack.c.l.b16 %v799
        %v1102 = vunpack.c.h.b16 %v799
        %v1103 = vunpack.c.l.b16 %v800
        %v1104 = vunpack.c.h.b16 %v800
        %v1105 = vunpack.c.l.b16 %v801
        %v1106 = vunpack.c.h.b16 %v801
        %v1107 = vunpack.c.l.b16 %v802
        %v1108 = vunpack.c.h.b16 %v802
        %v1109 = vunpack.c.l.b16 %v803
        %v1110 = vunpack.c.h.b16 %v803
        %v1111 = vunpack.c.l.b16 %v804
        %v1112 = vunpack.c.h.b16 %v804
        %v1113 = vunpack.c.l.b16 %v805
        %v1114 = vunpack.c.h.b16 %v805
        %v1115 = vunpack.c.l.b16 %v806
        %v1116 = vunpack.c.h.b16 %v806
        %v1117 = vunpack.c.l.b16 %v807
        %v1118 = vunpack.c.h.b16 %v807
        %v1119 = vunpack.c.l.b16 %v808
        %v1120 = vunpack.c.h.b16 %v808
        %v1121 = vunpack.c.l.b16 %v809
        %v1122 = vunpack.c.h.b16 %v809
        %v1123 = vunpack.c.l.b16 %v810
        %v1124 = vunpack.c.h.b16 %v810
        %v1125 = vunpack.c.l.b16 %v811
        %v1126 = vunpack.c.h.b16 %v811
        %v1127 = vunpack.c.l.b16 %v812
        %v1128 = vunpack.c.h.b16 %v812
        %v1129 = vunpack.c.l.b16 %v813
        %v1130 = vunpack.c.h.b16 %v813
        %v1131 = vunpack.c.l.b16 %v814
        %v1132 = vunpack.c.h.b16 %v814
        %v1133 = vunpack.c.l.b16 %v815
        %v1134 = vunpack.c.h.b16 %v815
        %v1135 = vunpack.c.l.b16 %v816
        %v1136 = vunpack.c.h.b16 %v816
        %v1137 = vunpack.c.l.b16 %v817
        %v1138 = vunpack.c.h.b16 %v817
        %v1139 = vunpack.c.l.b16 %v818
        %v1140 = vunpack.c.h.b16 %v818
        %v1141 = vunpack.c.l.b16 %v819
        %v1142 = vunpack.c.h.b16 %v819
        %v1143 = vunpack.c.l.b16 %v820
        %v1144 = vunpack.c.h.b16 %v820
        %v1145 = vunpack.c.l.b16 %v821
        %v1146 = vunpack.c.h.b16 %v821
        %v1147 = vunpack.c.l.b16 %v822
        %v1148 = vunpack.c.h.b16 %v822
        %v1149 = vunpack.c.l.b16 %v823
        %v1150 = vunpack.c.h.b16 %v823
        %v1151 = vunpack.c.l.b16 %v824
        %v1152 = vunpack.c.h.b16 %v824
        %v1153 = vunpack.c.l.b16 %v825
        %v1154 = vunpack.c.h.b16 %v825
        %v1155 = vunpack.c.l.b16 %v826
        %v1156 = vunpack.c.h.b16 %v826
        %v1157 = vunpack.c.l.b16 %v827
        %v1158 = vunpack.c.h.b16 %v827
        %v1159 = vunpack.c.l.b16 %v828
        %v1160 = vunpack.c.h.b16 %v828
        %v1161 = vunpack.c.l.b16 %v829
        %v1162 = vunpack.c.h.b16 %v829
        %v1163 = vunpack.c.l.b16 %v830
        %v1164 = vunpack.c.h.b16 %v830
        %v1165 = vunpack.c.l.b16 %v831
        %v1166 = vunpack.c.h.b16 %v831
        %v1167 = vunpack.c.l.b16 %v832
        %v1168 = vunpack.c.h.b16 %v832
        %v1169 = vunpack.c.l.b16 %v833
        %v1170 = vunpack.c.h.b16 %v833
        %v1171 = vunpack.c.l.b16 %v834
        %v1172 = vunpack.c.h.b16 %v834
        %v1173 = vunpack.c.l.b16 %v835
        %v1174 = vunpack.c.h.b16 %v835
        %v1175 = vunpack.c.l.b16 %v836
        %v1176 = vunpack.c.h.b16 %v836
        %v1177 = vunpack.c.l.b16 %v837
        %v1178 = vunpack.c.h.b16 %v837
        %v1179 = vunpack.c.l.b16 %v838
        %v1180 = vunpack.c.h.b16 %v838
        %v1181 = vunpack.c.l.b16 %v839
        %v1182 = vunpack.c.h.b16 %v839
        %v1183 = vunpack.c.l.b16 %v840
        %v1184 = vunpack.c.h.b16 %v840
        %v1185 = vunpack.c.l.b16 %v841
        %v1186 = vunpack.c.h.b16 %v841
        %v1187 = vunpack.c.l.b16 %v842
        %v1188 = vunpack.c.h.b16 %v842
        %v1189 = vunpack.c.l.b16 %v843
        %v1190 = vunpack.c.h.b16 %v843
        %v1191 = vunpack.c.l.b16 %v844
        %v1192 = vunpack.c.h.b16 %v844
        %v1193 = vunpack.c.l.b16 %v845
        %v1194 = vunpack.c.h.b16 %v845
        %v1195 = vunpack.c.l.b16 %v846
        %v1196 = vunpack.c.h.b16 %v846
        %v1197 = vunpack.c.l.b16 %v847
        %v1198 = vunpack.c.h.b16 %v847
        %v1199 = vunpack.c.l.b16 %v848
        %v1200 = vunpack.c.h.b16 %v848
        %v1201 = vunpack.c.l.b16 %v849
        %v1202 = vunpack.c.h.b16 %v849
        %v1203 = vunpack.c.l.b16 %v850
        %v1204 = vunpack.c.h.b16 %v850
        %v1205 = vunpack.c.l.b16 %v851
        %v1206 = vunpack.c.h.b16 %v851
        %v1207 = vunpack.c.l.b16 %v852
        %v1208 = vunpack.c.h.b16 %v852
        %v1209 = vunpack.c.l.b16 %v853
        %v1210 = vunpack.c.h.b16 %v853
        %v1211 = vunpack.c.l.b16 %v854
        %v1212 = vunpack.c.h.b16 %v854
        %v1213 = vunpack.c.l.b16 %v855
        %v1214 = vunpack.c.h.b16 %v855
        %v1215 = vunpack.c.l.b16 %v856
        %v1216 = vunpack.c.h.b16 %v856
        %v1217 = vunpack.c.l.b16 %v857
        %v1218 = vunpack.c.h.b16 %v857
        %v1219 = vunpack.c.l.b16 %v858
        %v1220 = vunpack.c.h.b16 %v858
        %v1221 = vunpack.c.l.b16 %v859
        %v1222 = vunpack.c.h.b16 %v859
        %v1223 = vunpack.c.l.b16 %v860
        %v1224 = vunpack.c.h.b16 %v860
        %v1225 = vunpack.c.l.b16 %v861
        %v1226 = vunpack.c.h.b16 %v861
        %v1227 = vunpack.c.l.b16 %v862
        %v1228 = vunpack.c.h.b16 %v862
        %v1229 = vunpack.c.l.b16 %v863
        %v1230 = vunpack.c.h.b16 %v863
        %v1231 = vunpack.c.l.b16 %v864
        %v1232 = vunpack.c.h.b16 %v864
        %v1233 = vunpack.c.l.b16 %v865
        %v1234 = vunpack.c.h.b16 %v865
        %v1235 = vunpack.c.l.b16 %v866
        %v1236 = vunpack.c.h.b16 %v866
        %v1237 = vunpack.c.l.b16 %v867
        %v1238 = vunpack.c.h.b16 %v867
        %v1239 = vunpack.c.l.b16 %v868
        %v1240 = vunpack.c.h.b16 %v868
        %v1241 = vunpack.c.l.b16 %v869
        %v1242 = vunpack.c.h.b16 %v869
        %v1243 = vunpack.c.l.b16 %v870
        %v1244 = vunpack.c.h.b16 %v870
        %v1245 = vunpack.c.l.b16 %v871
        %v1246 = vunpack.c.h.b16 %v871
        %v1247 = vunpack.c.l.b16 %v872
        %v1248 = vunpack.c.h.b16 %v872
        %v1249 = vunpack.c.l.b16 %v873
        %v1250 = vunpack.c.h.b16 %v873
        %v1251 = vunpack.c.l.b16 %v874
        %v1252 = vunpack.c.h.b16 %v874
        %v1253 = vunpack.c.l.b16 %v875
        %v1254 = vunpack.c.h.b16 %v875
        %v1255 = vunpack.c.l.b16 %v876
        %v1256 = vunpack.c.h.b16 %v876
        %v1257 = vunpack.c.l.b16 %v877
        %v1258 = vunpack.c.h.b16 %v877
        %v1259 = vunpack.c.l.b16 %v878
        %v1260 = vunpack.c.h.b16 %v878
        %v1261 = vunpack.c.l.b16 %v879
        %v1262 = vunpack.c.h.b16 %v879
        %v1263 = vunpack.c.l.b16 %v880
        %v1264 = vunpack.c.h.b16 %v880
        %v1265 = vpack.c.b16 %v1013, %v1009
        %v1266 = vpack.c.b16 %v1014, %v1010
        %v1267 = vpack.c.b16 %v1015, %v1011
        %v1268 = vpack.c.b16 %v1016, %v1012
        %v1269 = vpack.c.b16 %v1021, %v1017
        %v1270 = vpack.c.b16 %v1022, %v1018
        %v1271 = vpack.c.b16 %v1023, %v1019
        %v1272 = vpack.c.b16 %v1024, %v1020
        %v1273 = vpack.c.b16 %v1029, %v1025
        %v1274 = vpack.c.b16 %v1030, %v1026
        %v1275 = vpack.c.b16 %v1031, %v1027
        %v1276 = vpack.c.b16 %v1032, %v1028
        %v1277 = vpack.c.b16 %v1037, %v1033
        %v1278 = vpack.c.b16 %v1038, %v1034
        %v1279 = vpack.c.b16 %v1039, %v1035
        %v1280 = vpack.c.b16 %v1040, %v1036
        %v1281 = vpack.c.b16 %v1045, %v1041
        %v1282 = vpack.c.b16 %v1046, %v1042
        %v1283 = vpack.c.b16 %v1047, %v1043
        %v1284 = vpack.c.b16 %v1048, %v1044
        %v1285 = vpack.c.b16 %v1053, %v1049
        %v1286 = vpack.c.b16 %v1054, %v1050
        %v1287 = vpack.c.b16 %v1055, %v1051
        %v1288 = vpack.c.b16 %v1056, %v1052
        %v1289 = vpack.c.b16 %v1061, %v1057
        %v1290 = vpack.c.b16 %v1062, %v1058
        %v1291 = vpack.c.b16 %v1063, %v1059
        %v1292 = vpack.c.b16 %v1064, %v1060
        %v1293 = vpack.c.b16 %v1069, %v1065
        %v1294 = vpack.c.b16 %v1070, %v1066
        %v1295 = vpack.c.b16 %v1071, %v1067
        %v1296 = vpack.c.b16 %v1072, %v1068
        %v1297 = vpack.c.b16 %v1077, %v1073
        %v1298 = vpack.c.b16 %v1078, %v1074
        %v1299 = vpack.c.b16 %v1079, %v1075
        %v1300 = vpack.c.b16 %v1080, %v1076
        %v1301 = vpack.c.b16 %v1085, %v1081
        %v1302 = vpack.c.b16 %v1086, %v1082
        %v1303 = vpack.c.b16 %v1087, %v1083
        %v1304 = vpack.c.b16 %v1088, %v1084
        %v1305 = vpack.c.b16 %v1093, %v1089
        %v1306 = vpack.c.b16 %v1094, %v1090
        %v1307 = vpack.c.b16 %v1095, %v1091
        %v1308 = vpack.c.b16 %v1096, %v1092
        %v1309 = vpack.c.b16 %v1101, %v1097
        %v1310 = vpack.c.b16 %v1102, %v1098
        %v1311 = vpack.c.b16 %v1103, %v1099
        %v1312 = vpack.c.b16 %v1104, %v1100
        %v1313 = vpack.c.b16 %v1109, %v1105
        %v1314 = vpack.c.b16 %v1110, %v1106
        %v1315 = vpack.c.b16 %v1111, %v1107
        %v1316 = vpack.c.b16 %v1112, %v1108
        %v1317 = vpack.c.b16 %v1117, %v1113
        %v1318 = vpack.c.b16 %v1118, %v1114
        %v1319 = vpack.c.b16 %v1119, %v1115
        %v1320 = vpack.c.b16 %v1120, %v1116
        %v1321 = vpack.c.b16 %v1125, %v1121
        %v1322 = vpack.c.b16 %v1126, %v1122
        %v1323 = vpack.c.b16 %v1127, %v1123
        %v1324 = vpack.c.b16 %v1128, %v1124
        %v1325 = vpack.c.b16 %v1133, %v1129
        %v1326 = vpack.c.b16 %v1134, %v1130
        %v1327 = vpack.c.b16 %v1135, %v1131
        %v1328 = vpack.c.b16 %v1136, %v1132
        %v1329 = vpack.c.b16 %v1141, %v1137
        %v1330 = vpack.c.b16 %v1142, %v1138
        %v1331 = vpack.c.b16 %v1143, %v1139
        %v1332 = vpack.c.b16 %v1144, %v1140
        %v1333 = vpack.c.b16 %v1149, %v1145
        %v1334 = vpack.c.b16 %v1150, %v1146
        %v1335 = vpack.c.b16 %v1151, %v1147
        %v1336 = vpack.c.b16 %v1152, %v1148
        %v1337 = vpack.c.b16 %v1157, %v1153
        %v1338 = vpack.c.b16 %v1158, %v1154
        %v1339 = vpack.c.b16 %v1159, %v1155
        %v1340 = vpack.c.b16 %v1160, %v1156
        %v1341 = vpack.c.b16 %v1165, %v1161
        %v1342 = vpack.c.b16 %v1166, %v1162
        %v1343 = vpack.c.b16 %v1167, %v1163
        %v1344 = vpack.c.b16 %v1168, %v1164
        %v1345 = vpack.c.b16 %v1173, %v1169
        %v1346 = vpack.c.b16 %v1174, %v1170
        %v1347 = vpack.c.b16 %v1175, %v1171
        %v1348 = vpack.c.b16 %v1176, %v1172
        %v1349 = vpack.c.b16 %v1181, %v1177
        %v1350 = vpack.c.b16 %v1182, %v1178
        %v1351 = vpack.c.b16 %v1183, %v1179
        %v1352 = vpack.c.b16 %v1184, %v1180
        %v1353 = vpack.c.b16 %v1189, %v1185
        %v1354 = vpack.c.b16 %v1190, %v1186
        %v1355 = vpack.c.b16 %v1191, %v1187
        %v1356 = vpack.c.b16 %v1192, %v1188
        %v1357 = vpack.c.b16 %v1197, %v1193
        %v1358 = vpack.c.b16 %v1198, %v1194
        %v1359 = vpack.c.b16 %v1199, %v1195
        %v1360 = vpack.c.b16 %v1200, %v1196
        %v1361 = vpack.c.b16 %v1205, %v1201
        %v1362 = vpack.c.b16 %v1206, %v1202
        %v1363 = vpack.c.b16 %v1207, %v1203
        %v1364 = vpack.c.b16 %v1208, %v1204
        %v1365 = vpack.c.b16 %v1213, %v1209
        %v1366 = vpack.c.b16 %v1214, %v1210
        %v1367 = vpack.c.b16 %v1215, %v1211
        %v1368 = vpack.c.b16 %v1216, %v1212
        %v1369 = vpack.c.b16 %v1221, %v1217
        %v1370 = vpack.c.b16 %v1222, %v1218
        %v1371 = vpack.c.b16 %v1223, %v1219
        %v1372 = vpack.c.b16 %v1224, %v1220
        %v1373 = vpack.c.b16 %v1229, %v1225
        %v1374 = vpack.c.b16 %v1230, %v1226
        %v1375 = vpack.c.b16 %v1231, %v1227
        %v1376 = vpack.c.b16 %v1232, %v1228
        %v1377 = vpack.c.b16 %v1237, %v1233
        %v1378 = vpack.c.b16 %v1238, %v1234
        %v1379 = vpack.c.b16 %v1239, %v1235
        %v1380 = vpack.c.b16 %v1240, %v1236
        %v1381 = vpack.c.b16 %v1245, %v1241
        %v1382 = vpack.c.b16 %v1246, %v1242
        %v1383 = vpack.c.b16 %v1247, %v1243
        %v1384 = vpack.c.b16 %v1248, %v1244
        %v1385 = vpack.c.b16 %v1253, %v1249
        %v1386 = vpack.c.b16 %v1254, %v1250
        %v1387 = vpack.c.b16 %v1255, %v1251
        %v1388 = vpack.c.b16 %v1256, %v1252
        %v1389 = vpack.c.b16 %v1261, %v1257
        %v1390 = vpack.c.b16 %v1262, %v1258
        %v1391 = vpack.c.b16 %v1263, %v1259
        %v1392 = vpack.c.b16 %v1264, %v1260
        %1521 = vmatprep.subr.bf16.mxu0 %v1294
        %1522 = vmatpush1.bf16.msra.mxu0 %v1293
        %1523 = vmatprep.subr.bf16.mxu0 %v1290
        %1524 = vmatpush1.bf16.msra.mxu0 %v1289
        %1525 = vmatprep.subr.bf16.mxu0 %v1286
        %1526 = vmatpush1.bf16.msra.mxu0 %v1285
        %1527 = vmatprep.subr.bf16.mxu0 %v1282
        %1528 = vmatpush1.bf16.msra.mxu0 %v1281
        %1529 = vmatprep.subr.bf16.mxu0 %v1278
        %1530 = vmatpush1.bf16.msra.mxu0 %v1277
        %1531 = vmatprep.subr.bf16.mxu0 %v1274
        %1532 = vmatpush1.bf16.msra.mxu0 %v1273
        %1533 = vmatprep.subr.bf16.mxu0 %v1270
        %1534 = vmatpush1.bf16.msra.mxu0 %v1269
        %1535 = vmatprep.subr.bf16.mxu0 %v1266
        %1536 = vmatpush1.bf16.msra.mxu0 %v1265
        %1537 = vmatprep.subr.bf16.mxu0 %v1326
        %1538 = vmatpush2.bf16.msra.mxu0 %v1325
        %1539 = vmatprep.subr.bf16.mxu0 %v1322
        %1540 = vmatpush2.bf16.msra.mxu0 %v1321
        %1541 = vmatprep.subr.bf16.mxu0 %v1318
        %1542 = vmatpush2.bf16.msra.mxu0 %v1317
        %1543 = vmatprep.subr.bf16.mxu0 %v1314
        %1544 = vmatpush2.bf16.msra.mxu0 %v1313
        %1545 = vmatprep.subr.bf16.mxu0 %v1310
        %1546 = vmatpush2.bf16.msra.mxu0 %v1309
        %1547 = vmatprep.subr.bf16.mxu0 %v1306
        %1548 = vmatpush2.bf16.msra.mxu0 %v1305
        %1549 = vmatprep.subr.bf16.mxu0 %v1302
        %1550 = vmatpush2.bf16.msra.mxu0 %v1301
        %1551 = vmatprep.subr.bf16.mxu0 %v1298
        %1552 = vmatpush2.bf16.msra.mxu0 %v1297
        %1553 = vmatprep.mubr.bf16.mxu0 %v750
        %1554 = vmatmul.mubr.bf16.gmra.mxu0 %v749
        %v1555 = vpop.f32.mrf.mxu0
        %v1556 = vadd.f32 0.0, %v1555
        %v1557 = vpop.f32.mrf.mxu0
        %v1558 = vadd.f32 0.0, %v1557
        %v1559 = vpop.f32.mrf.mxu0
        %v1560 = vadd.f32 0.0, %v1559
        %v1561 = vpop.f32.mrf.mxu0
        %v1562 = vadd.f32 0.0, %v1561
        %1563 = vdwg.mxu0
        %1564 = vmatprep.subr.bf16.mxu0 %v1358
        %1565 = vmatpush1.bf16.msra.mxu0 %v1357
        %1566 = vmatprep.subr.bf16.mxu0 %v1354
        %1567 = vmatpush1.bf16.msra.mxu0 %v1353
        %1568 = vmatprep.subr.bf16.mxu0 %v1350
        %1569 = vmatpush1.bf16.msra.mxu0 %v1349
        %1570 = vmatprep.subr.bf16.mxu0 %v1346
        %1571 = vmatpush1.bf16.msra.mxu0 %v1345
        %1572 = vmatprep.subr.bf16.mxu0 %v1342
        %1573 = vmatpush1.bf16.msra.mxu0 %v1341
        %1574 = vmatprep.subr.bf16.mxu0 %v1338
        %1575 = vmatpush1.bf16.msra.mxu0 %v1337
        %1576 = vmatprep.subr.bf16.mxu0 %v1334
        %1577 = vmatpush1.bf16.msra.mxu0 %v1333
        %1578 = vmatprep.subr.bf16.mxu0 %v1330
        %1579 = vmatpush1.bf16.msra.mxu0 %v1329
        %1580 = vmatprep.subr.bf16.mxu0 %v1390
        %1581 = vmatpush2.bf16.msra.mxu0 %v1389
        %1582 = vmatprep.subr.bf16.mxu0 %v1386
        %1583 = vmatpush2.bf16.msra.mxu0 %v1385
        %1584 = vmatprep.subr.bf16.mxu0 %v1382
        %1585 = vmatpush2.bf16.msra.mxu0 %v1381
        %1586 = vmatprep.subr.bf16.mxu0 %v1378
        %1587 = vmatpush2.bf16.msra.mxu0 %v1377
        %1588 = vmatprep.subr.bf16.mxu0 %v1374
        %1589 = vmatpush2.bf16.msra.mxu0 %v1373
        %1590 = vmatprep.subr.bf16.mxu0 %v1370
        %1591 = vmatpush2.bf16.msra.mxu0 %v1369
        %1592 = vmatprep.subr.bf16.mxu0 %v1366
        %1593 = vmatpush2.bf16.msra.mxu0 %v1365
        %1594 = vmatprep.subr.bf16.mxu0 %v1362
        %1595 = vmatpush2.bf16.msra.mxu0 %v1361
        %1596 = vmatprep.mubr.bf16.mxu0 %v752
        %1597 = vmatmul.mubr.bf16.gmra.mxu0 %v751
        %v1598 = vpop.f32.mrf.mxu0
        %v1599 = vadd.f32 %v1556, %v1598
        %v1600 = vpop.f32.mrf.mxu0
        %v1601 = vadd.f32 %v1558, %v1600
        %v1602 = vpop.f32.mrf.mxu0
        %v1603 = vadd.f32 %v1560, %v1602
        %v1604 = vpop.f32.mrf.mxu0
        %v1605 = vadd.f32 %v1562, %v1604
        %1606 = vdwg.mxu0
        %1607 = vmatprep.subr.bf16.mxu0 %v1296
        %1608 = vmatpush1.bf16.msra.mxu0 %v1295
        %1609 = vmatprep.subr.bf16.mxu0 %v1292
        %1610 = vmatpush1.bf16.msra.mxu0 %v1291
        %1611 = vmatprep.subr.bf16.mxu0 %v1288
        %1612 = vmatpush1.bf16.msra.mxu0 %v1287
        %1613 = vmatprep.subr.bf16.mxu0 %v1284
        %1614 = vmatpush1.bf16.msra.mxu0 %v1283
        %1615 = vmatprep.subr.bf16.mxu0 %v1280
        %1616 = vmatpush1.bf16.msra.mxu0 %v1279
        %1617 = vmatprep.subr.bf16.mxu0 %v1276
        %1618 = vmatpush1.bf16.msra.mxu0 %v1275
        %1619 = vmatprep.subr.bf16.mxu0 %v1272
        %1620 = vmatpush1.bf16.msra.mxu0 %v1271
        %1621 = vmatprep.subr.bf16.mxu0 %v1268
        %1622 = vmatpush1.bf16.msra.mxu0 %v1267
        %1623 = vmatprep.subr.bf16.mxu0 %v1328
        %1624 = vmatpush2.bf16.msra.mxu0 %v1327
        %1625 = vmatprep.subr.bf16.mxu0 %v1324
        %1626 = vmatpush2.bf16.msra.mxu0 %v1323
        %1627 = vmatprep.subr.bf16.mxu0 %v1320
        %1628 = vmatpush2.bf16.msra.mxu0 %v1319
        %1629 = vmatprep.subr.bf16.mxu0 %v1316
        %1630 = vmatpush2.bf16.msra.mxu0 %v1315
        %1631 = vmatprep.subr.bf16.mxu0 %v1312
        %1632 = vmatpush2.bf16.msra.mxu0 %v1311
        %1633 = vmatprep.subr.bf16.mxu0 %v1308
        %1634 = vmatpush2.bf16.msra.mxu0 %v1307
        %1635 = vmatprep.subr.bf16.mxu0 %v1304
        %1636 = vmatpush2.bf16.msra.mxu0 %v1303
        %1637 = vmatprep.subr.bf16.mxu0 %v1300
        %1638 = vmatpush2.bf16.msra.mxu0 %v1299
        %1639 = vmatprep.mubr.bf16.mxu0 %v750
        %1640 = vmatmul.mubr.bf16.gmra.mxu0 %v749
        %v1641 = vpop.f32.mrf.mxu0
        %v1642 = vadd.f32 0.0, %v1641
        %v1643 = vpop.f32.mrf.mxu0
        %v1644 = vadd.f32 0.0, %v1643
        %v1645 = vpop.f32.mrf.mxu0
        %v1646 = vadd.f32 0.0, %v1645
        %v1647 = vpop.f32.mrf.mxu0
        %v1648 = vadd.f32 0.0, %v1647
        %1649 = vdwg.mxu0
        %1650 = vmatprep.subr.bf16.mxu0 %v1360
        %1651 = vmatpush1.bf16.msra.mxu0 %v1359
        %1652 = vmatprep.subr.bf16.mxu0 %v1356
        %1653 = vmatpush1.bf16.msra.mxu0 %v1355
        %1654 = vmatprep.subr.bf16.mxu0 %v1352
        %1655 = vmatpush1.bf16.msra.mxu0 %v1351
        %1656 = vmatprep.subr.bf16.mxu0 %v1348
        %1657 = vmatpush1.bf16.msra.mxu0 %v1347
        %1658 = vmatprep.subr.bf16.mxu0 %v1344
        %1659 = vmatpush1.bf16.msra.mxu0 %v1343
        %1660 = vmatprep.subr.bf16.mxu0 %v1340
        %1661 = vmatpush1.bf16.msra.mxu0 %v1339
        %1662 = vmatprep.subr.bf16.mxu0 %v1336
        %1663 = vmatpush1.bf16.msra.mxu0 %v1335
        %1664 = vmatprep.subr.bf16.mxu0 %v1332
        %1665 = vmatpush1.bf16.msra.mxu0 %v1331
        %1666 = vmatprep.subr.bf16.mxu0 %v1392
        %1667 = vmatpush2.bf16.msra.mxu0 %v1391
        %1668 = vmatprep.subr.bf16.mxu0 %v1388
        %1669 = vmatpush2.bf16.msra.mxu0 %v1387
        %1670 = vmatprep.subr.bf16.mxu0 %v1384
        %1671 = vmatpush2.bf16.msra.mxu0 %v1383
        %1672 = vmatprep.subr.bf16.mxu0 %v1380
        %1673 = vmatpush2.bf16.msra.mxu0 %v1379
        %1674 = vmatprep.subr.bf16.mxu0 %v1376
        %1675 = vmatpush2.bf16.msra.mxu0 %v1375
        %1676 = vmatprep.subr.bf16.mxu0 %v1372
        %1677 = vmatpush2.bf16.msra.mxu0 %v1371
        %1678 = vmatprep.subr.bf16.mxu0 %v1368
        %1679 = vmatpush2.bf16.msra.mxu0 %v1367
        %1680 = vmatprep.subr.bf16.mxu0 %v1364
        %1681 = vmatpush2.bf16.msra.mxu0 %v1363
        %1682 = vmatprep.mubr.bf16.mxu0 %v752
        %1683 = vmatmul.mubr.bf16.gmra.mxu0 %v751
        %v1684 = vpop.f32.mrf.mxu0
        %v1685 = vadd.f32 %v1642, %v1684
        %v1686 = vpop.f32.mrf.mxu0
        %v1687 = vadd.f32 %v1644, %v1686
        %v1688 = vpop.f32.mrf.mxu0
        %v1689 = vadd.f32 %v1646, %v1688
        %v1690 = vpop.f32.mrf.mxu0
        %v1691 = vadd.f32 %v1648, %v1690
        %1692 = vdwg.mxu0
        %v1693 = vmax.f32 %v1599, %v1685
        %v1694 = vmax.f32 %v1601, %v1687
        %v1695 = vmax.f32 %v1603, %v1689
        %v1696 = vmax.f32 %v1605, %v1691
        %v1697 = vpack.c.bf16 %v1695, %v1693
        %v1698 = vpack.c.bf16 %v1696, %v1694
        %v1701 = vunpack.c.l.b16 %v1697
        %v1702 = vunpack.c.l.b16 %v1698
        %v1703 = vunpack.c.h.b16 %v1697
        %v1704 = vunpack.c.h.b16 %v1698
        %v1705 = vpack.c.b16 %v1702, %v1701
        %v1706 = vpack.c.b16 %v1704, %v1703
        %1707 = vrot.lane.b32.xlu0 %v1705, 16
        %v1708 = vpop.permute.xlu0 %1707
        %1709 = vrot.lane.b32.xlu0 %v1706, 16
        %v1710 = vpop.permute.xlu0 %1709
        %v1711 = vrot.slane %v1708, 4
        %v1712 = vrot.slane %v1710, 4
        %v1713 = vsel %vm359, %v1711, %v1708
        %v1714 = vsel %vm359, %v1712, %v1710
        %1717 = vst.msk [vmem:[#allocation4] sm:$0xff] %vm368, %v1713
        %1718 = vst.msk [vmem:[#allocation4 + $0x8] sm:$0xff] %vm368, %v1714
        %1719 = vst.msk [vmem:[#allocation4] sm:$0xf] %vm371, 0
        %1720 = vst.msk [vmem:[#allocation4 + $0x8] sm:$0xf] %vm371, 0
        %1723 = vst [vmem:[#allocation4 + $0x10] sm:$0xff] %v1705
        %1724 = vst [vmem:[#allocation4 + $0x18] sm:$0xff] %v1706
        %1725 = vrot.lane.b32.xlu0 %v1705, 112
        %v1726 = vpop.permute.xlu0 %1725
        %1727 = vrot.lane.b32.xlu0 %v1706, 112
        %v1728 = vpop.permute.xlu0 %1727
        %v1729 = vrot.slane %v1726, 4
        %v1730 = vrot.slane %v1728, 4
        %v1731 = vsel %vm382, %v1726, %v1729
        %v1732 = vsel %vm382, %v1728, %v1730
        %1735 = vst.msk [vmem:[#allocation4 + $0x20] sm:$0xff] %vm390, %v1731
        %1736 = vst.msk [vmem:[#allocation4 + $0x28] sm:$0xff] %vm390, %v1732
        %1737 = vst.msk [vmem:[#allocation4 + $0x24] sm:$0xf] %vm392, 0
        %1738 = vst.msk [vmem:[#allocation4 + $0x2c] sm:$0xf] %vm392, 0
        %v1739 = vld [vmem:[%s6 + $0x18] sm:$0xff]
        %v1740 = vld [vmem:[%s6 + $0x20] sm:$0xff]
        %v1741 = vld [vmem:[%s6 + $0x28] sm:$0xff]
        %v1742 = vld [vmem:[%s6 + $0x30] sm:$0xff]
        %v1743 = vld [vmem:[%s3] sm:$0xf]
        %v1744 = vld [vmem:[%s3 + $0x4] sm:$0xf]
        %v1745 = vld [vmem:[%s3 + $0x8] sm:$0xf]
        %v1746 = vld [vmem:[%s3 + $0xc] sm:$0xf]
        %v1747 = vld [vmem:[#allocation4] sm:$0xff]
        %v1748 = vld [vmem:[#allocation4 + $0x8] sm:$0xff]
        %v1749 = vld [vmem:[#allocation4 + $0x10] sm:$0xff]
        %v1750 = vld [vmem:[#allocation4 + $0x18] sm:$0xff]
        %v1751 = vld [vmem:[#allocation4 + $0x20] sm:$0xff]
        %v1752 = vld [vmem:[#allocation4 + $0x28] sm:$0xff]
        %1754 = vset.pattern.permute.xlu0 0
        %1755 = vperm.xlu0 %1754, %v1739
        %v1756 = vpop.permute.xlu0 %1755
        %1759 = vset.pattern.permute.xlu0 0
        %1760 = vperm.xlu0 %1759, %v1740
        %v1761 = vpop.permute.xlu0 %1760
        %1764 = vset.pattern.permute.xlu0 0
        %1765 = vperm.xlu0 %1764, %v1741
        %v1766 = vpop.permute.xlu0 %1765
        %1769 = vset.pattern.permute.xlu0 0
        %1770 = vperm.xlu0 %1769, %v1742
        %v1771 = vpop.permute.xlu0 %1770
        %v1777 = vunpack.c.l.b16 %v1743
        %v1778 = vunpack.c.l.b16 %v1744
        %v1779 = vunpack.c.l.b16 %v1745
        %v1780 = vunpack.c.l.b16 %v1746
        %v1781 = vpack.c.b16 %v1778, %v1777
        %v1782 = vpack.c.b16 %v1780, %v1779
        %v1789 = vunpack.c.l.b16 %v1747
        %v1790 = vunpack.c.h.b16 %v1747
        %v1791 = vunpack.c.l.b16 %v1748
        %v1792 = vunpack.c.h.b16 %v1748
        %v1793 = vunpack.c.l.b16 %v1749
        %v1794 = vunpack.c.h.b16 %v1749
        %v1795 = vunpack.c.l.b16 %v1750
        %v1796 = vunpack.c.h.b16 %v1750
        %v1797 = vunpack.c.l.b16 %v1751
        %v1798 = vunpack.c.h.b16 %v1751
        %v1799 = vunpack.c.l.b16 %v1752
        %v1800 = vunpack.c.h.b16 %v1752
        %v1801 = vpack.c.b16 %v1791, %v1789
        %v1802 = vpack.c.b16 %v1792, %v1790
        %v1803 = vpack.c.b16 %v1795, %v1793
        %v1804 = vpack.c.b16 %v1796, %v1794
        %v1805 = vpack.c.b16 %v1799, %v1797
        %v1806 = vpack.c.b16 %v1800, %v1798
        %vm1813 = vcmask 392192
        %v1815 = vsel %vm1813, %v1781, 0
        %v1818 = vsel %vm1813, %v1782, 0
        %1820 = vmatprep.subr.bf16.mxu0 0
        %1821 = vmatpush1.bf16.msra.mxu0 0
        %1822 = vmatprep.subr.bf16.mxu0 0
        %1823 = vmatpush1.bf16.msra.mxu0 0
        %1824 = vmatprep.subr.bf16.mxu0 0
        %1825 = vmatpush1.bf16.msra.mxu0 0
        %1826 = vmatprep.subr.bf16.mxu0 0
        %1827 = vmatpush1.bf16.msra.mxu0 0
        %1828 = vmatprep.subr.bf16.mxu0 0
        %1829 = vmatpush1.bf16.msra.mxu0 0
        %1830 = vmatprep.subr.bf16.mxu0 %v1806
        %1831 = vmatpush1.bf16.msra.mxu0 %v1805
        %1832 = vmatprep.subr.bf16.mxu0 %v1804
        %1833 = vmatpush1.bf16.msra.mxu0 %v1803
        %1834 = vmatprep.subr.bf16.mxu0 %v1802
        %1835 = vmatpush1.bf16.msra.mxu0 %v1801
        %1836 = vmatprep.subr.bf16.mxu0 0
        %1837 = vmatpush2.bf16.msra.mxu0 0
        %1838 = vmatprep.subr.bf16.mxu0 0
        %1839 = vmatpush2.bf16.msra.mxu0 0
        %1840 = vmatprep.subr.bf16.mxu0 0
        %1841 = vmatpush2.bf16.msra.mxu0 0
        %1842 = vmatprep.subr.bf16.mxu0 0
        %1843 = vmatpush2.bf16.msra.mxu0 0
        %1844 = vmatprep.subr.bf16.mxu0 0
        %1845 = vmatpush2.bf16.msra.mxu0 0
        %1846 = vmatprep.subr.bf16.mxu0 0
        %1847 = vmatpush2.bf16.msra.mxu0 0
        %1848 = vmatprep.subr.bf16.mxu0 0
        %1849 = vmatpush2.bf16.msra.mxu0 0
        %1850 = vmatprep.subr.bf16.mxu0 0
        %1851 = vmatpush2.bf16.msra.mxu0 0
        %1852 = vmatprep.mubr.bf16.mxu0 0
        %1853 = vmatmul.mubr.bf16.gmra.mxu0 %v1815
        %v1854 = vpop.f32.mrf.mxu0
        %v1855 = vadd.f32 %v1756, %v1854
        %v1856 = vpop.f32.mrf.mxu0
        %v1857 = vadd.f32 %v1756, %v1856
        %v1858 = vpop.f32.mrf.mxu0
        %v1859 = vadd.f32 %v1761, %v1858
        %v1860 = vpop.f32.mrf.mxu0
        %v1861 = vadd.f32 %v1761, %v1860
        %1862 = vmatprep.mubr.bf16.mxu0 0
        %1863 = vmatmul.mubr.bf16.gmra.mxu0 %v1818
        %v1864 = vpop.f32.mrf.mxu0
        %v1865 = vadd.f32 %v1766, %v1864
        %v1866 = vpop.f32.mrf.mxu0
        %v1867 = vadd.f32 %v1766, %v1866
        %v1868 = vpop.f32.mrf.mxu0
        %v1869 = vadd.f32 %v1771, %v1868
        %v1870 = vpop.f32.mrf.mxu0
        %v1871 = vadd.f32 %v1771, %v1870
        %1872 = vdwg.mxu0
        %v1873 = vmax.f32 %v1855, 0.0
        %v1874 = vmax.f32 %v1857, 0.0
        %v1875 = vmax.f32 %v1859, 0.0
        %v1876 = vmax.f32 %v1861, 0.0
        %v1877 = vmax.f32 %v1865, 0.0
        %v1878 = vmax.f32 %v1867, 0.0
        %v1879 = vmax.f32 %v1869, 0.0
        %v1880 = vmax.f32 %v1871, 0.0
        %v1881 = vpack.c.bf16 %v1875, %v1873
        %v1882 = vpack.c.bf16 %v1876, %v1874
        %v1883 = vpack.c.bf16 %v1879, %v1877
        %v1884 = vpack.c.bf16 %v1880, %v1878
        %v1885 = vld [vmem:[%s8] sm:$0xff]
        %v1886 = vld [vmem:[%s8 + $0x8] sm:$0xff]
        %v1887 = vld [vmem:[%s8 + $0x10] sm:$0xff]
        %v1888 = vld [vmem:[%s8 + $0x18] sm:$0xff]
        %v1889 = vld [vmem:[%s8 + $0x20] sm:$0xff]
        %v1890 = vld [vmem:[%s8 + $0x28] sm:$0xff]
        %v1891 = vld [vmem:[%s8 + $0x30] sm:$0xff]
        %v1892 = vld [vmem:[%s8 + $0x38] sm:$0xff]
        %v1893 = vld [vmem:[%s8 + $0x40] sm:$0xff]
        %v1894 = vld [vmem:[%s8 + $0x48] sm:$0xff]
        %v1895 = vld [vmem:[%s8 + $0x50] sm:$0xff]
        %v1896 = vld [vmem:[%s8 + $0x58] sm:$0xff]
        %v1897 = vld [vmem:[%s8 + $0x60] sm:$0xff]
        %v1898 = vld [vmem:[%s8 + $0x68] sm:$0xff]
        %v1899 = vld [vmem:[%s8 + $0x70] sm:$0xff]
        %v1900 = vld [vmem:[%s8 + $0x78] sm:$0xff]
        %v1901 = vld [vmem:[%s8 + $0x80] sm:$0xff]
        %v1902 = vld [vmem:[%s8 + $0x88] sm:$0xff]
        %v1903 = vld [vmem:[%s8 + $0x90] sm:$0xff]
        %v1904 = vld [vmem:[%s8 + $0x98] sm:$0xff]
        %v1905 = vld [vmem:[%s8 + $0xa0] sm:$0xff]
        %v1906 = vld [vmem:[%s8 + $0xa8] sm:$0xff]
        %v1907 = vld [vmem:[%s8 + $0xb0] sm:$0xff]
        %v1908 = vld [vmem:[%s8 + $0xb8] sm:$0xff]
        %v1909 = vld [vmem:[%s8 + $0xc0] sm:$0xff]
        %v1910 = vld [vmem:[%s8 + $0xc8] sm:$0xff]
        %v1911 = vld [vmem:[%s8 + $0xd0] sm:$0xff]
        %v1912 = vld [vmem:[%s8 + $0xd8] sm:$0xff]
        %v1913 = vld [vmem:[%s8 + $0xe0] sm:$0xff]
        %v1914 = vld [vmem:[%s8 + $0xe8] sm:$0xff]
        %v1915 = vld [vmem:[%s8 + $0xf0] sm:$0xff]
        %v1916 = vld [vmem:[%s8 + $0xf8] sm:$0xff]
        %v1949 = vunpack.c.l.b16 %v1885
        %v1950 = vunpack.c.h.b16 %v1885
        %v1951 = vunpack.c.l.b16 %v1886
        %v1952 = vunpack.c.h.b16 %v1886
        %v1953 = vunpack.c.l.b16 %v1887
        %v1954 = vunpack.c.h.b16 %v1887
        %v1955 = vunpack.c.l.b16 %v1888
        %v1956 = vunpack.c.h.b16 %v1888
        %v1957 = vunpack.c.l.b16 %v1889
        %v1958 = vunpack.c.h.b16 %v1889
        %v1959 = vunpack.c.l.b16 %v1890
        %v1960 = vunpack.c.h.b16 %v1890
        %v1961 = vunpack.c.l.b16 %v1891
        %v1962 = vunpack.c.h.b16 %v1891
        %v1963 = vunpack.c.l.b16 %v1892
        %v1964 = vunpack.c.h.b16 %v1892
        %v1965 = vunpack.c.l.b16 %v1893
        %v1966 = vunpack.c.h.b16 %v1893
        %v1967 = vunpack.c.l.b16 %v1894
        %v1968 = vunpack.c.h.b16 %v1894
        %v1969 = vunpack.c.l.b16 %v1895
        %v1970 = vunpack.c.h.b16 %v1895
        %v1971 = vunpack.c.l.b16 %v1896
        %v1972 = vunpack.c.h.b16 %v1896
        %v1973 = vunpack.c.l.b16 %v1897
        %v1974 = vunpack.c.h.b16 %v1897
        %v1975 = vunpack.c.l.b16 %v1898
        %v1976 = vunpack.c.h.b16 %v1898
        %v1977 = vunpack.c.l.b16 %v1899
        %v1978 = vunpack.c.h.b16 %v1899
        %v1979 = vunpack.c.l.b16 %v1900
        %v1980 = vunpack.c.h.b16 %v1900
        %v1981 = vunpack.c.l.b16 %v1901
        %v1982 = vunpack.c.h.b16 %v1901
        %v1983 = vunpack.c.l.b16 %v1902
        %v1984 = vunpack.c.h.b16 %v1902
        %v1985 = vunpack.c.l.b16 %v1903
        %v1986 = vunpack.c.h.b16 %v1903
        %v1987 = vunpack.c.l.b16 %v1904
        %v1988 = vunpack.c.h.b16 %v1904
        %v1989 = vunpack.c.l.b16 %v1905
        %v1990 = vunpack.c.h.b16 %v1905
        %v1991 = vunpack.c.l.b16 %v1906
        %v1992 = vunpack.c.h.b16 %v1906
        %v1993 = vunpack.c.l.b16 %v1907
        %v1994 = vunpack.c.h.b16 %v1907
        %v1995 = vunpack.c.l.b16 %v1908
        %v1996 = vunpack.c.h.b16 %v1908
        %v1997 = vunpack.c.l.b16 %v1909
        %v1998 = vunpack.c.h.b16 %v1909
        %v1999 = vunpack.c.l.b16 %v1910
        %v2000 = vunpack.c.h.b16 %v1910
        %v2001 = vunpack.c.l.b16 %v1911
        %v2002 = vunpack.c.h.b16 %v1911
        %v2003 = vunpack.c.l.b16 %v1912
        %v2004 = vunpack.c.h.b16 %v1912
        %v2005 = vunpack.c.l.b16 %v1913
        %v2006 = vunpack.c.h.b16 %v1913
        %v2007 = vunpack.c.l.b16 %v1914
        %v2008 = vunpack.c.h.b16 %v1914
        %v2009 = vunpack.c.l.b16 %v1915
        %v2010 = vunpack.c.h.b16 %v1915
        %v2011 = vunpack.c.l.b16 %v1916
        %v2012 = vunpack.c.h.b16 %v1916
        %v2013 = vpack.c.b16 %v1951, %v1949
        %v2014 = vpack.c.b16 %v1952, %v1950
        %v2015 = vpack.c.b16 %v1955, %v1953
        %v2016 = vpack.c.b16 %v1956, %v1954
        %v2017 = vpack.c.b16 %v1959, %v1957
        %v2018 = vpack.c.b16 %v1960, %v1958
        %v2019 = vpack.c.b16 %v1963, %v1961
        %v2020 = vpack.c.b16 %v1964, %v1962
        %v2021 = vpack.c.b16 %v1967, %v1965
        %v2022 = vpack.c.b16 %v1968, %v1966
        %v2023 = vpack.c.b16 %v1971, %v1969
        %v2024 = vpack.c.b16 %v1972, %v1970
        %v2025 = vpack.c.b16 %v1975, %v1973
        %v2026 = vpack.c.b16 %v1976, %v1974
        %v2027 = vpack.c.b16 %v1979, %v1977
        %v2028 = vpack.c.b16 %v1980, %v1978
        %v2029 = vpack.c.b16 %v1983, %v1981
        %v2030 = vpack.c.b16 %v1984, %v1982
        %v2031 = vpack.c.b16 %v1987, %v1985
        %v2032 = vpack.c.b16 %v1988, %v1986
        %v2033 = vpack.c.b16 %v1991, %v1989
        %v2034 = vpack.c.b16 %v1992, %v1990
        %v2035 = vpack.c.b16 %v1995, %v1993
        %v2036 = vpack.c.b16 %v1996, %v1994
        %v2037 = vpack.c.b16 %v1999, %v1997
        %v2038 = vpack.c.b16 %v2000, %v1998
        %v2039 = vpack.c.b16 %v2003, %v2001
        %v2040 = vpack.c.b16 %v2004, %v2002
        %v2041 = vpack.c.b16 %v2007, %v2005
        %v2042 = vpack.c.b16 %v2008, %v2006
        %v2043 = vpack.c.b16 %v2011, %v2009
        %v2044 = vpack.c.b16 %v2012, %v2010
        %2077 = vmatprep.subr.bf16.mxu0 %v2028
        %2078 = vmatpush1.bf16.msra.mxu0 %v2027
        %2079 = vmatprep.subr.bf16.mxu0 %v2026
        %2080 = vmatpush1.bf16.msra.mxu0 %v2025
        %2081 = vmatprep.subr.bf16.mxu0 %v2024
        %2082 = vmatpush1.bf16.msra.mxu0 %v2023
        %2083 = vmatprep.subr.bf16.mxu0 %v2022
        %2084 = vmatpush1.bf16.msra.mxu0 %v2021
        %2085 = vmatprep.subr.bf16.mxu0 %v2020
        %2086 = vmatpush1.bf16.msra.mxu0 %v2019
        %2087 = vmatprep.subr.bf16.mxu0 %v2018
        %2088 = vmatpush1.bf16.msra.mxu0 %v2017
        %2089 = vmatprep.subr.bf16.mxu0 %v2016
        %2090 = vmatpush1.bf16.msra.mxu0 %v2015
        %2091 = vmatprep.subr.bf16.mxu0 %v2014
        %2092 = vmatpush1.bf16.msra.mxu0 %v2013
        %2093 = vmatprep.subr.bf16.mxu0 %v2044
        %2094 = vmatpush2.bf16.msra.mxu0 %v2043
        %2095 = vmatprep.subr.bf16.mxu0 %v2042
        %2096 = vmatpush2.bf16.msra.mxu0 %v2041
        %2097 = vmatprep.subr.bf16.mxu0 %v2040
        %2098 = vmatpush2.bf16.msra.mxu0 %v2039
        %2099 = vmatprep.subr.bf16.mxu0 %v2038
        %2100 = vmatpush2.bf16.msra.mxu0 %v2037
        %2101 = vmatprep.subr.bf16.mxu0 %v2036
        %2102 = vmatpush2.bf16.msra.mxu0 %v2035
        %2103 = vmatprep.subr.bf16.mxu0 %v2034
        %2104 = vmatpush2.bf16.msra.mxu0 %v2033
        %2105 = vmatprep.subr.bf16.mxu0 %v2032
        %2106 = vmatpush2.bf16.msra.mxu0 %v2031
        %2107 = vmatprep.subr.bf16.mxu0 %v2030
        %2108 = vmatpush2.bf16.msra.mxu0 %v2029
        %2109 = vmatprep.mubr.bf16.mxu0 %v1882
        %2110 = vmatmul.mubr.bf16.gmra.mxu0 %v1881
        %v2111 = vpop.f32.mrf.mxu0
        %v2112 = vadd.f32 0.0, %v2111
        %v2113 = vpop.f32.mrf.mxu0
        %v2114 = vadd.f32 0.0, %v2113
        %v2115 = vpop.f32.mrf.mxu0
        %v2116 = vadd.f32 0.0, %v2115
        %v2117 = vpop.f32.mrf.mxu0
        %v2118 = vadd.f32 0.0, %v2117
        %2119 = vmatprep.mubr.bf16.mxu0 %v1884
        %2120 = vmatmul.mubr.bf16.gmra.mxu0 %v1883
        %v2121 = vpop.f32.mrf.mxu0
        %v2122 = vadd.f32 0.0, %v2121
        %v2123 = vpop.f32.mrf.mxu0
        %v2124 = vadd.f32 0.0, %v2123
        %v2125 = vpop.f32.mrf.mxu0
        %v2126 = vadd.f32 0.0, %v2125
        %v2127 = vpop.f32.mrf.mxu0
        %v2128 = vadd.f32 0.0, %v2127
        %2129 = vdwg.mxu0
        %v2130 = vmax.f32 %v2112, %v2114
        %v2131 = vmax.f32 %v2116, %v2118
        %v2132 = vmax.f32 %v2122, %v2124
        %v2133 = vmax.f32 %v2126, %v2128
        %v2134 = vpack.c.bf16 %v2131, %v2130
        %v2135 = vpack.c.bf16 %v2133, %v2132
        %v2136 = vld [vmem:[#allocation5] sm:$0xf]
        %v2137 = vld [vmem:[#allocation5 + $0x8] sm:$0xf]
        %v2138 = vld [vmem:[#allocation5 + $0x10] sm:$0xf]
        %v2139 = vld [vmem:[#allocation5 + $0x18] sm:$0xf]
        %v2140 = vld [vmem:[#allocation5 + $0x20] sm:$0xf]
        %v2141 = vld [vmem:[#allocation5 + $0x28] sm:$0xf]
        %v2142 = vld [vmem:[#allocation5 + $0x30] sm:$0xf]
        %v2143 = vld [vmem:[#allocation5 + $0x38] sm:$0xf]
        %v2144 = vld [vmem:[#allocation5 + $0x40] sm:$0xf]
        %v2145 = vld [vmem:[#allocation5 + $0x48] sm:$0xf]
        %v2146 = vld [vmem:[#allocation5 + $0x50] sm:$0xf]
        %v2147 = vld [vmem:[#allocation5 + $0x58] sm:$0xf]
        %v2148 = vld [vmem:[#allocation5 + $0x60] sm:$0xf]
        %v2149 = vld [vmem:[#allocation5 + $0x68] sm:$0xf]
        %v2150 = vld [vmem:[#allocation5 + $0x70] sm:$0xf]
        %v2151 = vld [vmem:[#allocation5 + $0x78] sm:$0xf]
        %v2168 = vunpack.c.l.b16 %v2136
        %v2169 = vunpack.c.l.b16 %v2137
        %v2170 = vunpack.c.l.b16 %v2138
        %v2171 = vunpack.c.l.b16 %v2139
        %v2172 = vunpack.c.l.b16 %v2140
        %v2173 = vunpack.c.l.b16 %v2141
        %v2174 = vunpack.c.l.b16 %v2142
        %v2175 = vunpack.c.l.b16 %v2143
        %v2176 = vunpack.c.l.b16 %v2144
        %v2177 = vunpack.c.l.b16 %v2145
        %v2178 = vunpack.c.l.b16 %v2146
        %v2179 = vunpack.c.l.b16 %v2147
        %v2180 = vunpack.c.l.b16 %v2148
        %v2181 = vunpack.c.l.b16 %v2149
        %v2182 = vunpack.c.l.b16 %v2150
        %v2183 = vunpack.c.l.b16 %v2151
        %v2184 = vpack.c.b16 %v2169, %v2168
        %v2185 = vpack.c.b16 %v2171, %v2170
        %v2186 = vpack.c.b16 %v2173, %v2172
        %v2187 = vpack.c.b16 %v2175, %v2174
        %v2188 = vpack.c.b16 %v2177, %v2176
        %v2189 = vpack.c.b16 %v2179, %v2178
        %v2190 = vpack.c.b16 %v2181, %v2180
        %v2191 = vpack.c.b16 %v2183, %v2182
        %2192 = vrot.lane.b32.xlu0 %v2184, 96
        %v2193 = vpop.permute.xlu0 %2192
        %2194 = vrot.lane.b32.xlu0 %v2185, 96
        %v2195 = vpop.permute.xlu0 %2194
        %2196 = vrot.lane.b32.xlu0 %v2186, 96
        %v2197 = vpop.permute.xlu0 %2196
        %2198 = vrot.lane.b32.xlu0 %v2187, 96
        %v2199 = vpop.permute.xlu0 %2198
        %2200 = vrot.lane.b32.xlu0 %v2188, 96
        %v2201 = vpop.permute.xlu0 %2200
        %2202 = vrot.lane.b32.xlu0 %v2189, 96
        %v2203 = vpop.permute.xlu0 %2202
        %2204 = vrot.lane.b32.xlu0 %v2190, 96
        %v2205 = vpop.permute.xlu0 %2204
        %2206 = vrot.lane.b32.xlu0 %v2191, 96
        %v2207 = vpop.permute.xlu0 %2206
        %2210 = vrot.lane.b32.xlu0 %v2134, 112
        %v2211 = vpop.permute.xlu0 %2210
        %2212 = vrot.lane.b32.xlu0 %v2135, 112
        %v2213 = vpop.permute.xlu0 %2212
        %vm2216 = vcmask 261120
        %v2218 = vsel %vm2216, %v2193, 0
        %v2221 = vsel %vm2216, %v2195, 0
        %v2224 = vsel %vm2216, %v2197, 0
        %v2227 = vsel %vm2216, %v2199, 0
        %v2230 = vsel %vm2216, %v2201, 0
        %v2233 = vsel %vm2216, %v2203, 0
        %v2236 = vsel %vm2216, %v2205, 0
        %v2239 = vsel %vm2216, %v2207, 0
        %2241 = vmatprep.subr.bf16.mxu0 0
        %2242 = vmatpush1.bf16.msra.mxu0 0
        %2243 = vmatprep.subr.bf16.mxu0 0
        %2244 = vmatpush1.bf16.msra.mxu0 0
        %2245 = vmatprep.subr.bf16.mxu0 0
        %2246 = vmatpush1.bf16.msra.mxu0 0
        %2247 = vmatprep.subr.bf16.mxu0 0
        %2248 = vmatpush1.bf16.msra.mxu0 0
        %2249 = vmatprep.subr.bf16.mxu0 0
        %2250 = vmatpush1.bf16.msra.mxu0 0
        %2251 = vmatprep.subr.bf16.mxu0 0
        %2252 = vmatpush1.bf16.msra.mxu0 0
        %2253 = vmatprep.subr.bf16.mxu0 0
        %2254 = vmatpush1.bf16.msra.mxu0 %v2213
        %2255 = vmatprep.subr.bf16.mxu0 0
        %2256 = vmatpush1.bf16.msra.mxu0 %v2211
        %2257 = vmatprep.subr.bf16.mxu0 0
        %2258 = vmatpush2.bf16.msra.mxu0 0
        %2259 = vmatprep.subr.bf16.mxu0 0
        %2260 = vmatpush2.bf16.msra.mxu0 0
        %2261 = vmatprep.subr.bf16.mxu0 0
        %2262 = vmatpush2.bf16.msra.mxu0 0
        %2263 = vmatprep.subr.bf16.mxu0 0
        %2264 = vmatpush2.bf16.msra.mxu0 0
        %2265 = vmatprep.subr.bf16.mxu0 0
        %2266 = vmatpush2.bf16.msra.mxu0 0
        %2267 = vmatprep.subr.bf16.mxu0 0
        %2268 = vmatpush2.bf16.msra.mxu0 0
        %2269 = vmatprep.subr.bf16.mxu0 0
        %2270 = vmatpush2.bf16.msra.mxu0 0
        %2271 = vmatprep.subr.bf16.mxu0 0
        %2272 = vmatpush2.bf16.msra.mxu0 0
        %2273 = vmatprep.mubr.bf16.mxu0 0
        %2274 = vmatmul.mubr.bf16.gmra.mxu0 %v2218
        %v2275 = vpop.f32.mrf.mxu0
        %v2276 = vadd.f32 0.0, %v2275
        %v2277 = vpop.f32.mrf.mxu0
        %v2278 = vpop.f32.mrf.mxu0
        %v2279 = vadd.f32 0.0, %v2278
        %v2280 = vpop.f32.mrf.mxu0
        %2281 = vmatprep.mubr.bf16.mxu0 0
        %2282 = vmatmul.mubr.bf16.gmra.mxu0 %v2221
        %v2283 = vpop.f32.mrf.mxu0
        %v2284 = vadd.f32 0.0, %v2283
        %v2285 = vpop.f32.mrf.mxu0
        %v2286 = vpop.f32.mrf.mxu0
        %v2287 = vadd.f32 0.0, %v2286
        %v2288 = vpop.f32.mrf.mxu0
        %2289 = vmatprep.mubr.bf16.mxu0 0
        %2290 = vmatmul.mubr.bf16.gmra.mxu0 %v2224
        %v2291 = vpop.f32.mrf.mxu0
        %v2292 = vadd.f32 0.0, %v2291
        %v2293 = vpop.f32.mrf.mxu0
        %v2294 = vpop.f32.mrf.mxu0
        %v2295 = vadd.f32 0.0, %v2294
        %v2296 = vpop.f32.mrf.mxu0
        %2297 = vmatprep.mubr.bf16.mxu0 0
        %2298 = vmatmul.mubr.bf16.gmra.mxu0 %v2227
        %v2299 = vpop.f32.mrf.mxu0
        %v2300 = vadd.f32 0.0, %v2299
        %v2301 = vpop.f32.mrf.mxu0
        %v2302 = vpop.f32.mrf.mxu0
        %v2303 = vadd.f32 0.0, %v2302
        %v2304 = vpop.f32.mrf.mxu0
        %2305 = vmatprep.mubr.bf16.mxu0 0
        %2306 = vmatmul.mubr.bf16.gmra.mxu0 %v2230
        %v2307 = vpop.f32.mrf.mxu0
        %v2308 = vadd.f32 0.0, %v2307
        %v2309 = vpop.f32.mrf.mxu0
        %v2310 = vpop.f32.mrf.mxu0
        %v2311 = vadd.f32 0.0, %v2310
        %v2312 = vpop.f32.mrf.mxu0
        %2313 = vmatprep.mubr.bf16.mxu0 0
        %2314 = vmatmul.mubr.bf16.gmra.mxu0 %v2233
        %v2315 = vpop.f32.mrf.mxu0
        %v2316 = vadd.f32 0.0, %v2315
        %v2317 = vpop.f32.mrf.mxu0
        %v2318 = vpop.f32.mrf.mxu0
        %v2319 = vadd.f32 0.0, %v2318
        %v2320 = vpop.f32.mrf.mxu0
        %2321 = vmatprep.mubr.bf16.mxu0 0
        %2322 = vmatmul.mubr.bf16.gmra.mxu0 %v2236
        %v2323 = vpop.f32.mrf.mxu0
        %v2324 = vadd.f32 0.0, %v2323
        %v2325 = vpop.f32.mrf.mxu0
        %v2326 = vpop.f32.mrf.mxu0
        %v2327 = vadd.f32 0.0, %v2326
        %v2328 = vpop.f32.mrf.mxu0
        %2329 = vmatprep.mubr.bf16.mxu0 0
        %2330 = vmatmul.mubr.bf16.gmra.mxu0 %v2239
        %v2331 = vpop.f32.mrf.mxu0
        %v2332 = vadd.f32 0.0, %v2331
        %v2333 = vpop.f32.mrf.mxu0
        %v2334 = vpop.f32.mrf.mxu0
        %v2335 = vadd.f32 0.0, %v2334
        %v2336 = vpop.f32.mrf.mxu0
        %2337 = vdwg.mxu0
        %v2339 = vsel %vm2216, %v2184, 0
        %v2342 = vsel %vm2216, %v2185, 0
        %v2345 = vsel %vm2216, %v2186, 0
        %v2348 = vsel %vm2216, %v2187, 0
        %v2351 = vsel %vm2216, %v2188, 0
        %v2354 = vsel %vm2216, %v2189, 0
        %v2357 = vsel %vm2216, %v2190, 0
        %v2360 = vsel %vm2216, %v2191, 0
        %2362 = vmatprep.subr.bf16.mxu0 0
        %2363 = vmatpush1.bf16.msra.mxu0 0
        %2364 = vmatprep.subr.bf16.mxu0 0
        %2365 = vmatpush1.bf16.msra.mxu0 0
        %2366 = vmatprep.subr.bf16.mxu0 0
        %2367 = vmatpush1.bf16.msra.mxu0 0
        %2368 = vmatprep.subr.bf16.mxu0 0
        %2369 = vmatpush1.bf16.msra.mxu0 0
        %2370 = vmatprep.subr.bf16.mxu0 0
        %2371 = vmatpush1.bf16.msra.mxu0 0
        %2372 = vmatprep.subr.bf16.mxu0 0
        %2373 = vmatpush1.bf16.msra.mxu0 0
        %2374 = vmatprep.subr.bf16.mxu0 0
        %2375 = vmatpush1.bf16.msra.mxu0 %v2135
        %2376 = vmatprep.subr.bf16.mxu0 0
        %2377 = vmatpush1.bf16.msra.mxu0 %v2134
        %2378 = vmatprep.subr.bf16.mxu0 0
        %2379 = vmatpush2.bf16.msra.mxu0 0
        %2380 = vmatprep.subr.bf16.mxu0 0
        %2381 = vmatpush2.bf16.msra.mxu0 0
        %2382 = vmatprep.subr.bf16.mxu0 0
        %2383 = vmatpush2.bf16.msra.mxu0 0
        %2384 = vmatprep.subr.bf16.mxu0 0
        %2385 = vmatpush2.bf16.msra.mxu0 0
        %2386 = vmatprep.subr.bf16.mxu0 0
        %2387 = vmatpush2.bf16.msra.mxu0 0
        %2388 = vmatprep.subr.bf16.mxu0 0
        %2389 = vmatpush2.bf16.msra.mxu0 0
        %2390 = vmatprep.subr.bf16.mxu0 0
        %2391 = vmatpush2.bf16.msra.mxu0 0
        %2392 = vmatprep.subr.bf16.mxu0 0
        %2393 = vmatpush2.bf16.msra.mxu0 0
        %2394 = vmatprep.mubr.bf16.mxu0 0
        %2395 = vmatmul.mubr.bf16.gmra.mxu0 %v2339
        %v2396 = vpop.f32.mrf.mxu0
        %v2397 = vadd.f32 %v2276, %v2396
        %v2398 = vpop.f32.mrf.mxu0
        %v2399 = vpop.f32.mrf.mxu0
        %v2400 = vadd.f32 %v2279, %v2399
        %v2401 = vpop.f32.mrf.mxu0
        %2402 = vmatprep.mubr.bf16.mxu0 0
        %2403 = vmatmul.mubr.bf16.gmra.mxu0 %v2342
        %v2404 = vpop.f32.mrf.mxu0
        %v2405 = vadd.f32 %v2284, %v2404
        %v2406 = vpop.f32.mrf.mxu0
        %v2407 = vpop.f32.mrf.mxu0
        %v2408 = vadd.f32 %v2287, %v2407
        %v2409 = vpop.f32.mrf.mxu0
        %2410 = vmatprep.mubr.bf16.mxu0 0
        %2411 = vmatmul.mubr.bf16.gmra.mxu0 %v2345
        %v2412 = vpop.f32.mrf.mxu0
        %v2413 = vadd.f32 %v2292, %v2412
        %v2414 = vpop.f32.mrf.mxu0
        %v2415 = vpop.f32.mrf.mxu0
        %v2416 = vadd.f32 %v2295, %v2415
        %v2417 = vpop.f32.mrf.mxu0
        %2418 = vmatprep.mubr.bf16.mxu0 0
        %2419 = vmatmul.mubr.bf16.gmra.mxu0 %v2348
        %v2420 = vpop.f32.mrf.mxu0
        %v2421 = vadd.f32 %v2300, %v2420
        %v2422 = vpop.f32.mrf.mxu0
        %v2423 = vpop.f32.mrf.mxu0
        %v2424 = vadd.f32 %v2303, %v2423
        %v2425 = vpop.f32.mrf.mxu0
        %2426 = vmatprep.mubr.bf16.mxu0 0
        %2427 = vmatmul.mubr.bf16.gmra.mxu0 %v2351
        %v2428 = vpop.f32.mrf.mxu0
        %v2429 = vadd.f32 %v2308, %v2428
        %v2430 = vpop.f32.mrf.mxu0
        %v2431 = vpop.f32.mrf.mxu0
        %v2432 = vadd.f32 %v2311, %v2431
        %v2433 = vpop.f32.mrf.mxu0
        %2434 = vmatprep.mubr.bf16.mxu0 0
        %2435 = vmatmul.mubr.bf16.gmra.mxu0 %v2354
        %v2436 = vpop.f32.mrf.mxu0
        %v2437 = vadd.f32 %v2316, %v2436
        %v2438 = vpop.f32.mrf.mxu0
        %v2439 = vpop.f32.mrf.mxu0
        %v2440 = vadd.f32 %v2319, %v2439
        %v2441 = vpop.f32.mrf.mxu0
        %2442 = vmatprep.mubr.bf16.mxu0 0
        %2443 = vmatmul.mubr.bf16.gmra.mxu0 %v2357
        %v2444 = vpop.f32.mrf.mxu0
        %v2445 = vadd.f32 %v2324, %v2444
        %v2446 = vpop.f32.mrf.mxu0
        %v2447 = vpop.f32.mrf.mxu0
        %v2448 = vadd.f32 %v2327, %v2447
        %v2449 = vpop.f32.mrf.mxu0
        %2450 = vmatprep.mubr.bf16.mxu0 0
        %2451 = vmatmul.mubr.bf16.gmra.mxu0 %v2360
        %v2452 = vpop.f32.mrf.mxu0
        %v2453 = vadd.f32 %v2332, %v2452
        %v2454 = vpop.f32.mrf.mxu0
        %v2455 = vpop.f32.mrf.mxu0
        %v2456 = vadd.f32 %v2335, %v2455
        %v2457 = vpop.f32.mrf.mxu0
        %2458 = vdwg.mxu0
        %2459 = vrot.lane.b32.xlu0 %v2184, 64
        %v2460 = vpop.permute.xlu0 %2459
        %2461 = vrot.lane.b32.xlu0 %v2185, 64
        %v2462 = vpop.permute.xlu0 %2461
        %2463 = vrot.lane.b32.xlu0 %v2186, 64
        %v2464 = vpop.permute.xlu0 %2463
        %2465 = vrot.lane.b32.xlu0 %v2187, 64
        %v2466 = vpop.permute.xlu0 %2465
        %2467 = vrot.lane.b32.xlu0 %v2188, 64
        %v2468 = vpop.permute.xlu0 %2467
        %2469 = vrot.lane.b32.xlu0 %v2189, 64
        %v2470 = vpop.permute.xlu0 %2469
        %2471 = vrot.lane.b32.xlu0 %v2190, 64
        %v2472 = vpop.permute.xlu0 %2471
        %2473 = vrot.lane.b32.xlu0 %v2191, 64
        %v2474 = vpop.permute.xlu0 %2473
        %2475 = vrot.lane.b32.xlu0 %v2134, 96
        %v2476 = vpop.permute.xlu0 %2475
        %2477 = vrot.lane.b32.xlu0 %v2135, 96
        %v2478 = vpop.permute.xlu0 %2477
        %v2482 = vsel %vm2216, %v2460, 0
        %v2485 = vsel %vm2216, %v2462, 0
        %v2488 = vsel %vm2216, %v2464, 0
        %v2491 = vsel %vm2216, %v2466, 0
        %v2494 = vsel %vm2216, %v2468, 0
        %v2497 = vsel %vm2216, %v2470, 0
        %v2500 = vsel %vm2216, %v2472, 0
        %v2503 = vsel %vm2216, %v2474, 0
        %2505 = vmatprep.subr.bf16.mxu0 0
        %2506 = vmatpush1.bf16.msra.mxu0 0
        %2507 = vmatprep.subr.bf16.mxu0 0
        %2508 = vmatpush1.bf16.msra.mxu0 0
        %2509 = vmatprep.subr.bf16.mxu0 0
        %2510 = vmatpush1.bf16.msra.mxu0 0
        %2511 = vmatprep.subr.bf16.mxu0 0
        %2512 = vmatpush1.bf16.msra.mxu0 0
        %2513 = vmatprep.subr.bf16.mxu0 0
        %2514 = vmatpush1.bf16.msra.mxu0 0
        %2515 = vmatprep.subr.bf16.mxu0 0
        %2516 = vmatpush1.bf16.msra.mxu0 0
        %2517 = vmatprep.subr.bf16.mxu0 0
        %2518 = vmatpush1.bf16.msra.mxu0 %v2478
        %2519 = vmatprep.subr.bf16.mxu0 0
        %2520 = vmatpush1.bf16.msra.mxu0 %v2476
        %2521 = vmatprep.subr.bf16.mxu0 0
        %2522 = vmatpush2.bf16.msra.mxu0 0
        %2523 = vmatprep.subr.bf16.mxu0 0
        %2524 = vmatpush2.bf16.msra.mxu0 0
        %2525 = vmatprep.subr.bf16.mxu0 0
        %2526 = vmatpush2.bf16.msra.mxu0 0
        %2527 = vmatprep.subr.bf16.mxu0 0
        %2528 = vmatpush2.bf16.msra.mxu0 0
        %2529 = vmatprep.subr.bf16.mxu0 0
        %2530 = vmatpush2.bf16.msra.mxu0 0
        %2531 = vmatprep.subr.bf16.mxu0 0
        %2532 = vmatpush2.bf16.msra.mxu0 0
        %2533 = vmatprep.subr.bf16.mxu0 0
        %2534 = vmatpush2.bf16.msra.mxu0 0
        %2535 = vmatprep.subr.bf16.mxu0 0
        %2536 = vmatpush2.bf16.msra.mxu0 0
        %2537 = vmatprep.mubr.bf16.mxu0 0
        %2538 = vmatmul.mubr.bf16.gmra.mxu0 %v2482
        %v2539 = vpop.f32.mrf.mxu0
        %v2540 = vadd.f32 0.0, %v2539
        %v2541 = vpop.f32.mrf.mxu0
        %v2542 = vpop.f32.mrf.mxu0
        %v2543 = vadd.f32 0.0, %v2542
        %v2544 = vpop.f32.mrf.mxu0
        %2545 = vmatprep.mubr.bf16.mxu0 0
        %2546 = vmatmul.mubr.bf16.gmra.mxu0 %v2485
        %v2547 = vpop.f32.mrf.mxu0
        %v2548 = vadd.f32 0.0, %v2547
        %v2549 = vpop.f32.mrf.mxu0
        %v2550 = vpop.f32.mrf.mxu0
        %v2551 = vadd.f32 0.0, %v2550
        %v2552 = vpop.f32.mrf.mxu0
        %2553 = vmatprep.mubr.bf16.mxu0 0
        %2554 = vmatmul.mubr.bf16.gmra.mxu0 %v2488
        %v2555 = vpop.f32.mrf.mxu0
        %v2556 = vadd.f32 0.0, %v2555
        %v2557 = vpop.f32.mrf.mxu0
        %v2558 = vpop.f32.mrf.mxu0
        %v2559 = vadd.f32 0.0, %v2558
        %v2560 = vpop.f32.mrf.mxu0
        %2561 = vmatprep.mubr.bf16.mxu0 0
        %2562 = vmatmul.mubr.bf16.gmra.mxu0 %v2491
        %v2563 = vpop.f32.mrf.mxu0
        %v2564 = vadd.f32 0.0, %v2563
        %v2565 = vpop.f32.mrf.mxu0
        %v2566 = vpop.f32.mrf.mxu0
        %v2567 = vadd.f32 0.0, %v2566
        %v2568 = vpop.f32.mrf.mxu0
        %2569 = vmatprep.mubr.bf16.mxu0 0
        %2570 = vmatmul.mubr.bf16.gmra.mxu0 %v2494
        %v2571 = vpop.f32.mrf.mxu0
        %v2572 = vadd.f32 0.0, %v2571
        %v2573 = vpop.f32.mrf.mxu0
        %v2574 = vpop.f32.mrf.mxu0
        %v2575 = vadd.f32 0.0, %v2574
        %v2576 = vpop.f32.mrf.mxu0
        %2577 = vmatprep.mubr.bf16.mxu0 0
        %2578 = vmatmul.mubr.bf16.gmra.mxu0 %v2497
        %v2579 = vpop.f32.mrf.mxu0
        %v2580 = vadd.f32 0.0, %v2579
        %v2581 = vpop.f32.mrf.mxu0
        %v2582 = vpop.f32.mrf.mxu0
        %v2583 = vadd.f32 0.0, %v2582
        %v2584 = vpop.f32.mrf.mxu0
        %2585 = vmatprep.mubr.bf16.mxu0 0
        %2586 = vmatmul.mubr.bf16.gmra.mxu0 %v2500
        %v2587 = vpop.f32.mrf.mxu0
        %v2588 = vadd.f32 0.0, %v2587
        %v2589 = vpop.f32.mrf.mxu0
        %v2590 = vpop.f32.mrf.mxu0
        %v2591 = vadd.f32 0.0, %v2590
        %v2592 = vpop.f32.mrf.mxu0
        %2593 = vmatprep.mubr.bf16.mxu0 0
        %2594 = vmatmul.mubr.bf16.gmra.mxu0 %v2503
        %v2595 = vpop.f32.mrf.mxu0
        %v2596 = vadd.f32 0.0, %v2595
        %v2597 = vpop.f32.mrf.mxu0
        %v2598 = vpop.f32.mrf.mxu0
        %v2599 = vadd.f32 0.0, %v2598
        %v2600 = vpop.f32.mrf.mxu0
        %2601 = vdwg.mxu0
        %v2602 = vadd.f32 %v2397, %v2540
        %v2603 = vadd.f32 %v2400, %v2543
        %v2604 = vadd.f32 %v2405, %v2548
        %v2605 = vadd.f32 %v2408, %v2551
        %v2606 = vadd.f32 %v2413, %v2556
        %v2607 = vadd.f32 %v2416, %v2559
        %v2608 = vadd.f32 %v2421, %v2564
        %v2609 = vadd.f32 %v2424, %v2567
        %v2610 = vadd.f32 %v2429, %v2572
        %v2611 = vadd.f32 %v2432, %v2575
        %v2612 = vadd.f32 %v2437, %v2580
        %v2613 = vadd.f32 %v2440, %v2583
        %v2614 = vadd.f32 %v2445, %v2588
        %v2615 = vadd.f32 %v2448, %v2591
        %v2616 = vadd.f32 %v2453, %v2596
        %v2617 = vadd.f32 %v2456, %v2599
        %2618 = vrot.lane.b32.xlu0 %v2184, 32
        %v2619 = vpop.permute.xlu0 %2618
        %2620 = vrot.lane.b32.xlu0 %v2185, 32
        %v2621 = vpop.permute.xlu0 %2620
        %2622 = vrot.lane.b32.xlu0 %v2186, 32
        %v2623 = vpop.permute.xlu0 %2622
        %2624 = vrot.lane.b32.xlu0 %v2187, 32
        %v2625 = vpop.permute.xlu0 %2624
        %2626 = vrot.lane.b32.xlu0 %v2188, 32
        %v2627 = vpop.permute.xlu0 %2626
        %2628 = vrot.lane.b32.xlu0 %v2189, 32
        %v2629 = vpop.permute.xlu0 %2628
        %2630 = vrot.lane.b32.xlu0 %v2190, 32
        %v2631 = vpop.permute.xlu0 %2630
        %2632 = vrot.lane.b32.xlu0 %v2191, 32
        %v2633 = vpop.permute.xlu0 %2632
        %2634 = vrot.lane.b32.xlu0 %v2134, 80
        %v2635 = vpop.permute.xlu0 %2634
        %2636 = vrot.lane.b32.xlu0 %v2135, 80
        %v2637 = vpop.permute.xlu0 %2636
        %v2641 = vsel %vm2216, %v2619, 0
        %v2644 = vsel %vm2216, %v2621, 0
        %v2647 = vsel %vm2216, %v2623, 0
        %v2650 = vsel %vm2216, %v2625, 0
        %v2653 = vsel %vm2216, %v2627, 0
        %v2656 = vsel %vm2216, %v2629, 0
        %v2659 = vsel %vm2216, %v2631, 0
        %v2662 = vsel %vm2216, %v2633, 0
        %2664 = vmatprep.subr.bf16.mxu0 0
        %2665 = vmatpush1.bf16.msra.mxu0 0
        %2666 = vmatprep.subr.bf16.mxu0 0
        %2667 = vmatpush1.bf16.msra.mxu0 0
        %2668 = vmatprep.subr.bf16.mxu0 0
        %2669 = vmatpush1.bf16.msra.mxu0 0
        %2670 = vmatprep.subr.bf16.mxu0 0
        %2671 = vmatpush1.bf16.msra.mxu0 0
        %2672 = vmatprep.subr.bf16.mxu0 0
        %2673 = vmatpush1.bf16.msra.mxu0 0
        %2674 = vmatprep.subr.bf16.mxu0 0
        %2675 = vmatpush1.bf16.msra.mxu0 0
        %2676 = vmatprep.subr.bf16.mxu0 0
        %2677 = vmatpush1.bf16.msra.mxu0 %v2637
        %2678 = vmatprep.subr.bf16.mxu0 0
        %2679 = vmatpush1.bf16.msra.mxu0 %v2635
        %2680 = vmatprep.subr.bf16.mxu0 0
        %2681 = vmatpush2.bf16.msra.mxu0 0
        %2682 = vmatprep.subr.bf16.mxu0 0
        %2683 = vmatpush2.bf16.msra.mxu0 0
        %2684 = vmatprep.subr.bf16.mxu0 0
        %2685 = vmatpush2.bf16.msra.mxu0 0
        %2686 = vmatprep.subr.bf16.mxu0 0
        %2687 = vmatpush2.bf16.msra.mxu0 0
        %2688 = vmatprep.subr.bf16.mxu0 0
        %2689 = vmatpush2.bf16.msra.mxu0 0
        %2690 = vmatprep.subr.bf16.mxu0 0
        %2691 = vmatpush2.bf16.msra.mxu0 0
        %2692 = vmatprep.subr.bf16.mxu0 0
        %2693 = vmatpush2.bf16.msra.mxu0 0
        %2694 = vmatprep.subr.bf16.mxu0 0
        %2695 = vmatpush2.bf16.msra.mxu0 0
        %2696 = vmatprep.mubr.bf16.mxu0 0
        %2697 = vmatmul.mubr.bf16.gmra.mxu0 %v2641
        %v2698 = vpop.f32.mrf.mxu0
        %v2699 = vadd.f32 0.0, %v2698
        %v2700 = vpop.f32.mrf.mxu0
        %v2701 = vpop.f32.mrf.mxu0
        %v2702 = vadd.f32 0.0, %v2701
        %v2703 = vpop.f32.mrf.mxu0
        %2704 = vmatprep.mubr.bf16.mxu0 0
        %2705 = vmatmul.mubr.bf16.gmra.mxu0 %v2644
        %v2706 = vpop.f32.mrf.mxu0
        %v2707 = vadd.f32 0.0, %v2706
        %v2708 = vpop.f32.mrf.mxu0
        %v2709 = vpop.f32.mrf.mxu0
        %v2710 = vadd.f32 0.0, %v2709
        %v2711 = vpop.f32.mrf.mxu0
        %2712 = vmatprep.mubr.bf16.mxu0 0
        %2713 = vmatmul.mubr.bf16.gmra.mxu0 %v2647
        %v2714 = vpop.f32.mrf.mxu0
        %v2715 = vadd.f32 0.0, %v2714
        %v2716 = vpop.f32.mrf.mxu0
        %v2717 = vpop.f32.mrf.mxu0
        %v2718 = vadd.f32 0.0, %v2717
        %v2719 = vpop.f32.mrf.mxu0
        %2720 = vmatprep.mubr.bf16.mxu0 0
        %2721 = vmatmul.mubr.bf16.gmra.mxu0 %v2650
        %v2722 = vpop.f32.mrf.mxu0
        %v2723 = vadd.f32 0.0, %v2722
        %v2724 = vpop.f32.mrf.mxu0
        %v2725 = vpop.f32.mrf.mxu0
        %v2726 = vadd.f32 0.0, %v2725
        %v2727 = vpop.f32.mrf.mxu0
        %2728 = vmatprep.mubr.bf16.mxu0 0
        %2729 = vmatmul.mubr.bf16.gmra.mxu0 %v2653
        %v2730 = vpop.f32.mrf.mxu0
        %v2731 = vadd.f32 0.0, %v2730
        %v2732 = vpop.f32.mrf.mxu0
        %v2733 = vpop.f32.mrf.mxu0
        %v2734 = vadd.f32 0.0, %v2733
        %v2735 = vpop.f32.mrf.mxu0
        %2736 = vmatprep.mubr.bf16.mxu0 0
        %2737 = vmatmul.mubr.bf16.gmra.mxu0 %v2656
        %v2738 = vpop.f32.mrf.mxu0
        %v2739 = vadd.f32 0.0, %v2738
        %v2740 = vpop.f32.mrf.mxu0
        %v2741 = vpop.f32.mrf.mxu0
        %v2742 = vadd.f32 0.0, %v2741
        %v2743 = vpop.f32.mrf.mxu0
        %2744 = vmatprep.mubr.bf16.mxu0 0
        %2745 = vmatmul.mubr.bf16.gmra.mxu0 %v2659
        %v2746 = vpop.f32.mrf.mxu0
        %v2747 = vadd.f32 0.0, %v2746
        %v2748 = vpop.f32.mrf.mxu0
        %v2749 = vpop.f32.mrf.mxu0
        %v2750 = vadd.f32 0.0, %v2749
        %v2751 = vpop.f32.mrf.mxu0
        %2752 = vmatprep.mubr.bf16.mxu0 0
        %2753 = vmatmul.mubr.bf16.gmra.mxu0 %v2662
        %v2754 = vpop.f32.mrf.mxu0
        %v2755 = vadd.f32 0.0, %v2754
        %v2756 = vpop.f32.mrf.mxu0
        %v2757 = vpop.f32.mrf.mxu0
        %v2758 = vadd.f32 0.0, %v2757
        %v2759 = vpop.f32.mrf.mxu0
        %2760 = vdwg.mxu0
        %v2761 = vadd.f32 %v2602, %v2699
        %v2762 = vadd.f32 %v2603, %v2702
        %v2763 = vadd.f32 %v2604, %v2707
        %v2764 = vadd.f32 %v2605, %v2710
        %v2765 = vadd.f32 %v2606, %v2715
        %v2766 = vadd.f32 %v2607, %v2718
        %v2767 = vadd.f32 %v2608, %v2723
        %v2768 = vadd.f32 %v2609, %v2726
        %v2769 = vadd.f32 %v2610, %v2731
        %v2770 = vadd.f32 %v2611, %v2734
        %v2771 = vadd.f32 %v2612, %v2739
        %v2772 = vadd.f32 %v2613, %v2742
        %v2773 = vadd.f32 %v2614, %v2747
        %v2774 = vadd.f32 %v2615, %v2750
        %v2775 = vadd.f32 %v2616, %v2755
        %v2776 = vadd.f32 %v2617, %v2758
        %v2777 = vld [vmem:[#allocation5 + $0x4] sm:$0xf]
        %v2778 = vld [vmem:[#allocation5 + $0xc] sm:$0xf]
        %v2779 = vld [vmem:[#allocation5 + $0x14] sm:$0xf]
        %v2780 = vld [vmem:[#allocation5 + $0x1c] sm:$0xf]
        %v2781 = vld [vmem:[#allocation5 + $0x24] sm:$0xf]
        %v2782 = vld [vmem:[#allocation5 + $0x2c] sm:$0xf]
        %v2783 = vld [vmem:[#allocation5 + $0x34] sm:$0xf]
        %v2784 = vld [vmem:[#allocation5 + $0x3c] sm:$0xf]
        %v2785 = vld [vmem:[#allocation5 + $0x44] sm:$0xf]
        %v2786 = vld [vmem:[#allocation5 + $0x4c] sm:$0xf]
        %v2787 = vld [vmem:[#allocation5 + $0x54] sm:$0xf]
        %v2788 = vld [vmem:[#allocation5 + $0x5c] sm:$0xf]
        %v2789 = vld [vmem:[#allocation5 + $0x64] sm:$0xf]
        %v2790 = vld [vmem:[#allocation5 + $0x6c] sm:$0xf]
        %v2791 = vld [vmem:[#allocation5 + $0x74] sm:$0xf]
        %v2792 = vld [vmem:[#allocation5 + $0x7c] sm:$0xf]
        %v2809 = vunpack.c.l.b16 %v2777
        %v2810 = vunpack.c.l.b16 %v2778
        %v2811 = vunpack.c.l.b16 %v2779
        %v2812 = vunpack.c.l.b16 %v2780
        %v2813 = vunpack.c.l.b16 %v2781
        %v2814 = vunpack.c.l.b16 %v2782
        %v2815 = vunpack.c.l.b16 %v2783
        %v2816 = vunpack.c.l.b16 %v2784
        %v2817 = vunpack.c.l.b16 %v2785
        %v2818 = vunpack.c.l.b16 %v2786
        %v2819 = vunpack.c.l.b16 %v2787
        %v2820 = vunpack.c.l.b16 %v2788
        %v2821 = vunpack.c.l.b16 %v2789
        %v2822 = vunpack.c.l.b16 %v2790
        %v2823 = vunpack.c.l.b16 %v2791
        %v2824 = vunpack.c.l.b16 %v2792
        %v2825 = vpack.c.b16 %v2810, %v2809
        %v2826 = vpack.c.b16 %v2812, %v2811
        %v2827 = vpack.c.b16 %v2814, %v2813
        %v2828 = vpack.c.b16 %v2816, %v2815
        %v2829 = vpack.c.b16 %v2818, %v2817
        %v2830 = vpack.c.b16 %v2820, %v2819
        %v2831 = vpack.c.b16 %v2822, %v2821
        %v2832 = vpack.c.b16 %v2824, %v2823
        %2833 = vrot.lane.b32.xlu0 %v2134, 64
        %v2834 = vpop.permute.xlu0 %2833
        %2835 = vrot.lane.b32.xlu0 %v2135, 64
        %v2836 = vpop.permute.xlu0 %2835
        %v2840 = vsel %vm2216, %v2825, 0
        %v2843 = vsel %vm2216, %v2826, 0
        %v2846 = vsel %vm2216, %v2827, 0
        %v2849 = vsel %vm2216, %v2828, 0
        %v2852 = vsel %vm2216, %v2829, 0
        %v2855 = vsel %vm2216, %v2830, 0
        %v2858 = vsel %vm2216, %v2831, 0
        %v2861 = vsel %vm2216, %v2832, 0
        %2863 = vmatprep.subr.bf16.mxu0 0
        %2864 = vmatpush1.bf16.msra.mxu0 0
        %2865 = vmatprep.subr.bf16.mxu0 0
        %2866 = vmatpush1.bf16.msra.mxu0 0
        %2867 = vmatprep.subr.bf16.mxu0 0
        %2868 = vmatpush1.bf16.msra.mxu0 0
        %2869 = vmatprep.subr.bf16.mxu0 0
        %2870 = vmatpush1.bf16.msra.mxu0 0
        %2871 = vmatprep.subr.bf16.mxu0 0
        %2872 = vmatpush1.bf16.msra.mxu0 0
        %2873 = vmatprep.subr.bf16.mxu0 0
        %2874 = vmatpush1.bf16.msra.mxu0 0
        %2875 = vmatprep.subr.bf16.mxu0 0
        %2876 = vmatpush1.bf16.msra.mxu0 %v2836
        %2877 = vmatprep.subr.bf16.mxu0 0
        %2878 = vmatpush1.bf16.msra.mxu0 %v2834
        %2879 = vmatprep.subr.bf16.mxu0 0
        %2880 = vmatpush2.bf16.msra.mxu0 0
        %2881 = vmatprep.subr.bf16.mxu0 0
        %2882 = vmatpush2.bf16.msra.mxu0 0
        %2883 = vmatprep.subr.bf16.mxu0 0
        %2884 = vmatpush2.bf16.msra.mxu0 0
        %2885 = vmatprep.subr.bf16.mxu0 0
        %2886 = vmatpush2.bf16.msra.mxu0 0
        %2887 = vmatprep.subr.bf16.mxu0 0
        %2888 = vmatpush2.bf16.msra.mxu0 0
        %2889 = vmatprep.subr.bf16.mxu0 0
        %2890 = vmatpush2.bf16.msra.mxu0 0
        %2891 = vmatprep.subr.bf16.mxu0 0
        %2892 = vmatpush2.bf16.msra.mxu0 0
        %2893 = vmatprep.subr.bf16.mxu0 0
        %2894 = vmatpush2.bf16.msra.mxu0 0
        %2895 = vmatprep.mubr.bf16.mxu0 0
        %2896 = vmatmul.mubr.bf16.gmra.mxu0 %v2840
        %v2897 = vpop.f32.mrf.mxu0
        %v2898 = vadd.f32 0.0, %v2897
        %v2899 = vpop.f32.mrf.mxu0
        %v2900 = vpop.f32.mrf.mxu0
        %v2901 = vadd.f32 0.0, %v2900
        %v2902 = vpop.f32.mrf.mxu0
        %2903 = vmatprep.mubr.bf16.mxu0 0
        %2904 = vmatmul.mubr.bf16.gmra.mxu0 %v2843
        %v2905 = vpop.f32.mrf.mxu0
        %v2906 = vadd.f32 0.0, %v2905
        %v2907 = vpop.f32.mrf.mxu0
        %v2908 = vpop.f32.mrf.mxu0
        %v2909 = vadd.f32 0.0, %v2908
        %v2910 = vpop.f32.mrf.mxu0
        %2911 = vmatprep.mubr.bf16.mxu0 0
        %2912 = vmatmul.mubr.bf16.gmra.mxu0 %v2846
        %v2913 = vpop.f32.mrf.mxu0
        %v2914 = vadd.f32 0.0, %v2913
        %v2915 = vpop.f32.mrf.mxu0
        %v2916 = vpop.f32.mrf.mxu0
        %v2917 = vadd.f32 0.0, %v2916
        %v2918 = vpop.f32.mrf.mxu0
        %2919 = vmatprep.mubr.bf16.mxu0 0
        %2920 = vmatmul.mubr.bf16.gmra.mxu0 %v2849
        %v2921 = vpop.f32.mrf.mxu0
        %v2922 = vadd.f32 0.0, %v2921
        %v2923 = vpop.f32.mrf.mxu0
        %v2924 = vpop.f32.mrf.mxu0
        %v2925 = vadd.f32 0.0, %v2924
        %v2926 = vpop.f32.mrf.mxu0
        %2927 = vmatprep.mubr.bf16.mxu0 0
        %2928 = vmatmul.mubr.bf16.gmra.mxu0 %v2852
        %v2929 = vpop.f32.mrf.mxu0
        %v2930 = vadd.f32 0.0, %v2929
        %v2931 = vpop.f32.mrf.mxu0
        %v2932 = vpop.f32.mrf.mxu0
        %v2933 = vadd.f32 0.0, %v2932
        %v2934 = vpop.f32.mrf.mxu0
        %2935 = vmatprep.mubr.bf16.mxu0 0
        %2936 = vmatmul.mubr.bf16.gmra.mxu0 %v2855
        %v2937 = vpop.f32.mrf.mxu0
        %v2938 = vadd.f32 0.0, %v2937
        %v2939 = vpop.f32.mrf.mxu0
        %v2940 = vpop.f32.mrf.mxu0
        %v2941 = vadd.f32 0.0, %v2940
        %v2942 = vpop.f32.mrf.mxu0
        %2943 = vmatprep.mubr.bf16.mxu0 0
        %2944 = vmatmul.mubr.bf16.gmra.mxu0 %v2858
        %v2945 = vpop.f32.mrf.mxu0
        %v2946 = vadd.f32 0.0, %v2945
        %v2947 = vpop.f32.mrf.mxu0
        %v2948 = vpop.f32.mrf.mxu0
        %v2949 = vadd.f32 0.0, %v2948
        %v2950 = vpop.f32.mrf.mxu0
        %2951 = vmatprep.mubr.bf16.mxu0 0
        %2952 = vmatmul.mubr.bf16.gmra.mxu0 %v2861
        %v2953 = vpop.f32.mrf.mxu0
        %v2954 = vadd.f32 0.0, %v2953
        %v2955 = vpop.f32.mrf.mxu0
        %v2956 = vpop.f32.mrf.mxu0
        %v2957 = vadd.f32 0.0, %v2956
        %v2958 = vpop.f32.mrf.mxu0
        %2959 = vdwg.mxu0
        %v2960 = vadd.f32 %v2761, %v2898
        %v2961 = vadd.f32 %v2762, %v2901
        %v2962 = vadd.f32 %v2763, %v2906
        %v2963 = vadd.f32 %v2764, %v2909
        %v2964 = vadd.f32 %v2765, %v2914
        %v2965 = vadd.f32 %v2766, %v2917
        %v2966 = vadd.f32 %v2767, %v2922
        %v2967 = vadd.f32 %v2768, %v2925
        %v2968 = vadd.f32 %v2769, %v2930
        %v2969 = vadd.f32 %v2770, %v2933
        %v2970 = vadd.f32 %v2771, %v2938
        %v2971 = vadd.f32 %v2772, %v2941
        %v2972 = vadd.f32 %v2773, %v2946
        %v2973 = vadd.f32 %v2774, %v2949
        %v2974 = vadd.f32 %v2775, %v2954
        %v2975 = vadd.f32 %v2776, %v2957
        %2976 = vrot.lane.b32.xlu0 %v2825, 96
        %v2977 = vpop.permute.xlu0 %2976
        %2978 = vrot.lane.b32.xlu0 %v2826, 96
        %v2979 = vpop.permute.xlu0 %2978
        %2980 = vrot.lane.b32.xlu0 %v2827, 96
        %v2981 = vpop.permute.xlu0 %2980
        %2982 = vrot.lane.b32.xlu0 %v2828, 96
        %v2983 = vpop.permute.xlu0 %2982
        %2984 = vrot.lane.b32.xlu0 %v2829, 96
        %v2985 = vpop.permute.xlu0 %2984
        %2986 = vrot.lane.b32.xlu0 %v2830, 96
        %v2987 = vpop.permute.xlu0 %2986
        %2988 = vrot.lane.b32.xlu0 %v2831, 96
        %v2989 = vpop.permute.xlu0 %2988
        %2990 = vrot.lane.b32.xlu0 %v2832, 96
        %v2991 = vpop.permute.xlu0 %2990
        %2992 = vrot.lane.b32.xlu0 %v2134, 48
        %v2993 = vpop.permute.xlu0 %2992
        %2994 = vrot.lane.b32.xlu0 %v2135, 48
        %v2995 = vpop.permute.xlu0 %2994
        %v2999 = vsel %vm2216, %v2977, 0
        %v3002 = vsel %vm2216, %v2979, 0
        %v3005 = vsel %vm2216, %v2981, 0
        %v3008 = vsel %vm2216, %v2983, 0
        %v3011 = vsel %vm2216, %v2985, 0
        %v3014 = vsel %vm2216, %v2987, 0
        %v3017 = vsel %vm2216, %v2989, 0
        %v3020 = vsel %vm2216, %v2991, 0
        %3022 = vmatprep.subr.bf16.mxu0 0
        %3023 = vmatpush1.bf16.msra.mxu0 0
        %3024 = vmatprep.subr.bf16.mxu0 0
        %3025 = vmatpush1.bf16.msra.mxu0 0
        %3026 = vmatprep.subr.bf16.mxu0 0
        %3027 = vmatpush1.bf16.msra.mxu0 0
        %3028 = vmatprep.subr.bf16.mxu0 0
        %3029 = vmatpush1.bf16.msra.mxu0 0
        %3030 = vmatprep.subr.bf16.mxu0 0
        %3031 = vmatpush1.bf16.msra.mxu0 0
        %3032 = vmatprep.subr.bf16.mxu0 0
        %3033 = vmatpush1.bf16.msra.mxu0 0
        %3034 = vmatprep.subr.bf16.mxu0 0
        %3035 = vmatpush1.bf16.msra.mxu0 %v2995
        %3036 = vmatprep.subr.bf16.mxu0 0
        %3037 = vmatpush1.bf16.msra.mxu0 %v2993
        %3038 = vmatprep.subr.bf16.mxu0 0
        %3039 = vmatpush2.bf16.msra.mxu0 0
        %3040 = vmatprep.subr.bf16.mxu0 0
        %3041 = vmatpush2.bf16.msra.mxu0 0
        %3042 = vmatprep.subr.bf16.mxu0 0
        %3043 = vmatpush2.bf16.msra.mxu0 0
        %3044 = vmatprep.subr.bf16.mxu0 0
        %3045 = vmatpush2.bf16.msra.mxu0 0
        %3046 = vmatprep.subr.bf16.mxu0 0
        %3047 = vmatpush2.bf16.msra.mxu0 0
        %3048 = vmatprep.subr.bf16.mxu0 0
        %3049 = vmatpush2.bf16.msra.mxu0 0
        %3050 = vmatprep.subr.bf16.mxu0 0
        %3051 = vmatpush2.bf16.msra.mxu0 0
        %3052 = vmatprep.subr.bf16.mxu0 0
        %3053 = vmatpush2.bf16.msra.mxu0 0
        %3054 = vmatprep.mubr.bf16.mxu0 0
        %3055 = vmatmul.mubr.bf16.gmra.mxu0 %v2999
        %v3056 = vpop.f32.mrf.mxu0
        %v3057 = vadd.f32 0.0, %v3056
        %v3058 = vpop.f32.mrf.mxu0
        %v3059 = vpop.f32.mrf.mxu0
        %v3060 = vadd.f32 0.0, %v3059
        %v3061 = vpop.f32.mrf.mxu0
        %3062 = vmatprep.mubr.bf16.mxu0 0
        %3063 = vmatmul.mubr.bf16.gmra.mxu0 %v3002
        %v3064 = vpop.f32.mrf.mxu0
        %v3065 = vadd.f32 0.0, %v3064
        %v3066 = vpop.f32.mrf.mxu0
        %v3067 = vpop.f32.mrf.mxu0
        %v3068 = vadd.f32 0.0, %v3067
        %v3069 = vpop.f32.mrf.mxu0
        %3070 = vmatprep.mubr.bf16.mxu0 0
        %3071 = vmatmul.mubr.bf16.gmra.mxu0 %v3005
        %v3072 = vpop.f32.mrf.mxu0
        %v3073 = vadd.f32 0.0, %v3072
        %v3074 = vpop.f32.mrf.mxu0
        %v3075 = vpop.f32.mrf.mxu0
        %v3076 = vadd.f32 0.0, %v3075
        %v3077 = vpop.f32.mrf.mxu0
        %3078 = vmatprep.mubr.bf16.mxu0 0
        %3079 = vmatmul.mubr.bf16.gmra.mxu0 %v3008
        %v3080 = vpop.f32.mrf.mxu0
        %v3081 = vadd.f32 0.0, %v3080
        %v3082 = vpop.f32.mrf.mxu0
        %v3083 = vpop.f32.mrf.mxu0
        %v3084 = vadd.f32 0.0, %v3083
        %v3085 = vpop.f32.mrf.mxu0
        %3086 = vmatprep.mubr.bf16.mxu0 0
        %3087 = vmatmul.mubr.bf16.gmra.mxu0 %v3011
        %v3088 = vpop.f32.mrf.mxu0
        %v3089 = vadd.f32 0.0, %v3088
        %v3090 = vpop.f32.mrf.mxu0
        %v3091 = vpop.f32.mrf.mxu0
        %v3092 = vadd.f32 0.0, %v3091
        %v3093 = vpop.f32.mrf.mxu0
        %3094 = vmatprep.mubr.bf16.mxu0 0
        %3095 = vmatmul.mubr.bf16.gmra.mxu0 %v3014
        %v3096 = vpop.f32.mrf.mxu0
        %v3097 = vadd.f32 0.0, %v3096
        %v3098 = vpop.f32.mrf.mxu0
        %v3099 = vpop.f32.mrf.mxu0
        %v3100 = vadd.f32 0.0, %v3099
        %v3101 = vpop.f32.mrf.mxu0
        %3102 = vmatprep.mubr.bf16.mxu0 0
        %3103 = vmatmul.mubr.bf16.gmra.mxu0 %v3017
        %v3104 = vpop.f32.mrf.mxu0
        %v3105 = vadd.f32 0.0, %v3104
        %v3106 = vpop.f32.mrf.mxu0
        %v3107 = vpop.f32.mrf.mxu0
        %v3108 = vadd.f32 0.0, %v3107
        %v3109 = vpop.f32.mrf.mxu0
        %3110 = vmatprep.mubr.bf16.mxu0 0
        %3111 = vmatmul.mubr.bf16.gmra.mxu0 %v3020
        %v3112 = vpop.f32.mrf.mxu0
        %v3113 = vadd.f32 0.0, %v3112
        %v3114 = vpop.f32.mrf.mxu0
        %v3115 = vpop.f32.mrf.mxu0
        %v3116 = vadd.f32 0.0, %v3115
        %v3117 = vpop.f32.mrf.mxu0
        %3118 = vdwg.mxu0
        %v3119 = vadd.f32 %v2960, %v3057
        %v3120 = vadd.f32 %v2961, %v3060
        %v3121 = vadd.f32 %v2962, %v3065
        %v3122 = vadd.f32 %v2963, %v3068
        %v3123 = vadd.f32 %v2964, %v3073
        %v3124 = vadd.f32 %v2965, %v3076
        %v3125 = vadd.f32 %v2966, %v3081
        %v3126 = vadd.f32 %v2967, %v3084
        %v3127 = vadd.f32 %v2968, %v3089
        %v3128 = vadd.f32 %v2969, %v3092
        %v3129 = vadd.f32 %v2970, %v3097
        %v3130 = vadd.f32 %v2971, %v3100
        %v3131 = vadd.f32 %v2972, %v3105
        %v3132 = vadd.f32 %v2973, %v3108
        %v3133 = vadd.f32 %v2974, %v3113
        %v3134 = vadd.f32 %v2975, %v3116
        %3135 = vrot.lane.b32.xlu0 %v2825, 64
        %v3136 = vpop.permute.xlu0 %3135
        %3137 = vrot.lane.b32.xlu0 %v2826, 64
        %v3138 = vpop.permute.xlu0 %3137
        %3139 = vrot.lane.b32.xlu0 %v2827, 64
        %v3140 = vpop.permute.xlu0 %3139
        %3141 = vrot.lane.b32.xlu0 %v2828, 64
        %v3142 = vpop.permute.xlu0 %3141
        %3143 = vrot.lane.b32.xlu0 %v2829, 64
        %v3144 = vpop.permute.xlu0 %3143
        %3145 = vrot.lane.b32.xlu0 %v2830, 64
        %v3146 = vpop.permute.xlu0 %3145
        %3147 = vrot.lane.b32.xlu0 %v2831, 64
        %v3148 = vpop.permute.xlu0 %3147
        %3149 = vrot.lane.b32.xlu0 %v2832, 64
        %v3150 = vpop.permute.xlu0 %3149
        %3151 = vrot.lane.b32.xlu0 %v2134, 32
        %v3152 = vpop.permute.xlu0 %3151
        %3153 = vrot.lane.b32.xlu0 %v2135, 32
        %v3154 = vpop.permute.xlu0 %3153
        %v3158 = vsel %vm2216, %v3136, 0
        %v3161 = vsel %vm2216, %v3138, 0
        %v3164 = vsel %vm2216, %v3140, 0
        %v3167 = vsel %vm2216, %v3142, 0
        %v3170 = vsel %vm2216, %v3144, 0
        %v3173 = vsel %vm2216, %v3146, 0
        %v3176 = vsel %vm2216, %v3148, 0
        %v3179 = vsel %vm2216, %v3150, 0
        %3181 = vmatprep.subr.bf16.mxu0 0
        %3182 = vmatpush1.bf16.msra.mxu0 0
        %3183 = vmatprep.subr.bf16.mxu0 0
        %3184 = vmatpush1.bf16.msra.mxu0 0
        %3185 = vmatprep.subr.bf16.mxu0 0
        %3186 = vmatpush1.bf16.msra.mxu0 0
        %3187 = vmatprep.subr.bf16.mxu0 0
        %3188 = vmatpush1.bf16.msra.mxu0 0
        %3189 = vmatprep.subr.bf16.mxu0 0
        %3190 = vmatpush1.bf16.msra.mxu0 0
        %3191 = vmatprep.subr.bf16.mxu0 0
        %3192 = vmatpush1.bf16.msra.mxu0 0
        %3193 = vmatprep.subr.bf16.mxu0 0
        %3194 = vmatpush1.bf16.msra.mxu0 %v3154
        %3195 = vmatprep.subr.bf16.mxu0 0
        %3196 = vmatpush1.bf16.msra.mxu0 %v3152
        %3197 = vmatprep.subr.bf16.mxu0 0
        %3198 = vmatpush2.bf16.msra.mxu0 0
        %3199 = vmatprep.subr.bf16.mxu0 0
        %3200 = vmatpush2.bf16.msra.mxu0 0
        %3201 = vmatprep.subr.bf16.mxu0 0
        %3202 = vmatpush2.bf16.msra.mxu0 0
        %3203 = vmatprep.subr.bf16.mxu0 0
        %3204 = vmatpush2.bf16.msra.mxu0 0
        %3205 = vmatprep.subr.bf16.mxu0 0
        %3206 = vmatpush2.bf16.msra.mxu0 0
        %3207 = vmatprep.subr.bf16.mxu0 0
        %3208 = vmatpush2.bf16.msra.mxu0 0
        %3209 = vmatprep.subr.bf16.mxu0 0
        %3210 = vmatpush2.bf16.msra.mxu0 0
        %3211 = vmatprep.subr.bf16.mxu0 0
        %3212 = vmatpush2.bf16.msra.mxu0 0
        %3213 = vmatprep.mubr.bf16.mxu0 0
        %3214 = vmatmul.mubr.bf16.gmra.mxu0 %v3158
        %v3215 = vpop.f32.mrf.mxu0
        %v3216 = vadd.f32 0.0, %v3215
        %v3217 = vpop.f32.mrf.mxu0
        %v3218 = vpop.f32.mrf.mxu0
        %v3219 = vadd.f32 0.0, %v3218
        %v3220 = vpop.f32.mrf.mxu0
        %3221 = vmatprep.mubr.bf16.mxu0 0
        %3222 = vmatmul.mubr.bf16.gmra.mxu0 %v3161
        %v3223 = vpop.f32.mrf.mxu0
        %v3224 = vadd.f32 0.0, %v3223
        %v3225 = vpop.f32.mrf.mxu0
        %v3226 = vpop.f32.mrf.mxu0
        %v3227 = vadd.f32 0.0, %v3226
        %v3228 = vpop.f32.mrf.mxu0
        %3229 = vmatprep.mubr.bf16.mxu0 0
        %3230 = vmatmul.mubr.bf16.gmra.mxu0 %v3164
        %v3231 = vpop.f32.mrf.mxu0
        %v3232 = vadd.f32 0.0, %v3231
        %v3233 = vpop.f32.mrf.mxu0
        %v3234 = vpop.f32.mrf.mxu0
        %v3235 = vadd.f32 0.0, %v3234
        %v3236 = vpop.f32.mrf.mxu0
        %3237 = vmatprep.mubr.bf16.mxu0 0
        %3238 = vmatmul.mubr.bf16.gmra.mxu0 %v3167
        %v3239 = vpop.f32.mrf.mxu0
        %v3240 = vadd.f32 0.0, %v3239
        %v3241 = vpop.f32.mrf.mxu0
        %v3242 = vpop.f32.mrf.mxu0
        %v3243 = vadd.f32 0.0, %v3242
        %v3244 = vpop.f32.mrf.mxu0
        %3245 = vmatprep.mubr.bf16.mxu0 0
        %3246 = vmatmul.mubr.bf16.gmra.mxu0 %v3170
        %v3247 = vpop.f32.mrf.mxu0
        %v3248 = vadd.f32 0.0, %v3247
        %v3249 = vpop.f32.mrf.mxu0
        %v3250 = vpop.f32.mrf.mxu0
        %v3251 = vadd.f32 0.0, %v3250
        %v3252 = vpop.f32.mrf.mxu0
        %3253 = vmatprep.mubr.bf16.mxu0 0
        %3254 = vmatmul.mubr.bf16.gmra.mxu0 %v3173
        %v3255 = vpop.f32.mrf.mxu0
        %v3256 = vadd.f32 0.0, %v3255
        %v3257 = vpop.f32.mrf.mxu0
        %v3258 = vpop.f32.mrf.mxu0
        %v3259 = vadd.f32 0.0, %v3258
        %v3260 = vpop.f32.mrf.mxu0
        %3261 = vmatprep.mubr.bf16.mxu0 0
        %3262 = vmatmul.mubr.bf16.gmra.mxu0 %v3176
        %v3263 = vpop.f32.mrf.mxu0
        %v3264 = vadd.f32 0.0, %v3263
        %v3265 = vpop.f32.mrf.mxu0
        %v3266 = vpop.f32.mrf.mxu0
        %v3267 = vadd.f32 0.0, %v3266
        %v3268 = vpop.f32.mrf.mxu0
        %3269 = vmatprep.mubr.bf16.mxu0 0
        %3270 = vmatmul.mubr.bf16.gmra.mxu0 %v3179
        %v3271 = vpop.f32.mrf.mxu0
        %v3272 = vadd.f32 0.0, %v3271
        %v3273 = vpop.f32.mrf.mxu0
        %v3274 = vpop.f32.mrf.mxu0
        %v3275 = vadd.f32 0.0, %v3274
        %v3276 = vpop.f32.mrf.mxu0
        %3277 = vdwg.mxu0
        %v3278 = vadd.f32 %v3119, %v3216
        %v3279 = vadd.f32 %v3120, %v3219
        %v3280 = vadd.f32 %v3121, %v3224
        %v3281 = vadd.f32 %v3122, %v3227
        %v3282 = vadd.f32 %v3123, %v3232
        %v3283 = vadd.f32 %v3124, %v3235
        %v3284 = vadd.f32 %v3125, %v3240
        %v3285 = vadd.f32 %v3126, %v3243
        %v3286 = vadd.f32 %v3127, %v3248
        %v3287 = vadd.f32 %v3128, %v3251
        %v3288 = vadd.f32 %v3129, %v3256
        %v3289 = vadd.f32 %v3130, %v3259
        %v3290 = vadd.f32 %v3131, %v3264
        %v3291 = vadd.f32 %v3132, %v3267
        %v3292 = vadd.f32 %v3133, %v3272
        %v3293 = vadd.f32 %v3134, %v3275
        %3294 = vrot.lane.b32.xlu0 %v2825, 32
        %v3295 = vpop.permute.xlu0 %3294
        %3296 = vrot.lane.b32.xlu0 %v2826, 32
        %v3297 = vpop.permute.xlu0 %3296
        %3298 = vrot.lane.b32.xlu0 %v2827, 32
        %v3299 = vpop.permute.xlu0 %3298
        %3300 = vrot.lane.b32.xlu0 %v2828, 32
        %v3301 = vpop.permute.xlu0 %3300
        %3302 = vrot.lane.b32.xlu0 %v2829, 32
        %v3303 = vpop.permute.xlu0 %3302
        %3304 = vrot.lane.b32.xlu0 %v2830, 32
        %v3305 = vpop.permute.xlu0 %3304
        %3306 = vrot.lane.b32.xlu0 %v2831, 32
        %v3307 = vpop.permute.xlu0 %3306
        %3308 = vrot.lane.b32.xlu0 %v2832, 32
        %v3309 = vpop.permute.xlu0 %3308
        %3310 = vrot.lane.b32.xlu0 %v2134, 16
        %v3311 = vpop.permute.xlu0 %3310
        %3312 = vrot.lane.b32.xlu0 %v2135, 16
        %v3313 = vpop.permute.xlu0 %3312
        %v3317 = vsel %vm2216, %v3295, 0
        %v3320 = vsel %vm2216, %v3297, 0
        %v3323 = vsel %vm2216, %v3299, 0
        %v3326 = vsel %vm2216, %v3301, 0
        %v3329 = vsel %vm2216, %v3303, 0
        %v3332 = vsel %vm2216, %v3305, 0
        %v3335 = vsel %vm2216, %v3307, 0
        %v3338 = vsel %vm2216, %v3309, 0
        %3340 = vmatprep.subr.bf16.mxu0 0
        %3341 = vmatpush1.bf16.msra.mxu0 0
        %3342 = vmatprep.subr.bf16.mxu0 0
        %3343 = vmatpush1.bf16.msra.mxu0 0
        %3344 = vmatprep.subr.bf16.mxu0 0
        %3345 = vmatpush1.bf16.msra.mxu0 0
        %3346 = vmatprep.subr.bf16.mxu0 0
        %3347 = vmatpush1.bf16.msra.mxu0 0
        %3348 = vmatprep.subr.bf16.mxu0 0
        %3349 = vmatpush1.bf16.msra.mxu0 0
        %3350 = vmatprep.subr.bf16.mxu0 0
        %3351 = vmatpush1.bf16.msra.mxu0 0
        %3352 = vmatprep.subr.bf16.mxu0 0
        %3353 = vmatpush1.bf16.msra.mxu0 %v3313
        %3354 = vmatprep.subr.bf16.mxu0 0
        %3355 = vmatpush1.bf16.msra.mxu0 %v3311
        %3356 = vmatprep.subr.bf16.mxu0 0
        %3357 = vmatpush2.bf16.msra.mxu0 0
        %3358 = vmatprep.subr.bf16.mxu0 0
        %3359 = vmatpush2.bf16.msra.mxu0 0
        %3360 = vmatprep.subr.bf16.mxu0 0
        %3361 = vmatpush2.bf16.msra.mxu0 0
        %3362 = vmatprep.subr.bf16.mxu0 0
        %3363 = vmatpush2.bf16.msra.mxu0 0
        %3364 = vmatprep.subr.bf16.mxu0 0
        %3365 = vmatpush2.bf16.msra.mxu0 0
        %3366 = vmatprep.subr.bf16.mxu0 0
        %3367 = vmatpush2.bf16.msra.mxu0 0
        %3368 = vmatprep.subr.bf16.mxu0 0
        %3369 = vmatpush2.bf16.msra.mxu0 0
        %3370 = vmatprep.subr.bf16.mxu0 0
        %3371 = vmatpush2.bf16.msra.mxu0 0
        %3372 = vmatprep.mubr.bf16.mxu0 0
        %3373 = vmatmul.mubr.bf16.gmra.mxu0 %v3317
        %v3374 = vpop.f32.mrf.mxu0
        %v3375 = vadd.f32 0.0, %v3374
        %v3376 = vpop.f32.mrf.mxu0
        %v3377 = vpop.f32.mrf.mxu0
        %v3378 = vadd.f32 0.0, %v3377
        %v3379 = vpop.f32.mrf.mxu0
        %3380 = vmatprep.mubr.bf16.mxu0 0
        %3381 = vmatmul.mubr.bf16.gmra.mxu0 %v3320
        %v3382 = vpop.f32.mrf.mxu0
        %v3383 = vadd.f32 0.0, %v3382
        %v3384 = vpop.f32.mrf.mxu0
        %v3385 = vpop.f32.mrf.mxu0
        %v3386 = vadd.f32 0.0, %v3385
        %v3387 = vpop.f32.mrf.mxu0
        %3388 = vmatprep.mubr.bf16.mxu0 0
        %3389 = vmatmul.mubr.bf16.gmra.mxu0 %v3323
        %v3390 = vpop.f32.mrf.mxu0
        %v3391 = vadd.f32 0.0, %v3390
        %v3392 = vpop.f32.mrf.mxu0
        %v3393 = vpop.f32.mrf.mxu0
        %v3394 = vadd.f32 0.0, %v3393
        %v3395 = vpop.f32.mrf.mxu0
        %3396 = vmatprep.mubr.bf16.mxu0 0
        %3397 = vmatmul.mubr.bf16.gmra.mxu0 %v3326
        %v3398 = vpop.f32.mrf.mxu0
        %v3399 = vadd.f32 0.0, %v3398
        %v3400 = vpop.f32.mrf.mxu0
        %v3401 = vpop.f32.mrf.mxu0
        %v3402 = vadd.f32 0.0, %v3401
        %v3403 = vpop.f32.mrf.mxu0
        %3404 = vmatprep.mubr.bf16.mxu0 0
        %3405 = vmatmul.mubr.bf16.gmra.mxu0 %v3329
        %v3406 = vpop.f32.mrf.mxu0
        %v3407 = vadd.f32 0.0, %v3406
        %v3408 = vpop.f32.mrf.mxu0
        %v3409 = vpop.f32.mrf.mxu0
        %v3410 = vadd.f32 0.0, %v3409
        %v3411 = vpop.f32.mrf.mxu0
        %3412 = vmatprep.mubr.bf16.mxu0 0
        %3413 = vmatmul.mubr.bf16.gmra.mxu0 %v3332
        %v3414 = vpop.f32.mrf.mxu0
        %v3415 = vadd.f32 0.0, %v3414
        %v3416 = vpop.f32.mrf.mxu0
        %v3417 = vpop.f32.mrf.mxu0
        %v3418 = vadd.f32 0.0, %v3417
        %v3419 = vpop.f32.mrf.mxu0
        %3420 = vmatprep.mubr.bf16.mxu0 0
        %3421 = vmatmul.mubr.bf16.gmra.mxu0 %v3335
        %v3422 = vpop.f32.mrf.mxu0
        %v3423 = vadd.f32 0.0, %v3422
        %v3424 = vpop.f32.mrf.mxu0
        %v3425 = vpop.f32.mrf.mxu0
        %v3426 = vadd.f32 0.0, %v3425
        %v3427 = vpop.f32.mrf.mxu0
        %3428 = vmatprep.mubr.bf16.mxu0 0
        %3429 = vmatmul.mubr.bf16.gmra.mxu0 %v3338
        %v3430 = vpop.f32.mrf.mxu0
        %v3431 = vadd.f32 0.0, %v3430
        %v3432 = vpop.f32.mrf.mxu0
        %v3433 = vpop.f32.mrf.mxu0
        %v3434 = vadd.f32 0.0, %v3433
        %v3435 = vpop.f32.mrf.mxu0
        %3436 = vdwg.mxu0
        %v3437 = vadd.f32 %v3278, %v3375
        %v3438 = vadd.f32 %v3279, %v3378
        %v3439 = vadd.f32 %v3280, %v3383
        %v3440 = vadd.f32 %v3281, %v3386
        %v3441 = vadd.f32 %v3282, %v3391
        %v3442 = vadd.f32 %v3283, %v3394
        %v3443 = vadd.f32 %v3284, %v3399
        %v3444 = vadd.f32 %v3285, %v3402
        %v3445 = vadd.f32 %v3286, %v3407
        %v3446 = vadd.f32 %v3287, %v3410
        %v3447 = vadd.f32 %v3288, %v3415
        %v3448 = vadd.f32 %v3289, %v3418
        %v3449 = vadd.f32 %v3290, %v3423
        %v3450 = vadd.f32 %v3291, %v3426
        %v3451 = vadd.f32 %v3292, %v3431
        %v3452 = vadd.f32 %v3293, %v3434
        %v3453 = vld [vmem:[%s6 + $0x38] sm:$0xff]
        %v3454 = vld [vmem:[%s6 + $0x40] sm:$0xff]
        %v3455 = vld [vmem:[%s6 + $0x48] sm:$0xff]
        %v3456 = vld [vmem:[%s6 + $0x50] sm:$0xff]
        %v3457 = vld [vmem:[%s6 + $0x58] sm:$0xff]
        %v3458 = vld [vmem:[%s6 + $0x60] sm:$0xff]
        %v3459 = vld [vmem:[%s6 + $0x68] sm:$0xff]
        %v3460 = vld [vmem:[%s6 + $0x70] sm:$0xff]
        %v3461 = vld [vmem:[%s6 + $0x78] sm:$0xff]
        %v3462 = vld [vmem:[%s6 + $0x80] sm:$0xff]
        %v3463 = vld [vmem:[%s6 + $0x88] sm:$0xff]
        %v3464 = vld [vmem:[%s6 + $0x90] sm:$0xff]
        %v3465 = vld [vmem:[%s6 + $0x98] sm:$0xff]
        %v3466 = vld [vmem:[%s6 + $0xa0] sm:$0xff]
        %v3467 = vld [vmem:[%s6 + $0xa8] sm:$0xff]
        %v3468 = vld [vmem:[%s6 + $0xb0] sm:$0xff]
        %3470 = vset.pattern.permute.xlu0 0
        %3471 = vperm.xlu0 %3470, %v3453
        %v3472 = vpop.permute.xlu0 %3471
        %3475 = vset.pattern.permute.xlu0 0
        %3476 = vperm.xlu0 %3475, %v3454
        %v3477 = vpop.permute.xlu0 %3476
        %3480 = vset.pattern.permute.xlu0 0
        %3481 = vperm.xlu0 %3480, %v3455
        %v3482 = vpop.permute.xlu0 %3481
        %3485 = vset.pattern.permute.xlu0 0
        %3486 = vperm.xlu0 %3485, %v3456
        %v3487 = vpop.permute.xlu0 %3486
        %3490 = vset.pattern.permute.xlu0 0
        %3491 = vperm.xlu0 %3490, %v3457
        %v3492 = vpop.permute.xlu0 %3491
        %3495 = vset.pattern.permute.xlu0 0
        %3496 = vperm.xlu0 %3495, %v3458
        %v3497 = vpop.permute.xlu0 %3496
        %3500 = vset.pattern.permute.xlu0 0
        %3501 = vperm.xlu0 %3500, %v3459
        %v3502 = vpop.permute.xlu0 %3501
        %3505 = vset.pattern.permute.xlu0 0
        %3506 = vperm.xlu0 %3505, %v3460
        %v3507 = vpop.permute.xlu0 %3506
        %3510 = vset.pattern.permute.xlu0 0
        %3511 = vperm.xlu0 %3510, %v3461
        %v3512 = vpop.permute.xlu0 %3511
        %3515 = vset.pattern.permute.xlu0 0
        %3516 = vperm.xlu0 %3515, %v3462
        %v3517 = vpop.permute.xlu0 %3516
        %3520 = vset.pattern.permute.xlu0 0
        %3521 = vperm.xlu0 %3520, %v3463
        %v3522 = vpop.permute.xlu0 %3521
        %3525 = vset.pattern.permute.xlu0 0
        %3526 = vperm.xlu0 %3525, %v3464
        %v3527 = vpop.permute.xlu0 %3526
        %3530 = vset.pattern.permute.xlu0 0
        %3531 = vperm.xlu0 %3530, %v3465
        %v3532 = vpop.permute.xlu0 %3531
        %3535 = vset.pattern.permute.xlu0 0
        %3536 = vperm.xlu0 %3535, %v3466
        %v3537 = vpop.permute.xlu0 %3536
        %3540 = vset.pattern.permute.xlu0 0
        %3541 = vperm.xlu0 %3540, %v3467
        %v3542 = vpop.permute.xlu0 %3541
        %3545 = vset.pattern.permute.xlu0 0
        %3546 = vperm.xlu0 %3545, %v3468
        %v3547 = vpop.permute.xlu0 %3546
        %v3549 = vadd.f32 %v3437, %v3472
        %v3550 = vadd.f32 %v3438, %v3477
        %v3551 = vadd.f32 %v3439, %v3482
        %v3552 = vadd.f32 %v3440, %v3487
        %v3553 = vadd.f32 %v3441, %v3492
        %v3554 = vadd.f32 %v3442, %v3497
        %v3555 = vadd.f32 %v3443, %v3502
        %v3556 = vadd.f32 %v3444, %v3507
        %v3557 = vadd.f32 %v3445, %v3512
        %v3558 = vadd.f32 %v3446, %v3517
        %v3559 = vadd.f32 %v3447, %v3522
        %v3560 = vadd.f32 %v3448, %v3527
        %v3561 = vadd.f32 %v3449, %v3532
        %v3562 = vadd.f32 %v3450, %v3537
        %v3563 = vadd.f32 %v3451, %v3542
        %v3564 = vadd.f32 %v3452, %v3547
        %v3565 = vmax.f32 %v3549, 0.0
        %v3566 = vmax.f32 %v3550, 0.0
        %v3567 = vmax.f32 %v3551, 0.0
        %v3568 = vmax.f32 %v3552, 0.0
        %v3569 = vmax.f32 %v3553, 0.0
        %v3570 = vmax.f32 %v3554, 0.0
        %v3571 = vmax.f32 %v3555, 0.0
        %v3572 = vmax.f32 %v3556, 0.0
        %v3573 = vmax.f32 %v3557, 0.0
        %v3574 = vmax.f32 %v3558, 0.0
        %v3575 = vmax.f32 %v3559, 0.0
        %v3576 = vmax.f32 %v3560, 0.0
        %v3577 = vmax.f32 %v3561, 0.0
        %v3578 = vmax.f32 %v3562, 0.0
        %v3579 = vmax.f32 %v3563, 0.0
        %v3580 = vmax.f32 %v3564, 0.0
        %v3581 = vld [vmem:[%s6 + $0xb8] sm:$0xff]
        %v3582 = vld [vmem:[%s6 + $0xc0] sm:$0xff]
        %v3583 = vld [vmem:[%s6 + $0xc8] sm:$0xff]
        %v3584 = vld [vmem:[%s6 + $0xd0] sm:$0xff]
        %v3585 = vld [vmem:[%s6 + $0xd8] sm:$0xff]
        %v3586 = vld [vmem:[%s6 + $0xe0] sm:$0xff]
        %v3587 = vld [vmem:[%s6 + $0xe8] sm:$0xff]
        %v3588 = vld [vmem:[%s6 + $0xf0] sm:$0xff]
        %v3589 = vld [vmem:[%s6 + $0xf8] sm:$0xff]
        %v3590 = vld [vmem:[%s6 + $0x100] sm:$0xff]
        %v3591 = vld [vmem:[%s6 + $0x108] sm:$0xff]
        %v3592 = vld [vmem:[%s6 + $0x110] sm:$0xff]
        %v3593 = vld [vmem:[%s6 + $0x118] sm:$0xff]
        %v3594 = vld [vmem:[%s6 + $0x120] sm:$0xff]
        %v3595 = vld [vmem:[%s6 + $0x128] sm:$0xff]
        %v3596 = vld [vmem:[%s6 + $0x130] sm:$0xff]
        %v3597 = vld [vmem:[%s5] sm:$0xf]
        %v3598 = vld [vmem:[%s5 + $0x4] sm:$0xf]
        %v3599 = vld [vmem:[%s5 + $0x8] sm:$0xf]
        %v3600 = vld [vmem:[%s5 + $0xc] sm:$0xf]
        %v3601 = vld [vmem:[%s5 + $0x10] sm:$0xf]
        %v3602 = vld [vmem:[%s5 + $0x14] sm:$0xf]
        %v3603 = vld [vmem:[%s5 + $0x18] sm:$0xf]
        %v3604 = vld [vmem:[%s5 + $0x1c] sm:$0xf]
        %v3605 = vld [vmem:[%s5 + $0x20] sm:$0xf]
        %v3606 = vld [vmem:[%s5 + $0x24] sm:$0xf]
        %v3607 = vld [vmem:[%s5 + $0x28] sm:$0xf]
        %v3608 = vld [vmem:[%s5 + $0x2c] sm:$0xf]
        %v3609 = vld [vmem:[%s5 + $0x30] sm:$0xf]
        %v3610 = vld [vmem:[%s5 + $0x34] sm:$0xf]
        %v3611 = vld [vmem:[%s5 + $0x38] sm:$0xf]
        %v3612 = vld [vmem:[%s5 + $0x3c] sm:$0xf]
        %v3613 = vpack.c.bf16 %v3566, %v3565
        %v3614 = vpack.c.bf16 %v3568, %v3567
        %v3615 = vpack.c.bf16 %v3570, %v3569
        %v3616 = vpack.c.bf16 %v3572, %v3571
        %v3617 = vpack.c.bf16 %v3574, %v3573
        %v3618 = vpack.c.bf16 %v3576, %v3575
        %v3619 = vpack.c.bf16 %v3578, %v3577
        %v3620 = vpack.c.bf16 %v3580, %v3579
        %3622 = vset.pattern.permute.xlu0 0
        %3623 = vperm.xlu0 %3622, %v3581
        %v3624 = vpop.permute.xlu0 %3623
        %3627 = vset.pattern.permute.xlu0 0
        %3628 = vperm.xlu0 %3627, %v3582
        %v3629 = vpop.permute.xlu0 %3628
        %3632 = vset.pattern.permute.xlu0 0
        %3633 = vperm.xlu0 %3632, %v3583
        %v3634 = vpop.permute.xlu0 %3633
        %3637 = vset.pattern.permute.xlu0 0
        %3638 = vperm.xlu0 %3637, %v3584
        %v3639 = vpop.permute.xlu0 %3638
        %3642 = vset.pattern.permute.xlu0 0
        %3643 = vperm.xlu0 %3642, %v3585
        %v3644 = vpop.permute.xlu0 %3643
        %3647 = vset.pattern.permute.xlu0 0
        %3648 = vperm.xlu0 %3647, %v3586
        %v3649 = vpop.permute.xlu0 %3648
        %3652 = vset.pattern.permute.xlu0 0
        %3653 = vperm.xlu0 %3652, %v3587
        %v3654 = vpop.permute.xlu0 %3653
        %3657 = vset.pattern.permute.xlu0 0
        %3658 = vperm.xlu0 %3657, %v3588
        %v3659 = vpop.permute.xlu0 %3658
        %3662 = vset.pattern.permute.xlu0 0
        %3663 = vperm.xlu0 %3662, %v3589
        %v3664 = vpop.permute.xlu0 %3663
        %3667 = vset.pattern.permute.xlu0 0
        %3668 = vperm.xlu0 %3667, %v3590
        %v3669 = vpop.permute.xlu0 %3668
        %3672 = vset.pattern.permute.xlu0 0
        %3673 = vperm.xlu0 %3672, %v3591
        %v3674 = vpop.permute.xlu0 %3673
        %3677 = vset.pattern.permute.xlu0 0
        %3678 = vperm.xlu0 %3677, %v3592
        %v3679 = vpop.permute.xlu0 %3678
        %3682 = vset.pattern.permute.xlu0 0
        %3683 = vperm.xlu0 %3682, %v3593
        %v3684 = vpop.permute.xlu0 %3683
        %3687 = vset.pattern.permute.xlu0 0
        %3688 = vperm.xlu0 %3687, %v3594
        %v3689 = vpop.permute.xlu0 %3688
        %3692 = vset.pattern.permute.xlu0 0
        %3693 = vperm.xlu0 %3692, %v3595
        %v3694 = vpop.permute.xlu0 %3693
        %3697 = vset.pattern.permute.xlu0 0
        %3698 = vperm.xlu0 %3697, %v3596
        %v3699 = vpop.permute.xlu0 %3698
        %v3717 = vunpack.c.l.b16 %v3597
        %v3718 = vunpack.c.l.b16 %v3598
        %v3719 = vunpack.c.l.b16 %v3599
        %v3720 = vunpack.c.l.b16 %v3600
        %v3721 = vunpack.c.l.b16 %v3601
        %v3722 = vunpack.c.l.b16 %v3602
        %v3723 = vunpack.c.l.b16 %v3603
        %v3724 = vunpack.c.l.b16 %v3604
        %v3725 = vunpack.c.l.b16 %v3605
        %v3726 = vunpack.c.l.b16 %v3606
        %v3727 = vunpack.c.l.b16 %v3607
        %v3728 = vunpack.c.l.b16 %v3608
        %v3729 = vunpack.c.l.b16 %v3609
        %v3730 = vunpack.c.l.b16 %v3610
        %v3731 = vunpack.c.l.b16 %v3611
        %v3732 = vunpack.c.l.b16 %v3612
        %v3733 = vpack.c.b16 %v3718, %v3717
        %v3734 = vpack.c.b16 %v3720, %v3719
        %v3735 = vpack.c.b16 %v3722, %v3721
        %v3736 = vpack.c.b16 %v3724, %v3723
        %v3737 = vpack.c.b16 %v3726, %v3725
        %v3738 = vpack.c.b16 %v3728, %v3727
        %v3739 = vpack.c.b16 %v3730, %v3729
        %v3740 = vpack.c.b16 %v3732, %v3731
        %3749 = vmatprep.subr.bf16.mxu0 0
        %3750 = vmatpush1.bf16.msra.mxu0 %v3620
        %3751 = vmatprep.subr.bf16.mxu0 0
        %3752 = vmatpush1.bf16.msra.mxu0 %v3619
        %3753 = vmatprep.subr.bf16.mxu0 0
        %3754 = vmatpush1.bf16.msra.mxu0 %v3618
        %3755 = vmatprep.subr.bf16.mxu0 0
        %3756 = vmatpush1.bf16.msra.mxu0 %v3617
        %3757 = vmatprep.subr.bf16.mxu0 0
        %3758 = vmatpush1.bf16.msra.mxu0 %v3616
        %3759 = vmatprep.subr.bf16.mxu0 0
        %3760 = vmatpush1.bf16.msra.mxu0 %v3615
        %3761 = vmatprep.subr.bf16.mxu0 0
        %3762 = vmatpush1.bf16.msra.mxu0 %v3614
        %3763 = vmatprep.subr.bf16.mxu0 0
        %3764 = vmatpush1.bf16.msra.mxu0 %v3613
        %3765 = vmatprep.subr.bf16.mxu0 0
        %3766 = vmatpush2.bf16.msra.mxu0 0
        %3767 = vmatprep.subr.bf16.mxu0 0
        %3768 = vmatpush2.bf16.msra.mxu0 0
        %3769 = vmatprep.subr.bf16.mxu0 0
        %3770 = vmatpush2.bf16.msra.mxu0 0
        %3771 = vmatprep.subr.bf16.mxu0 0
        %3772 = vmatpush2.bf16.msra.mxu0 0
        %3773 = vmatprep.subr.bf16.mxu0 0
        %3774 = vmatpush2.bf16.msra.mxu0 0
        %3775 = vmatprep.subr.bf16.mxu0 0
        %3776 = vmatpush2.bf16.msra.mxu0 0
        %3777 = vmatprep.subr.bf16.mxu0 0
        %3778 = vmatpush2.bf16.msra.mxu0 0
        %3779 = vmatprep.subr.bf16.mxu0 0
        %3780 = vmatpush2.bf16.msra.mxu0 0
        %3781 = vmatprep.mubr.bf16.mxu0 0
        %3782 = vmatmul.mubr.bf16.gmra.mxu0 %v3733
        %v3783 = vpop.f32.mrf.mxu0
        %v3784 = vadd.f32 %v3624, %v3783
        %v3785 = vpop.f32.mrf.mxu0
        %v3786 = vpop.f32.mrf.mxu0
        %v3787 = vadd.f32 %v3629, %v3786
        %v3788 = vpop.f32.mrf.mxu0
        %3789 = vmatprep.mubr.bf16.mxu0 0
        %3790 = vmatmul.mubr.bf16.gmra.mxu0 %v3734
        %v3791 = vpop.f32.mrf.mxu0
        %v3792 = vadd.f32 %v3634, %v3791
        %v3793 = vpop.f32.mrf.mxu0
        %v3794 = vpop.f32.mrf.mxu0
        %v3795 = vadd.f32 %v3639, %v3794
        %v3796 = vpop.f32.mrf.mxu0
        %3797 = vmatprep.mubr.bf16.mxu0 0
        %3798 = vmatmul.mubr.bf16.gmra.mxu0 %v3735
        %v3799 = vpop.f32.mrf.mxu0
        %v3800 = vadd.f32 %v3644, %v3799
        %v3801 = vpop.f32.mrf.mxu0
        %v3802 = vpop.f32.mrf.mxu0
        %v3803 = vadd.f32 %v3649, %v3802
        %v3804 = vpop.f32.mrf.mxu0
        %3805 = vmatprep.mubr.bf16.mxu0 0
        %3806 = vmatmul.mubr.bf16.gmra.mxu0 %v3736
        %v3807 = vpop.f32.mrf.mxu0
        %v3808 = vadd.f32 %v3654, %v3807
        %v3809 = vpop.f32.mrf.mxu0
        %v3810 = vpop.f32.mrf.mxu0
        %v3811 = vadd.f32 %v3659, %v3810
        %v3812 = vpop.f32.mrf.mxu0
        %3813 = vmatprep.mubr.bf16.mxu0 0
        %3814 = vmatmul.mubr.bf16.gmra.mxu0 %v3737
        %v3815 = vpop.f32.mrf.mxu0
        %v3816 = vadd.f32 %v3664, %v3815
        %v3817 = vpop.f32.mrf.mxu0
        %v3818 = vpop.f32.mrf.mxu0
        %v3819 = vadd.f32 %v3669, %v3818
        %v3820 = vpop.f32.mrf.mxu0
        %3821 = vmatprep.mubr.bf16.mxu0 0
        %3822 = vmatmul.mubr.bf16.gmra.mxu0 %v3738
        %v3823 = vpop.f32.mrf.mxu0
        %v3824 = vadd.f32 %v3674, %v3823
        %v3825 = vpop.f32.mrf.mxu0
        %v3826 = vpop.f32.mrf.mxu0
        %v3827 = vadd.f32 %v3679, %v3826
        %v3828 = vpop.f32.mrf.mxu0
        %3829 = vmatprep.mubr.bf16.mxu0 0
        %3830 = vmatmul.mubr.bf16.gmra.mxu0 %v3739
        %v3831 = vpop.f32.mrf.mxu0
        %v3832 = vadd.f32 %v3684, %v3831
        %v3833 = vpop.f32.mrf.mxu0
        %v3834 = vpop.f32.mrf.mxu0
        %v3835 = vadd.f32 %v3689, %v3834
        %v3836 = vpop.f32.mrf.mxu0
        %3837 = vmatprep.mubr.bf16.mxu0 0
        %3838 = vmatmul.mubr.bf16.gmra.mxu0 %v3740
        %v3839 = vpop.f32.mrf.mxu0
        %v3840 = vadd.f32 %v3694, %v3839
        %v3841 = vpop.f32.mrf.mxu0
        %v3842 = vpop.f32.mrf.mxu0
        %v3843 = vadd.f32 %v3699, %v3842
        %v3844 = vpop.f32.mrf.mxu0
        %3845 = vdwg.mxu0
        %v3846 = vmax.f32 %v3784, 0.0
        %v3847 = vmax.f32 %v3787, 0.0
        %v3848 = vmax.f32 %v3792, 0.0
        %v3849 = vmax.f32 %v3795, 0.0
        %v3850 = vmax.f32 %v3800, 0.0
        %v3851 = vmax.f32 %v3803, 0.0
        %v3852 = vmax.f32 %v3808, 0.0
        %v3853 = vmax.f32 %v3811, 0.0
        %v3854 = vmax.f32 %v3816, 0.0
        %v3855 = vmax.f32 %v3819, 0.0
        %v3856 = vmax.f32 %v3824, 0.0
        %v3857 = vmax.f32 %v3827, 0.0
        %v3858 = vmax.f32 %v3832, 0.0
        %v3859 = vmax.f32 %v3835, 0.0
        %v3860 = vmax.f32 %v3840, 0.0
        %v3861 = vmax.f32 %v3843, 0.0
        %v3862 = vadd.f32 %v3846, %v3565
        %v3863 = vadd.f32 %v3847, %v3566
        %v3864 = vadd.f32 %v3848, %v3567
        %v3865 = vadd.f32 %v3849, %v3568
        %v3866 = vadd.f32 %v3850, %v3569
        %v3867 = vadd.f32 %v3851, %v3570
        %v3868 = vadd.f32 %v3852, %v3571
        %v3869 = vadd.f32 %v3853, %v3572
        %v3870 = vadd.f32 %v3854, %v3573
        %v3871 = vadd.f32 %v3855, %v3574
        %v3872 = vadd.f32 %v3856, %v3575
        %v3873 = vadd.f32 %v3857, %v3576
        %v3874 = vadd.f32 %v3858, %v3577
        %v3875 = vadd.f32 %v3859, %v3578
        %v3876 = vadd.f32 %v3860, %v3579
        %v3877 = vadd.f32 %v3861, %v3580
        %vm3878 = vcmask 130048
        %3879 = vst.msk [vmem:[%s347] sm:$0xff] %vm3878, %v3862
        %3880 = vst.msk [vmem:[%s347 + $0x8] sm:$0xff] %vm3878, %v3863
        %3881 = vst.msk [vmem:[%s347 + $0x10] sm:$0xff] %vm3878, %v3864
        %3882 = vst.msk [vmem:[%s347 + $0x18] sm:$0xff] %vm3878, %v3865
        %3883 = vst.msk [vmem:[%s347 + $0x20] sm:$0xff] %vm3878, %v3866
        %3884 = vst.msk [vmem:[%s347 + $0x28] sm:$0xff] %vm3878, %v3867
        %3885 = vst.msk [vmem:[%s347 + $0x30] sm:$0xff] %vm3878, %v3868
        %3886 = vst.msk [vmem:[%s347 + $0x38] sm:$0xff] %vm3878, %v3869
        %3887 = vst.msk [vmem:[%s347 + $0x40] sm:$0xff] %vm3878, %v3870
        %3888 = vst.msk [vmem:[%s347 + $0x48] sm:$0xff] %vm3878, %v3871
        %3889 = vst.msk [vmem:[%s347 + $0x50] sm:$0xff] %vm3878, %v3872
        %3890 = vst.msk [vmem:[%s347 + $0x58] sm:$0xff] %vm3878, %v3873
        %3891 = vst.msk [vmem:[%s347 + $0x60] sm:$0xff] %vm3878, %v3874
        %3892 = vst.msk [vmem:[%s347 + $0x68] sm:$0xff] %vm3878, %v3875
        %3893 = vst.msk [vmem:[%s347 + $0x70] sm:$0xff] %vm3878, %v3876
        %3894 = vst.msk [vmem:[%s347 + $0x78] sm:$0xff] %vm3878, %v3877
        %p3895 = scmp.lt.s32.totalorder %s21, 1
        %s3896 = scalar_select %p3895, %s21, 1
        %s3897 = smul.addr %s3896, 16
        %s3898 = smul.addr %s3897, 8
        %s3899 = scalar_lea.vmem %s9, %s3898
        // Predicated region
        $region61: #{convnet_forward.1} parent=55 // pred_check
          %p3900 = pneg %p233
        $region62: #{convnet_forward.1} parent=55 // pred_check_branch
          %3902 = sbr.rel (%p3900) target = $region64
        $region63: #{convnet_forward.1} parent=55 // pred_region
          _
        $region64: #{convnet_forward.1} parent=55 // pred_fallthru
          _
      $region56: #{convnet_forward.1} parent=5 // pred_fallthru
        _
      %p3903 = scmp.le.s32.totalorder 2, %s16
      // Predicated region
      $region65: #{convnet_forward.1} parent=5 // pred_check
        %p3904 = pneg %p3903
      $region66: #{convnet_forward.1} parent=5 // pred_check_branch
        %3906 = sbr.rel (%p3904) target = $region68
      $region67: #{convnet_forward.1} parent=5 // pred_region
        %s3907 = ssub.s32 %s16, 2
        // Predicated region
        $region69: #{convnet_forward.1} parent=67 // pred_check
          %p3908 = pneg %p239
        $region70: #{convnet_forward.1} parent=67 // pred_check_branch
          %3910 = sbr.rel (%p3908) target = $region72
        $region71: #{convnet_forward.1} parent=67 // pred_region
          %p3911 = scmp.lt.s32.totalorder %s22, 1
          %s3912 = scalar_select %p3911, %s22, 1
          %s3913 = smul.addr %s3912, 16
          %s3914 = smul.addr %s3913, 8
          %s3915 = scalar_lea.vmem %s9, %s3914
        $region72: #{convnet_forward.1} parent=67 // pred_fallthru
          _
      $region68: #{convnet_forward.1} parent=5 // pred_fallthru
        _
    $region6: #{convnet_forward.1} parent=1 // loop_footer
      %s20 = sadd.s32 1, %s16
    $region7: #{convnet_forward.1} parent=1 // loop_footer_branch
      %15 = sbr.rel target = $region3
    $region8: #{convnet_forward.1} parent=1 // loop_exit
      _
    %3916 = vsyncpa [#allocation6], 1
    %s3917 = scalar_lea.sflag [#allocation6], 1
    %3918 = vsyncpa %s3917, 1

</llo_original>
